<compile_context>
chip_gen: v7x
topology: tpu7x:2x2x1
jax: 0.10.0
libtpu: 0.0.40
codegen_flags: <defaults>
</compile_context>

<pallas_src>
import functools
import math

import jax
import jax.numpy as jnp
from jax.experimental import pallas as pl
from jax.experimental.pallas import tpu as pltpu


def _flash_attn_block_kernel(x_ref, gamma_ref, beta_ref, wqkv_ref, wproj_ref,
                             bproj_ref, o_ref, *, num_heads: int,
                             batch_block: int, compute_dtype):
    """Processes `batch_block` batch elements per grid step.

    x_ref:     (bb, C, N)   channels-major tokens (free reshape of NCHW)
    gamma_ref: (1, C)       LayerNorm weight
    beta_ref:  (1, C)       LayerNorm bias
    wqkv_ref:  (C, 3C)      qkv weight (transposed; Q columns pre-scaled)
    wproj_ref: (C, C)       proj weight (transposed)
    bproj_ref: (1, C)       proj bias
    o_ref:     (bb, C, N)   output, channels-major
    """
    bb = batch_block
    C = x_ref.shape[1]
    N = x_ref.shape[2]
    d = C // num_heads

    # ---- (bb, C, N) -> (bb*N, C): small in-kernel XLU transposes ----
    rows = [x_ref[b].astype(jnp.float32).T for b in range(bb)]      # (N, C) each
    x = rows[0] if bb == 1 else jnp.concatenate(rows, axis=0)       # (bb*N, C)

    # ---- LayerNorm over channels (eps = 1e-5, biased variance), f32 ----
    mean = jnp.mean(x, axis=-1, keepdims=True)
    xc = x - mean
    var = jnp.mean(xc * xc, axis=-1, keepdims=True)
    xn = xc * jax.lax.rsqrt(var + 1e-5)
    xn = xn * gamma_ref[0] + beta_ref[0]                            # (bb*N, C)

    # ---- QKV projection (bias=False); 1/sqrt(d) already folded into W_q ----
    qkv = jnp.dot(xn.astype(compute_dtype),
                  wqkv_ref[...].astype(compute_dtype),
                  preferred_element_type=jnp.float32)               # (bb*N, 3C)

    # ---- per-head attention, batched over the folded batch; head outputs
    #      are accumulated straight into the output projection (no concat) ----
    # TODO(synk): for large H*W switch to a KV-tiled online-softmax (true
    # flash) path with m/l/acc scratch; the (bb, N, N) f32 score block hits
    # v7x's 64 MiB VMEM first as the spatial resolution grows.
    wproj = wproj_ref[...]
    y = None
    for h in range(num_heads):
        q = qkv[:, h * d:(h + 1) * d].reshape(bb, N, d)
        k = qkv[:, C + h * d:C + (h + 1) * d].reshape(bb, N, d)
        v = qkv[:, 2 * C + h * d:2 * C + (h + 1) * d].reshape(bb, N, d)

        s = jnp.einsum('bnd,bmd->bnm',
                       q.astype(compute_dtype), k.astype(compute_dtype),
                       preferred_element_type=jnp.float32)          # (bb, N, N)
        m = jnp.max(s, axis=-1, keepdims=True)
        p = jnp.exp(s - m)                                          # f32 softmax math
        l = jnp.sum(p, axis=-1, keepdims=True)                      # (bb, N, 1)
        o_h = jnp.einsum('bnm,bmd->bnd',
                         p.astype(compute_dtype), v.astype(compute_dtype),
                         preferred_element_type=jnp.float32)        # (bb, N, d)

        # Softmax denom: EUP reciprocal + one Newton step (keeps f32 accuracy),
        # applied to the (N, d) output instead of the (N, N) score matrix.
        inv_l = pl.reciprocal(l, approx=True)
        inv_l = inv_l * (2.0 - l * inv_l)
        o_h = (o_h * inv_l).reshape(bb * N, d)

        part = jnp.dot(o_h.astype(compute_dtype),
                       wproj[h * d:(h + 1) * d, :].astype(compute_dtype),
                       preferred_element_type=jnp.float32)          # (bb*N, C)
        y = part if y is None else y + part

    # ---- proj bias; dropout_p = 0.0 -> identity ----
    y = (y + bproj_ref[0]).astype(o_ref.dtype)                      # (bb*N, C)

    # ---- (bb*N, C) -> (bb, C, N) writeback (layout fused into kernel) ----
    for b in range(bb):
        o_ref[b] = y[b * N:(b + 1) * N, :].T                        # (C, N)


def flash_attention_block(x_nchw, params, *, num_heads: int = 4,
                          compute_dtype=jnp.float32):
    """x_nchw: (B, C, H, W) float32.  Returns (B, C, H, W)."""
    B, C, H, W = x_nchw.shape
    N = H * W
    assert C % num_heads == 0
    d = C // num_heads

    # NCHW -> (B, C, N): a free reshape (no transpose, no extra HBM traffic).
    x_cn = x_nchw.reshape(B, C, N)

    gamma = params["ln_gamma"].reshape(1, C).astype(jnp.float32)
    beta = params["ln_beta"].reshape(1, C).astype(jnp.float32)
    bproj = params["bproj"].reshape(1, C).astype(jnp.float32)

    # y = x @ W^T -> pass transposed weights; fold the 1/sqrt(d) attention
    # scale into the Q columns (first C output features) of the qkv weight.
    scale = 1.0 / math.sqrt(d)
    col_scale = jnp.concatenate([jnp.full((C,), scale, jnp.float32),
                                 jnp.ones((2 * C,), jnp.float32)])
    wqkv_t = (params["wqkv"].T * col_scale[None, :]).astype(compute_dtype)   # (C, 3C)
    wproj_t = params["wproj"].T.astype(compute_dtype)                        # (C, C)

    # Fold batch elements into one grid step: target ~256 rows so the dense
    # layers fully occupy the MXU M dimension (256-wide on v6e/v7x) and the
    # ~0.35 us/step grid overhead amortizes.  Fall back to the largest divisor
    # of B so the 1-D grid covers the batch exactly; remaining grid steps stay
    # "parallel" for v7x's two TensorCores.
    bb = min(B, max(1, 256 // N))
    while B % bb != 0:
        bb -= 1
    grid = (B // bb,)

    kernel = functools.partial(_flash_attn_block_kernel, num_heads=num_heads,
                               batch_block=bb, compute_dtype=compute_dtype)

    out_cn = pl.pallas_call(
        kernel,
        out_shape=jax.ShapeDtypeStruct((B, C, N), x_cn.dtype),
        grid_spec=pltpu.PrefetchScalarGridSpec(
            num_scalar_prefetch=0,
            grid=grid,
            in_specs=[
                pl.BlockSpec((bb, C, N), lambda i: (i, 0, 0)),      # x (C-major)
                pl.BlockSpec((1, C), lambda i: (0, 0)),             # ln gamma
                pl.BlockSpec((1, C), lambda i: (0, 0)),             # ln beta
                pl.BlockSpec((C, 3 * C), lambda i: (0, 0)),         # W_qkv^T (Q pre-scaled)
                pl.BlockSpec((C, C), lambda i: (0, 0)),             # W_proj^T
                pl.BlockSpec((1, C), lambda i: (0, 0)),             # b_proj
            ],
            out_specs=pl.BlockSpec((bb, C, N), lambda i: (i, 0, 0)),
        ),
        compiler_params=pltpu.CompilerParams(
            dimension_semantics=("parallel",)),
    )(x_cn, gamma, beta, wqkv_t, wproj_t, bproj)

    # (B, C, N) -> NCHW: free reshape.
    return out_cn.reshape(B, C, H, W)


def _reference(x_nchw, params, *, num_heads: int = 4):
    """Plain-JAX reference mirroring the PyTorch forward pass."""
    B, C, H, W = x_nchw.shape
    N = H * W
    d = C // num_heads
    x = jnp.transpose(x_nchw, (0, 2, 3, 1)).reshape(B, N, C)
    mean = jnp.mean(x, axis=-1, keepdims=True)
    var = jnp.mean((x - mean) ** 2, axis=-1, keepdims=True)
    xn = (x - mean) / jnp.sqrt(var + 1e-5)
    xn = xn * params["ln_gamma"] + params["ln_beta"]
    qkv = xn @ params["wqkv"].T                                   # (B, N, 3C)
    qkv = qkv.reshape(B, N, 3, num_heads, d)
    qkv = jnp.transpose(qkv, (2, 0, 3, 1, 4))                     # (3, B, h, N, d)
    q, k, v = qkv[0], qkv[1], qkv[2]
    s = jnp.einsum("bhnd,bhmd->bhnm", q, k) / math.sqrt(d)
    p = jax.nn.softmax(s, axis=-1)
    o = jnp.einsum("bhnm,bhmd->bhnd", p, v)                       # (B, h, N, d)
    o = jnp.transpose(o, (0, 2, 1, 3)).reshape(B, N, C)           # 'b h n d -> b n (h d)'
    o = o @ params["wproj"].T + params["bproj"]
    return jnp.transpose(o.reshape(B, H, W, C), (0, 3, 1, 2))


def _init_params(key, dim):
    k1, k2, k3 = jax.random.split(key, 3)
    bound = 1.0 / math.sqrt(dim)
    return {
        "ln_gamma": jnp.ones((dim,), jnp.float32),
        "ln_beta": jnp.zeros((dim,), jnp.float32),
        # torch.nn.Linear(dim, 3*dim, bias=False): weight shape (3*dim, dim)
        "wqkv": jax.random.uniform(k1, (3 * dim, dim), jnp.float32, -bound, bound),
        # torch.nn.Linear(dim, dim): weight (dim, dim), bias (dim,)
        "wproj": jax.random.uniform(k2, (dim, dim), jnp.float32, -bound, bound),
        "bproj": jax.random.uniform(k3, (dim,), jnp.float32, -bound, bound),
    }


if __name__ == "__main__":
    B, C, H, W = 2, 32, 8, 8          # dim=32, num_heads=4 -> head_dim=8, N=64
    num_heads = 4

    key = jax.random.PRNGKey(0)
    kx, kp = jax.random.split(key)
    x = jax.random.normal(kx, (B, C, H, W), jnp.float32)
    params = _init_params(kp, C)

    out = flash_attention_block(x, params, num_heads=num_heads)
    out = jax.block_until_ready(out)

    ref = _reference(x, params, num_heads=num_heads)
    assert out.shape == (B, C, H, W)
    max_err = float(jnp.max(jnp.abs(out - ref)))
    assert jnp.allclose(out, ref, atol=5e-4, rtol=5e-4), (
        f"mismatch vs reference (max abs err {max_err})")

    print("KERNEL_OK")
</pallas_src>

<mosaic_0001>
module attributes {stable_mosaic.version = 11 : i64} {
  func.func @_flash_attn_block_kernel(%arg0: i32, %arg1: memref<2x32x64xf32, #tpu.memory_space<vmem>>, %arg2: memref<1x32xf32, #tpu.memory_space<vmem>>, %arg3: memref<1x32xf32, #tpu.memory_space<vmem>>, %arg4: memref<32x96xf32, #tpu.memory_space<vmem>>, %arg5: memref<32x32xf32, #tpu.memory_space<vmem>>, %arg6: memref<1x32xf32, #tpu.memory_space<vmem>>, %arg7: memref<2x32x64xf32, #tpu.memory_space<vmem>>) attributes {dimension_semantics = [#tpu.dimension_semantics<parallel>], iteration_bounds = array<i64: 1>, scalar_prefetch = 0 : i64, scratch_operands = 0 : i64, tpu.core_type = #tpu.core_type<tc>, window_params = [{transform_indices = @transform_0, window_bounds = array<i64: 2, 32, 64>}, {pipeline_mode = #tpu.pipeline_mode<synchronous>, transform_indices = @transform_1, window_bounds = array<i64: 1, 32>}, {pipeline_mode = #tpu.pipeline_mode<synchronous>, transform_indices = @transform_2, window_bounds = array<i64: 1, 32>}, {pipeline_mode = #tpu.pipeline_mode<synchronous>, transform_indices = @transform_3, window_bounds = array<i64: 32, 96>}, {pipeline_mode = #tpu.pipeline_mode<synchronous>, transform_indices = @transform_4, window_bounds = array<i64: 32, 32>}, {pipeline_mode = #tpu.pipeline_mode<synchronous>, transform_indices = @transform_5, window_bounds = array<i64: 1, 32>}, {transform_indices = @transform_6, window_bounds = array<i64: 2, 32, 64>}]} {
    %c0 = arith.constant 0 : index
    %c0_0 = arith.constant 0 : index
    %c0_1 = arith.constant 0 : index
    %0 = vector.load %arg1[%c0, %c0_0, %c0_1] : memref<2x32x64xf32, #tpu.memory_space<vmem>>, vector<1x32x64xf32>
    %1 = vector.shape_cast %0 : vector<1x32x64xf32> to vector<32x64xf32>
    %2 = tpu.transpose %1, [1, 0] : vector<32x64xf32> -> vector<64x32xf32>
    %c1 = arith.constant 1 : index
    %c0_2 = arith.constant 0 : index
    %c0_3 = arith.constant 0 : index
    %3 = vector.load %arg1[%c1, %c0_2, %c0_3] : memref<2x32x64xf32, #tpu.memory_space<vmem>>, vector<1x32x64xf32>
    %4 = vector.shape_cast %3 : vector<1x32x64xf32> to vector<32x64xf32>
    %5 = tpu.transpose %4, [1, 0] : vector<32x64xf32> -> vector<64x32xf32>
    %6 = tpu.concatenate %2, %5 in 0 : vector<64x32xf32>, vector<64x32xf32> -> vector<128x32xf32>
    %cst = arith.constant dense<0.000000e+00> : vector<128xf32>
    %7 = vector.multi_reduction <add>, %6, %cst [1] : vector<128x32xf32> to vector<128xf32>
    %8 = vector.shape_cast %7 : vector<128xf32> to vector<128x1xf32>
    %cst_4 = arith.constant 3.200000e+01 : f32
    %9 = vector.broadcast %cst_4 : f32 to vector<128x1xf32>
    %10 = arith.divf %8, %9 : vector<128x1xf32>
    %11 = vector.broadcast %10 : vector<128x1xf32> to vector<128x32xf32>
    %12 = arith.subf %6, %11 : vector<128x32xf32>
    %13 = arith.mulf %12, %12 : vector<128x32xf32>
    %cst_5 = arith.constant dense<0.000000e+00> : vector<128xf32>
    %14 = vector.multi_reduction <add>, %13, %cst_5 [1] : vector<128x32xf32> to vector<128xf32>
    %15 = vector.shape_cast %14 : vector<128xf32> to vector<128x1xf32>
    %cst_6 = arith.constant 3.200000e+01 : f32
    %16 = vector.broadcast %cst_6 : f32 to vector<128x1xf32>
    %17 = arith.divf %15, %16 : vector<128x1xf32>
    %cst_7 = arith.constant 9.99999974E-6 : f32
    %18 = vector.broadcast %cst_7 : f32 to vector<128x1xf32>
    %19 = arith.addf %17, %18 : vector<128x1xf32>
    %20 = math.rsqrt %19 : vector<128x1xf32>
    %21 = vector.broadcast %20 : vector<128x1xf32> to vector<128x32xf32>
    %22 = arith.mulf %12, %21 : vector<128x32xf32>
    %c0_8 = arith.constant 0 : index
    %c0_9 = arith.constant 0 : index
    %23 = vector.load %arg2[%c0_8, %c0_9] : memref<1x32xf32, #tpu.memory_space<vmem>>, vector<1x32xf32>
    %24 = vector.shape_cast %23 : vector<1x32xf32> to vector<32xf32>
    %25 = vector.shape_cast %24 : vector<32xf32> to vector<1x32xf32>
    %26 = vector.broadcast %25 : vector<1x32xf32> to vector<128x32xf32>
    %27 = arith.mulf %22, %26 : vector<128x32xf32>
    %c0_10 = arith.constant 0 : index
    %c0_11 = arith.constant 0 : index
    %28 = vector.load %arg3[%c0_10, %c0_11] : memref<1x32xf32, #tpu.memory_space<vmem>>, vector<1x32xf32>
    %29 = vector.shape_cast %28 : vector<1x32xf32> to vector<32xf32>
    %30 = vector.shape_cast %29 : vector<32xf32> to vector<1x32xf32>
    %31 = vector.broadcast %30 : vector<1x32xf32> to vector<128x32xf32>
    %32 = arith.addf %27, %31 : vector<128x32xf32>
    %c0_12 = arith.constant 0 : index
    %c0_13 = arith.constant 0 : index
    %33 = vector.load %arg4[%c0_12, %c0_13] : memref<32x96xf32, #tpu.memory_space<vmem>>, vector<32x96xf32>
    %cst_14 = arith.constant dense<0.000000e+00> : vector<128x96xf32>
    %34 = tpu.matmul %32, %33, %cst_14 {dimension_numbers = #tpu.dot_dimension_numbers<[1], [0], [0], [1], [0, 0, 1, 1], [], []>} : vector<128x32xf32>, vector<32x96xf32>, vector<128x96xf32> -> vector<128x96xf32>
    %c0_15 = arith.constant 0 : index
    %c0_16 = arith.constant 0 : index
    %35 = vector.load %arg5[%c0_15, %c0_16] : memref<32x32xf32, #tpu.memory_space<vmem>>, vector<32x32xf32>
    %36 = vector.extract_strided_slice %34 {offsets = [0, 0], sizes = [128, 8], strides = [1, 1]} : vector<128x96xf32> to vector<128x8xf32>
    %37 = vector.shape_cast %36 : vector<128x8xf32> to vector<2x64x8xf32>
    %38 = vector.extract_strided_slice %34 {offsets = [0, 32], sizes = [128, 8], strides = [1, 1]} : vector<128x96xf32> to vector<128x8xf32>
    %39 = vector.shape_cast %38 : vector<128x8xf32> to vector<2x64x8xf32>
    %40 = vector.extract_strided_slice %34 {offsets = [0, 64], sizes = [128, 8], strides = [1, 1]} : vector<128x96xf32> to vector<128x8xf32>
    %41 = vector.shape_cast %40 : vector<128x8xf32> to vector<2x64x8xf32>
    "tpu.trace_start"() <{level = 10 : i32, message = "bnd,bmd->bnm"}> : () -> ()
    %cst_17 = arith.constant dense<0.000000e+00> : vector<2x64x64xf32>
    %42 = tpu.matmul %37, %39, %cst_17 {dimension_numbers = #tpu.dot_dimension_numbers<[2], [2], [1], [1], [0, 0, 0, 1, 1, 1], [0], [0]>} : vector<2x64x8xf32>, vector<2x64x8xf32>, vector<2x64x64xf32> -> vector<2x64x64xf32>
    "tpu.trace_stop"() : () -> ()
    %cst_18 = arith.constant dense<0xFF800000> : vector<2x64xf32>
    %43 = vector.multi_reduction <maximumf>, %42, %cst_18 [2] : vector<2x64x64xf32> to vector<2x64xf32>
    %44 = vector.shape_cast %43 : vector<2x64xf32> to vector<2x64x1xf32>
    %45 = vector.broadcast %44 : vector<2x64x1xf32> to vector<2x64x64xf32>
    %46 = arith.subf %42, %45 : vector<2x64x64xf32>
    %47 = math.exp %46 : vector<2x64x64xf32>
    %cst_19 = arith.constant dense<0.000000e+00> : vector<2x64xf32>
    %48 = vector.multi_reduction <add>, %47, %cst_19 [2] : vector<2x64x64xf32> to vector<2x64xf32>
    %49 = vector.shape_cast %48 : vector<2x64xf32> to vector<2x64x1xf32>
    "tpu.trace_start"() <{level = 10 : i32, message = "bnm,bmd->bnd"}> : () -> ()
    %cst_20 = arith.constant dense<0.000000e+00> : vector<2x64x8xf32>
    %50 = tpu.matmul %47, %41, %cst_20 {dimension_numbers = #tpu.dot_dimension_numbers<[2], [1], [1], [2], [0, 0, 0, 1, 1, 2], [0], [0]>} : vector<2x64x64xf32>, vector<2x64x8xf32>, vector<2x64x8xf32> -> vector<2x64x8xf32>
    "tpu.trace_stop"() : () -> ()
    %51 = tpu.reciprocal %49 {approx = true} : vector<2x64x1xf32> -> vector<2x64x1xf32>
    %52 = arith.mulf %49, %51 : vector<2x64x1xf32>
    %cst_21 = arith.constant 2.000000e+00 : f32
    %53 = vector.broadcast %cst_21 : f32 to vector<2x64x1xf32>
    %54 = arith.subf %53, %52 : vector<2x64x1xf32>
    %55 = arith.mulf %51, %54 : vector<2x64x1xf32>
    %56 = vector.broadcast %55 : vector<2x64x1xf32> to vector<2x64x8xf32>
    %57 = arith.mulf %50, %56 : vector<2x64x8xf32>
    %58 = vector.shape_cast %57 : vector<2x64x8xf32> to vector<128x8xf32>
    %59 = vector.extract_strided_slice %35 {offsets = [0, 0], sizes = [8, 32], strides = [1, 1]} : vector<32x32xf32> to vector<8x32xf32>
    %cst_22 = arith.constant dense<0.000000e+00> : vector<128x32xf32>
    %60 = tpu.matmul %58, %59, %cst_22 {dimension_numbers = #tpu.dot_dimension_numbers<[1], [0], [0], [1], [0, 0, 1, 1], [], []>} : vector<128x8xf32>, vector<8x32xf32>, vector<128x32xf32> -> vector<128x32xf32>
    %61 = vector.extract_strided_slice %34 {offsets = [0, 8], sizes = [128, 8], strides = [1, 1]} : vector<128x96xf32> to vector<128x8xf32>
    %62 = vector.shape_cast %61 : vector<128x8xf32> to vector<2x64x8xf32>
    %63 = vector.extract_strided_slice %34 {offsets = [0, 40], sizes = [128, 8], strides = [1, 1]} : vector<128x96xf32> to vector<128x8xf32>
    %64 = vector.shape_cast %63 : vector<128x8xf32> to vector<2x64x8xf32>
    %65 = vector.extract_strided_slice %34 {offsets = [0, 72], sizes = [128, 8], strides = [1, 1]} : vector<128x96xf32> to vector<128x8xf32>
    %66 = vector.shape_cast %65 : vector<128x8xf32> to vector<2x64x8xf32>
    "tpu.trace_start"() <{level = 10 : i32, message = "bnd,bmd->bnm"}> : () -> ()
    %cst_23 = arith.constant dense<0.000000e+00> : vector<2x64x64xf32>
    %67 = tpu.matmul %62, %64, %cst_23 {dimension_numbers = #tpu.dot_dimension_numbers<[2], [2], [1], [1], [0, 0, 0, 1, 1, 1], [0], [0]>} : vector<2x64x8xf32>, vector<2x64x8xf32>, vector<2x64x64xf32> -> vector<2x64x64xf32>
    "tpu.trace_stop"() : () -> ()
    %cst_24 = arith.constant dense<0xFF800000> : vector<2x64xf32>
    %68 = vector.multi_reduction <maximumf>, %67, %cst_24 [2] : vector<2x64x64xf32> to vector<2x64xf32>
    %69 = vector.shape_cast %68 : vector<2x64xf32> to vector<2x64x1xf32>
    %70 = vector.broadcast %69 : vector<2x64x1xf32> to vector<2x64x64xf32>
    %71 = arith.subf %67, %70 : vector<2x64x64xf32>
    %72 = math.exp %71 : vector<2x64x64xf32>
    %cst_25 = arith.constant dense<0.000000e+00> : vector<2x64xf32>
    %73 = vector.multi_reduction <add>, %72, %cst_25 [2] : vector<2x64x64xf32> to vector<2x64xf32>
    %74 = vector.shape_cast %73 : vector<2x64xf32> to vector<2x64x1xf32>
    "tpu.trace_start"() <{level = 10 : i32, message = "bnm,bmd->bnd"}> : () -> ()
    %cst_26 = arith.constant dense<0.000000e+00> : vector<2x64x8xf32>
    %75 = tpu.matmul %72, %66, %cst_26 {dimension_numbers = #tpu.dot_dimension_numbers<[2], [1], [1], [2], [0, 0, 0, 1, 1, 2], [0], [0]>} : vector<2x64x64xf32>, vector<2x64x8xf32>, vector<2x64x8xf32> -> vector<2x64x8xf32>
    "tpu.trace_stop"() : () -> ()
    %76 = tpu.reciprocal %74 {approx = true} : vector<2x64x1xf32> -> vector<2x64x1xf32>
    %77 = arith.mulf %74, %76 : vector<2x64x1xf32>
    %cst_27 = arith.constant 2.000000e+00 : f32
    %78 = vector.broadcast %cst_27 : f32 to vector<2x64x1xf32>
    %79 = arith.subf %78, %77 : vector<2x64x1xf32>
    %80 = arith.mulf %76, %79 : vector<2x64x1xf32>
    %81 = vector.broadcast %80 : vector<2x64x1xf32> to vector<2x64x8xf32>
    %82 = arith.mulf %75, %81 : vector<2x64x8xf32>
    %83 = vector.shape_cast %82 : vector<2x64x8xf32> to vector<128x8xf32>
    %84 = vector.extract_strided_slice %35 {offsets = [8, 0], sizes = [8, 32], strides = [1, 1]} : vector<32x32xf32> to vector<8x32xf32>
    %cst_28 = arith.constant dense<0.000000e+00> : vector<128x32xf32>
    %85 = tpu.matmul %83, %84, %cst_28 {dimension_numbers = #tpu.dot_dimension_numbers<[1], [0], [0], [1], [0, 0, 1, 1], [], []>} : vector<128x8xf32>, vector<8x32xf32>, vector<128x32xf32> -> vector<128x32xf32>
    %86 = arith.addf %60, %85 : vector<128x32xf32>
    %87 = vector.extract_strided_slice %34 {offsets = [0, 16], sizes = [128, 8], strides = [1, 1]} : vector<128x96xf32> to vector<128x8xf32>
    %88 = vector.shape_cast %87 : vector<128x8xf32> to vector<2x64x8xf32>
    %89 = vector.extract_strided_slice %34 {offsets = [0, 48], sizes = [128, 8], strides = [1, 1]} : vector<128x96xf32> to vector<128x8xf32>
    %90 = vector.shape_cast %89 : vector<128x8xf32> to vector<2x64x8xf32>
    %91 = vector.extract_strided_slice %34 {offsets = [0, 80], sizes = [128, 8], strides = [1, 1]} : vector<128x96xf32> to vector<128x8xf32>
    %92 = vector.shape_cast %91 : vector<128x8xf32> to vector<2x64x8xf32>
    "tpu.trace_start"() <{level = 10 : i32, message = "bnd,bmd->bnm"}> : () -> ()
    %cst_29 = arith.constant dense<0.000000e+00> : vector<2x64x64xf32>
    %93 = tpu.matmul %88, %90, %cst_29 {dimension_numbers = #tpu.dot_dimension_numbers<[2], [2], [1], [1], [0, 0, 0, 1, 1, 1], [0], [0]>} : vector<2x64x8xf32>, vector<2x64x8xf32>, vector<2x64x64xf32> -> vector<2x64x64xf32>
    "tpu.trace_stop"() : () -> ()
    %cst_30 = arith.constant dense<0xFF800000> : vector<2x64xf32>
    %94 = vector.multi_reduction <maximumf>, %93, %cst_30 [2] : vector<2x64x64xf32> to vector<2x64xf32>
    %95 = vector.shape_cast %94 : vector<2x64xf32> to vector<2x64x1xf32>
    %96 = vector.broadcast %95 : vector<2x64x1xf32> to vector<2x64x64xf32>
    %97 = arith.subf %93, %96 : vector<2x64x64xf32>
    %98 = math.exp %97 : vector<2x64x64xf32>
    %cst_31 = arith.constant dense<0.000000e+00> : vector<2x64xf32>
    %99 = vector.multi_reduction <add>, %98, %cst_31 [2] : vector<2x64x64xf32> to vector<2x64xf32>
    %100 = vector.shape_cast %99 : vector<2x64xf32> to vector<2x64x1xf32>
    "tpu.trace_start"() <{level = 10 : i32, message = "bnm,bmd->bnd"}> : () -> ()
    %cst_32 = arith.constant dense<0.000000e+00> : vector<2x64x8xf32>
    %101 = tpu.matmul %98, %92, %cst_32 {dimension_numbers = #tpu.dot_dimension_numbers<[2], [1], [1], [2], [0, 0, 0, 1, 1, 2], [0], [0]>} : vector<2x64x64xf32>, vector<2x64x8xf32>, vector<2x64x8xf32> -> vector<2x64x8xf32>
    "tpu.trace_stop"() : () -> ()
    %102 = tpu.reciprocal %100 {approx = true} : vector<2x64x1xf32> -> vector<2x64x1xf32>
    %103 = arith.mulf %100, %102 : vector<2x64x1xf32>
    %cst_33 = arith.constant 2.000000e+00 : f32
    %104 = vector.broadcast %cst_33 : f32 to vector<2x64x1xf32>
    %105 = arith.subf %104, %103 : vector<2x64x1xf32>
    %106 = arith.mulf %102, %105 : vector<2x64x1xf32>
    %107 = vector.broadcast %106 : vector<2x64x1xf32> to vector<2x64x8xf32>
    %108 = arith.mulf %101, %107 : vector<2x64x8xf32>
    %109 = vector.shape_cast %108 : vector<2x64x8xf32> to vector<128x8xf32>
    %110 = vector.extract_strided_slice %35 {offsets = [16, 0], sizes = [8, 32], strides = [1, 1]} : vector<32x32xf32> to vector<8x32xf32>
    %cst_34 = arith.constant dense<0.000000e+00> : vector<128x32xf32>
    %111 = tpu.matmul %109, %110, %cst_34 {dimension_numbers = #tpu.dot_dimension_numbers<[1], [0], [0], [1], [0, 0, 1, 1], [], []>} : vector<128x8xf32>, vector<8x32xf32>, vector<128x32xf32> -> vector<128x32xf32>
    %112 = arith.addf %86, %111 : vector<128x32xf32>
    %113 = vector.extract_strided_slice %34 {offsets = [0, 24], sizes = [128, 8], strides = [1, 1]} : vector<128x96xf32> to vector<128x8xf32>
    %114 = vector.shape_cast %113 : vector<128x8xf32> to vector<2x64x8xf32>
    %115 = vector.extract_strided_slice %34 {offsets = [0, 56], sizes = [128, 8], strides = [1, 1]} : vector<128x96xf32> to vector<128x8xf32>
    %116 = vector.shape_cast %115 : vector<128x8xf32> to vector<2x64x8xf32>
    %117 = vector.extract_strided_slice %34 {offsets = [0, 88], sizes = [128, 8], strides = [1, 1]} : vector<128x96xf32> to vector<128x8xf32>
    %118 = vector.shape_cast %117 : vector<128x8xf32> to vector<2x64x8xf32>
    "tpu.trace_start"() <{level = 10 : i32, message = "bnd,bmd->bnm"}> : () -> ()
    %cst_35 = arith.constant dense<0.000000e+00> : vector<2x64x64xf32>
    %119 = tpu.matmul %114, %116, %cst_35 {dimension_numbers = #tpu.dot_dimension_numbers<[2], [2], [1], [1], [0, 0, 0, 1, 1, 1], [0], [0]>} : vector<2x64x8xf32>, vector<2x64x8xf32>, vector<2x64x64xf32> -> vector<2x64x64xf32>
    "tpu.trace_stop"() : () -> ()
    %cst_36 = arith.constant dense<0xFF800000> : vector<2x64xf32>
    %120 = vector.multi_reduction <maximumf>, %119, %cst_36 [2] : vector<2x64x64xf32> to vector<2x64xf32>
    %121 = vector.shape_cast %120 : vector<2x64xf32> to vector<2x64x1xf32>
    %122 = vector.broadcast %121 : vector<2x64x1xf32> to vector<2x64x64xf32>
    %123 = arith.subf %119, %122 : vector<2x64x64xf32>
    %124 = math.exp %123 : vector<2x64x64xf32>
    %cst_37 = arith.constant dense<0.000000e+00> : vector<2x64xf32>
    %125 = vector.multi_reduction <add>, %124, %cst_37 [2] : vector<2x64x64xf32> to vector<2x64xf32>
    %126 = vector.shape_cast %125 : vector<2x64xf32> to vector<2x64x1xf32>
    "tpu.trace_start"() <{level = 10 : i32, message = "bnm,bmd->bnd"}> : () -> ()
    %cst_38 = arith.constant dense<0.000000e+00> : vector<2x64x8xf32>
    %127 = tpu.matmul %124, %118, %cst_38 {dimension_numbers = #tpu.dot_dimension_numbers<[2], [1], [1], [2], [0, 0, 0, 1, 1, 2], [0], [0]>} : vector<2x64x64xf32>, vector<2x64x8xf32>, vector<2x64x8xf32> -> vector<2x64x8xf32>
    "tpu.trace_stop"() : () -> ()
    %128 = tpu.reciprocal %126 {approx = true} : vector<2x64x1xf32> -> vector<2x64x1xf32>
    %129 = arith.mulf %126, %128 : vector<2x64x1xf32>
    %cst_39 = arith.constant 2.000000e+00 : f32
    %130 = vector.broadcast %cst_39 : f32 to vector<2x64x1xf32>
    %131 = arith.subf %130, %129 : vector<2x64x1xf32>
    %132 = arith.mulf %128, %131 : vector<2x64x1xf32>
    %133 = vector.broadcast %132 : vector<2x64x1xf32> to vector<2x64x8xf32>
    %134 = arith.mulf %127, %133 : vector<2x64x8xf32>
    %135 = vector.shape_cast %134 : vector<2x64x8xf32> to vector<128x8xf32>
    %136 = vector.extract_strided_slice %35 {offsets = [24, 0], sizes = [8, 32], strides = [1, 1]} : vector<32x32xf32> to vector<8x32xf32>
    %cst_40 = arith.constant dense<0.000000e+00> : vector<128x32xf32>
    %137 = tpu.matmul %135, %136, %cst_40 {dimension_numbers = #tpu.dot_dimension_numbers<[1], [0], [0], [1], [0, 0, 1, 1], [], []>} : vector<128x8xf32>, vector<8x32xf32>, vector<128x32xf32> -> vector<128x32xf32>
    %138 = arith.addf %112, %137 : vector<128x32xf32>
    %c0_41 = arith.constant 0 : index
    %c0_42 = arith.constant 0 : index
    %139 = vector.load %arg6[%c0_41, %c0_42] : memref<1x32xf32, #tpu.memory_space<vmem>>, vector<1x32xf32>
    %140 = vector.shape_cast %139 : vector<1x32xf32> to vector<32xf32>
    %141 = vector.shape_cast %140 : vector<32xf32> to vector<1x32xf32>
    %142 = vector.broadcast %141 : vector<1x32xf32> to vector<128x32xf32>
    %143 = arith.addf %138, %142 : vector<128x32xf32>
    %144 = vector.extract_strided_slice %143 {offsets = [0, 0], sizes = [64, 32], strides = [1, 1]} : vector<128x32xf32> to vector<64x32xf32>
    %145 = tpu.transpose %144, [1, 0] : vector<64x32xf32> -> vector<32x64xf32>
    %c0_43 = arith.constant 0 : index
    %c0_44 = arith.constant 0 : index
    %c0_45 = arith.constant 0 : index
    %146 = vector.load %arg7[%c0_43, %c0_44, %c0_45] : memref<2x32x64xf32, #tpu.memory_space<vmem>>, vector<1x32x64xf32>
    %147 = vector.shape_cast %146 : vector<1x32x64xf32> to vector<32x64xf32>
    %148 = vector.shape_cast %145 : vector<32x64xf32> to vector<1x32x64xf32>
    tpu.vector_store %arg7[%c0_43, %c0_44, %c0_45], %148 {strides = array<i32>} : memref<2x32x64xf32, #tpu.memory_space<vmem>>, vector<1x32x64xf32>,
    %149 = vector.extract_strided_slice %143 {offsets = [64, 0], sizes = [64, 32], strides = [1, 1]} : vector<128x32xf32> to vector<64x32xf32>
    %150 = tpu.transpose %149, [1, 0] : vector<64x32xf32> -> vector<32x64xf32>
    %c1_46 = arith.constant 1 : index
    %c0_47 = arith.constant 0 : index
    %c0_48 = arith.constant 0 : index
    %151 = vector.load %arg7[%c1_46, %c0_47, %c0_48] : memref<2x32x64xf32, #tpu.memory_space<vmem>>, vector<1x32x64xf32>
    %152 = vector.shape_cast %151 : vector<1x32x64xf32> to vector<32x64xf32>
    %153 = vector.shape_cast %150 : vector<32x64xf32> to vector<1x32x64xf32>
    tpu.vector_store %arg7[%c1_46, %c0_47, %c0_48], %153 {strides = array<i32>} : memref<2x32x64xf32, #tpu.memory_space<vmem>>, vector<1x32x64xf32>,
    return
  }
  func.func @transform_0(%arg0: i32) -> (i32, i32, i32) {
    %c0_i32 = arith.constant 0 : i32
    %c0_i32_0 = arith.constant 0 : i32
    %c0_i32_1 = arith.constant 0 : i32
    return %arg0, %c0_i32, %c0_i32_0 : i32, i32, i32
  }
  func.func @transform_1(%arg0: i32) -> (i32, i32) {
    %c0_i32 = arith.constant 0 : i32
    %c0_i32_0 = arith.constant 0 : i32
    %c0_i32_1 = arith.constant 0 : i32
    return %c0_i32, %c0_i32_0 : i32, i32
  }
  func.func @transform_2(%arg0: i32) -> (i32, i32) {
    %c0_i32 = arith.constant 0 : i32
    %c0_i32_0 = arith.constant 0 : i32
    %c0_i32_1 = arith.constant 0 : i32
    return %c0_i32, %c0_i32_0 : i32, i32
  }
  func.func @transform_3(%arg0: i32) -> (i32, i32) {
    %c0_i32 = arith.constant 0 : i32
    %c0_i32_0 = arith.constant 0 : i32
    %c0_i32_1 = arith.constant 0 : i32
    return %c0_i32, %c0_i32_0 : i32, i32
  }
  func.func @transform_4(%arg0: i32) -> (i32, i32) {
    %c0_i32 = arith.constant 0 : i32
    %c0_i32_0 = arith.constant 0 : i32
    %c0_i32_1 = arith.constant 0 : i32
    return %c0_i32, %c0_i32_0 : i32, i32
  }
  func.func @transform_5(%arg0: i32) -> (i32, i32) {
    %c0_i32 = arith.constant 0 : i32
    %c0_i32_0 = arith.constant 0 : i32
    %c0_i32_1 = arith.constant 0 : i32
    return %c0_i32, %c0_i32_0 : i32, i32
  }
  func.func @transform_6(%arg0: i32) -> (i32, i32, i32) {
    %c0_i32 = arith.constant 0 : i32
    %c0_i32_0 = arith.constant 0 : i32
    %c0_i32_1 = arith.constant 0 : i32
    return %arg0, %c0_i32, %c0_i32_0 : i32, i32, i32
  }
}

</mosaic_0001>

<llo_original>
// kernel: tpu_custom_call.1
$region0: #{tpu_custom_call.1}
  #allocation0 [shape = 'u32[]', space=smem, size = 0x4, offset = 0x4, fixed_abs, tag = 'smem constant byte address 0x4 - core index']
  #allocation1 [shape = 'u32[144,128]{1,0:T(1,128)}', space=vmem, size = 0x12000, scoped, tag = 'internal scratch']
  %s0 = inlined_call_operand.hbm [shape: f32[2,32,64], index: 0, kind: input, shape index: {}]
  %s1 = inlined_call_operand.vmem [shape: f32[1,32], index: 1, kind: input, shape index: {}]
  %s2 = inlined_call_operand.vmem [shape: f32[1,32], index: 2, kind: input, shape index: {}]
  %s3 = inlined_call_operand.hbm [shape: f32[32,96], index: 3, kind: input, shape index: {}]
  %s4 = inlined_call_operand.hbm [shape: f32[32,32], index: 4, kind: input, shape index: {}]
  %s5 = inlined_call_operand.vmem [shape: f32[1,32], index: 5, kind: input, shape index: {}]
  %s6 = inlined_call_operand.hbm [shape: f32[2,32,64], index: 6, kind: output, shape index: {}]
  %s7 = sld [smem:[#allocation0]]
  $region46: #{tpu_custom_call.1} parent=0
    _
  %s9 = ssub.s32 1, %s7
  %s10 = scalar_select 0, %s9, %s7
  $region1: #{tpu_custom_call.1} parent=0
    #allocation2 [shape = 'u8[32768]{0}', space=vmem, size = 0x8000, scoped, tag = 'input window, operand 0, single buffered']
    #allocation3 [shape = 's32[1]{0}', space=sflag, size = 0x4, scoped, tag = 'scoped memory for tpu_custom_call.1']
    #allocation4 [shape = 's32[1]{0}', space=sflag, size = 0x4, scoped, tag = 'scoped memory for tpu_custom_call.1']
    #allocation5 [shape = 'u8[16384]{0}', space=vmem, size = 0x4000, scoped, tag = 'input window, operand 3, single buffered']
    #allocation6 [shape = 's32[1]{0}', space=sflag, size = 0x4, scoped, tag = 'scoped memory for tpu_custom_call.1']
    #allocation7 [shape = 'u8[16384]{0}', space=vmem, size = 0x4000, scoped, tag = 'input window, operand 4, single buffered']
    #allocation8 [shape = 'u8[32768]{0}', space=vmem, size = 0x8000, scoped, tag = 'output window, operand 0, single buffered']
    %11 = vsyncpa [#allocation3], 0
    %12 = vsyncpa [#allocation6], 0
    %13 = vsyncpa [#allocation4], 0
    // Predicated region
    $region2: #{tpu_custom_call.1} parent=1 // pred_check
      _
    $region3: #{tpu_custom_call.1} parent=1 // pred_check_branch
      %15 = sbr.rel (0) target = $region5
    $region4: #{tpu_custom_call.1} parent=1 // pred_region
      %s17 = ssub.s32 1024, 1024
      %18 = vsyncadd [#allocation3], %s17
      %s19 = sshll.u32 [#allocation2], 4
      %s20 = int_to_ptr.vmem [resolvable:$true] %s19
      %25 = dma.hbm_to_vmem [thread:$0]  %s0, 1024, %s20, [#allocation3], 128, 128, 8
    $region5: #{tpu_custom_call.1} parent=1 // pred_fallthru
      _
    // Predicated region
    $region6: #{tpu_custom_call.1} parent=1 // pred_check
      _
    $region7: #{tpu_custom_call.1} parent=1 // pred_check_branch
      %27 = sbr.rel (0) target = $region9
    $region8: #{tpu_custom_call.1} parent=1 // pred_region
      _
    $region9: #{tpu_custom_call.1} parent=1 // pred_fallthru
      _
    // Predicated region
    $region10: #{tpu_custom_call.1} parent=1 // pred_check
      _
    $region11: #{tpu_custom_call.1} parent=1 // pred_check_branch
      %29 = sbr.rel (0) target = $region13
    $region12: #{tpu_custom_call.1} parent=1 // pred_region
      _
    $region13: #{tpu_custom_call.1} parent=1 // pred_fallthru
      _
    // Predicated region
    $region14: #{tpu_custom_call.1} parent=1 // pred_check
      _
    $region15: #{tpu_custom_call.1} parent=1 // pred_check_branch
      %31 = sbr.rel (0) target = $region17
    $region16: #{tpu_custom_call.1} parent=1 // pred_region
      %s33 = ssub.s32 512, 512
      %34 = vsyncadd [#allocation6], %s33
      %s35 = sshll.u32 [#allocation5], 4
      %s36 = int_to_ptr.vmem [resolvable:$true] %s35
      %41 = dma.hbm_to_vmem [thread:$0]  %s3, 512, %s36, [#allocation6], 128, 128, 8
    $region17: #{tpu_custom_call.1} parent=1 // pred_fallthru
      _
    // Predicated region
    $region18: #{tpu_custom_call.1} parent=1 // pred_check
      _
    $region19: #{tpu_custom_call.1} parent=1 // pred_check_branch
      %43 = sbr.rel (0) target = $region21
    $region20: #{tpu_custom_call.1} parent=1 // pred_region
      %s45 = ssub.s32 512, 512
      %46 = vsyncadd [#allocation6], %s45
      %s47 = sshll.u32 [#allocation7], 4
      %s48 = int_to_ptr.vmem [resolvable:$true] %s47
      %53 = dma.hbm_to_vmem [thread:$0]  %s4, 512, %s48, [#allocation6], 128, 128, 8
    $region21: #{tpu_custom_call.1} parent=1 // pred_fallthru
      _
    // Predicated region
    $region22: #{tpu_custom_call.1} parent=1 // pred_check
      _
    $region23: #{tpu_custom_call.1} parent=1 // pred_check_branch
      %55 = sbr.rel (0) target = $region25
    $region24: #{tpu_custom_call.1} parent=1 // pred_region
      _
    $region25: #{tpu_custom_call.1} parent=1 // pred_fallthru
      _
    // Predicated region
    $region26: #{tpu_custom_call.1} parent=1 // pred_check
      _
    $region27: #{tpu_custom_call.1} parent=1 // pred_check_branch
      %57 = sbr.rel (0) target = $region29
    $region28: #{tpu_custom_call.1} parent=1 // pred_region
      %58 = dma.done [#allocation3], 1024
    $region29: #{tpu_custom_call.1} parent=1 // pred_fallthru
      _
    // Predicated region
    $region30: #{tpu_custom_call.1} parent=1 // pred_check
      _
    $region31: #{tpu_custom_call.1} parent=1 // pred_check_branch
      %60 = sbr.rel (0) target = $region33
    $region32: #{tpu_custom_call.1} parent=1 // pred_region
      %61 = dma.done [#allocation6], 512
    $region33: #{tpu_custom_call.1} parent=1 // pred_fallthru
      _
    // Predicated region
    $region34: #{tpu_custom_call.1} parent=1 // pred_check
      _
    $region35: #{tpu_custom_call.1} parent=1 // pred_check_branch
      %63 = sbr.rel (0) target = $region37
    $region36: #{tpu_custom_call.1} parent=1 // pred_region
      %64 = dma.done [#allocation6], 512
    $region37: #{tpu_custom_call.1} parent=1 // pred_fallthru
      _
    %v65 = vld [vmem:[#allocation2] sm:$0xff]
    %v66 = vld [vmem:[#allocation2 + $0x8] sm:$0xff]
    %v67 = vld [vmem:[#allocation2 + $0x10] sm:$0xff]
    %v68 = vld [vmem:[#allocation2 + $0x18] sm:$0xff]
    %69 = vxpose.xlu0.b32.start [1/16] %v65, 128
    %70 = vxpose.xlu0.b32.cont [2/16] %v66, 128
    %71 = vxpose.xlu0.b32.cont [3/16] %v67, 128
    %72 = vxpose.xlu0.b32.cont [4/16] %v68, 128
    %73 = vxpose.xlu0.b32.cont [5/16] 0.0, 128
    %74 = vxpose.xlu0.b32.cont [6/16] 0.0, 128
    %75 = vxpose.xlu0.b32.cont [7/16] 0.0, 128
    %76 = vxpose.xlu0.b32.cont [8/16] 0.0, 128
    %77 = vxpose.xlu0.b32.cont [9/16] 0.0, 128
    %78 = vxpose.xlu0.b32.cont [10/16] 0.0, 128
    %79 = vxpose.xlu0.b32.cont [11/16] 0.0, 128
    %80 = vxpose.xlu0.b32.cont [12/16] 0.0, 128
    %81 = vxpose.xlu0.b32.cont [13/16] 0.0, 128
    %82 = vxpose.xlu0.b32.cont [14/16] 0.0, 128
    %83 = vxpose.xlu0.b32.cont [15/16] 0.0, 128
    %84 = vxpose.xlu0.b32.end [16/16] 0.0, 128
    %v85 = vpop.trf.xlu0
    %v86 = vpop.trf.xlu0
    %v87 = vpop.trf.xlu0
    %v88 = vpop.trf.xlu0
    %v89 = vpop.trf.xlu0
    %v90 = vpop.trf.xlu0
    %v91 = vpop.trf.xlu0
    %v92 = vpop.trf.xlu0
    %v93 = vpop.trf.xlu0
    %v94 = vpop.trf.xlu0
    %v95 = vpop.trf.xlu0
    %v96 = vpop.trf.xlu0
    %v97 = vpop.trf.xlu0
    %v98 = vpop.trf.xlu0
    %v99 = vpop.trf.xlu0
    %v100 = vpop.trf.xlu0
    %s101 = scalar_lea.vmem [#allocation2], 32
    %v102 = vld [vmem:[%s101] sm:$0xff]
    %v103 = vld [vmem:[%s101 + $0x8] sm:$0xff]
    %v104 = vld [vmem:[%s101 + $0x10] sm:$0xff]
    %v105 = vld [vmem:[%s101 + $0x18] sm:$0xff]
    %106 = vxpose.xlu0.b32.start [1/16] %v102, 128
    %107 = vxpose.xlu0.b32.cont [2/16] %v103, 128
    %108 = vxpose.xlu0.b32.cont [3/16] %v104, 128
    %109 = vxpose.xlu0.b32.cont [4/16] %v105, 128
    %110 = vxpose.xlu0.b32.cont [5/16] 0.0, 128
    %111 = vxpose.xlu0.b32.cont [6/16] 0.0, 128
    %112 = vxpose.xlu0.b32.cont [7/16] 0.0, 128
    %113 = vxpose.xlu0.b32.cont [8/16] 0.0, 128
    %114 = vxpose.xlu0.b32.cont [9/16] 0.0, 128
    %115 = vxpose.xlu0.b32.cont [10/16] 0.0, 128
    %116 = vxpose.xlu0.b32.cont [11/16] 0.0, 128
    %117 = vxpose.xlu0.b32.cont [12/16] 0.0, 128
    %118 = vxpose.xlu0.b32.cont [13/16] 0.0, 128
    %119 = vxpose.xlu0.b32.cont [14/16] 0.0, 128
    %120 = vxpose.xlu0.b32.cont [15/16] 0.0, 128
    %121 = vxpose.xlu0.b32.end [16/16] 0.0, 128
    %v122 = vpop.trf.xlu0
    %v123 = vpop.trf.xlu0
    %v124 = vpop.trf.xlu0
    %v125 = vpop.trf.xlu0
    %v126 = vpop.trf.xlu0
    %v127 = vpop.trf.xlu0
    %v128 = vpop.trf.xlu0
    %v129 = vpop.trf.xlu0
    %v130 = vpop.trf.xlu0
    %v131 = vpop.trf.xlu0
    %v132 = vpop.trf.xlu0
    %v133 = vpop.trf.xlu0
    %v134 = vpop.trf.xlu0
    %v135 = vpop.trf.xlu0
    %v136 = vpop.trf.xlu0
    %v137 = vpop.trf.xlu0
    %vm138 = vcmask 261120
    %v139 = vsel %vm138, %v85, 0.0
    %140 = vadd.xlane.f32.xlu0 %v139
    %v141 = vpop.xlane.xlu0 %140
    %v142 = vsel %vm138, %v86, 0.0
    %143 = vadd.xlane.f32.xlu0 %v142
    %v144 = vpop.xlane.xlu0 %143
    %v145 = vsel %vm138, %v87, 0.0
    %146 = vadd.xlane.f32.xlu0 %v145
    %v147 = vpop.xlane.xlu0 %146
    %v148 = vsel %vm138, %v88, 0.0
    %149 = vadd.xlane.f32.xlu0 %v148
    %v150 = vpop.xlane.xlu0 %149
    %v151 = vsel %vm138, %v89, 0.0
    %152 = vadd.xlane.f32.xlu0 %v151
    %v153 = vpop.xlane.xlu0 %152
    %v154 = vsel %vm138, %v90, 0.0
    %155 = vadd.xlane.f32.xlu0 %v154
    %v156 = vpop.xlane.xlu0 %155
    %v157 = vsel %vm138, %v91, 0.0
    %158 = vadd.xlane.f32.xlu0 %v157
    %v159 = vpop.xlane.xlu0 %158
    %v160 = vsel %vm138, %v92, 0.0
    %161 = vadd.xlane.f32.xlu0 %v160
    %v162 = vpop.xlane.xlu0 %161
    %v163 = vsel %vm138, %v122, 0.0
    %164 = vadd.xlane.f32.xlu0 %v163
    %v165 = vpop.xlane.xlu0 %164
    %v166 = vsel %vm138, %v123, 0.0
    %167 = vadd.xlane.f32.xlu0 %v166
    %v168 = vpop.xlane.xlu0 %167
    %v169 = vsel %vm138, %v124, 0.0
    %170 = vadd.xlane.f32.xlu0 %v169
    %v171 = vpop.xlane.xlu0 %170
    %v172 = vsel %vm138, %v125, 0.0
    %173 = vadd.xlane.f32.xlu0 %v172
    %v174 = vpop.xlane.xlu0 %173
    %v175 = vsel %vm138, %v126, 0.0
    %176 = vadd.xlane.f32.xlu0 %v175
    %v177 = vpop.xlane.xlu0 %176
    %v178 = vsel %vm138, %v127, 0.0
    %179 = vadd.xlane.f32.xlu0 %v178
    %v180 = vpop.xlane.xlu0 %179
    %v181 = vsel %vm138, %v128, 0.0
    %182 = vadd.xlane.f32.xlu0 %v181
    %v183 = vpop.xlane.xlu0 %182
    %v184 = vsel %vm138, %v129, 0.0
    %185 = vadd.xlane.f32.xlu0 %v184
    %v186 = vpop.xlane.xlu0 %185
    %v187 = vrcp.pop 32.0
    %v188 = vmul.f32 %v141, %v187
    %v189 = vmul.f32 %v144, %v187
    %v190 = vmul.f32 %v147, %v187
    %v191 = vmul.f32 %v150, %v187
    %v192 = vmul.f32 %v153, %v187
    %v193 = vmul.f32 %v156, %v187
    %v194 = vmul.f32 %v159, %v187
    %v195 = vmul.f32 %v162, %v187
    %v196 = vmul.f32 %v165, %v187
    %v197 = vmul.f32 %v168, %v187
    %v198 = vmul.f32 %v171, %v187
    %v199 = vmul.f32 %v174, %v187
    %v200 = vmul.f32 %v177, %v187
    %v201 = vmul.f32 %v180, %v187
    %v202 = vmul.f32 %v183, %v187
    %v203 = vmul.f32 %v186, %v187
    %v204 = vsub.f32 %v85, %v188
    %v205 = vsub.f32 %v86, %v189
    %v206 = vsub.f32 %v87, %v190
    %v207 = vsub.f32 %v88, %v191
    %v208 = vsub.f32 %v89, %v192
    %v209 = vsub.f32 %v90, %v193
    %v210 = vsub.f32 %v91, %v194
    %v211 = vsub.f32 %v92, %v195
    %v212 = vsub.f32 %v122, %v196
    %v213 = vsub.f32 %v123, %v197
    %v214 = vsub.f32 %v124, %v198
    %v215 = vsub.f32 %v125, %v199
    %v216 = vsub.f32 %v126, %v200
    %v217 = vsub.f32 %v127, %v201
    %v218 = vsub.f32 %v128, %v202
    %v219 = vsub.f32 %v129, %v203
    %v220 = vmul.f32 %v204, %v204
    %v221 = vmul.f32 %v205, %v205
    %v222 = vmul.f32 %v206, %v206
    %v223 = vmul.f32 %v207, %v207
    %v224 = vmul.f32 %v208, %v208
    %v225 = vmul.f32 %v209, %v209
    %v226 = vmul.f32 %v210, %v210
    %v227 = vmul.f32 %v211, %v211
    %v228 = vmul.f32 %v212, %v212
    %v229 = vmul.f32 %v213, %v213
    %v230 = vmul.f32 %v214, %v214
    %v231 = vmul.f32 %v215, %v215
    %v232 = vmul.f32 %v216, %v216
    %v233 = vmul.f32 %v217, %v217
    %v234 = vmul.f32 %v218, %v218
    %v235 = vmul.f32 %v219, %v219
    %v236 = vsel %vm138, %v220, 0.0
    %237 = vadd.xlane.f32.xlu0 %v236
    %v238 = vpop.xlane.xlu0 %237
    %v239 = vsel %vm138, %v221, 0.0
    %240 = vadd.xlane.f32.xlu0 %v239
    %v241 = vpop.xlane.xlu0 %240
    %v242 = vsel %vm138, %v222, 0.0
    %243 = vadd.xlane.f32.xlu0 %v242
    %v244 = vpop.xlane.xlu0 %243
    %v245 = vsel %vm138, %v223, 0.0
    %246 = vadd.xlane.f32.xlu0 %v245
    %v247 = vpop.xlane.xlu0 %246
    %v248 = vsel %vm138, %v224, 0.0
    %249 = vadd.xlane.f32.xlu0 %v248
    %v250 = vpop.xlane.xlu0 %249
    %v251 = vsel %vm138, %v225, 0.0
    %252 = vadd.xlane.f32.xlu0 %v251
    %v253 = vpop.xlane.xlu0 %252
    %v254 = vsel %vm138, %v226, 0.0
    %255 = vadd.xlane.f32.xlu0 %v254
    %v256 = vpop.xlane.xlu0 %255
    %v257 = vsel %vm138, %v227, 0.0
    %258 = vadd.xlane.f32.xlu0 %v257
    %v259 = vpop.xlane.xlu0 %258
    %v260 = vsel %vm138, %v228, 0.0
    %261 = vadd.xlane.f32.xlu0 %v260
    %v262 = vpop.xlane.xlu0 %261
    %v263 = vsel %vm138, %v229, 0.0
    %264 = vadd.xlane.f32.xlu0 %v263
    %v265 = vpop.xlane.xlu0 %264
    %v266 = vsel %vm138, %v230, 0.0
    %267 = vadd.xlane.f32.xlu0 %v266
    %v268 = vpop.xlane.xlu0 %267
    %v269 = vsel %vm138, %v231, 0.0
    %270 = vadd.xlane.f32.xlu0 %v269
    %v271 = vpop.xlane.xlu0 %270
    %v272 = vsel %vm138, %v232, 0.0
    %273 = vadd.xlane.f32.xlu0 %v272
    %v274 = vpop.xlane.xlu0 %273
    %v275 = vsel %vm138, %v233, 0.0
    %276 = vadd.xlane.f32.xlu0 %v275
    %v277 = vpop.xlane.xlu0 %276
    %v278 = vsel %vm138, %v234, 0.0
    %279 = vadd.xlane.f32.xlu0 %v278
    %v280 = vpop.xlane.xlu0 %279
    %v281 = vsel %vm138, %v235, 0.0
    %282 = vadd.xlane.f32.xlu0 %v281
    %v283 = vpop.xlane.xlu0 %282
    %v284 = vmul.f32 %v238, %v187
    %v285 = vmul.f32 %v241, %v187
    %v286 = vmul.f32 %v244, %v187
    %v287 = vmul.f32 %v247, %v187
    %v288 = vmul.f32 %v250, %v187
    %v289 = vmul.f32 %v253, %v187
    %v290 = vmul.f32 %v256, %v187
    %v291 = vmul.f32 %v259, %v187
    %v292 = vmul.f32 %v262, %v187
    %v293 = vmul.f32 %v265, %v187
    %v294 = vmul.f32 %v268, %v187
    %v295 = vmul.f32 %v271, %v187
    %v296 = vmul.f32 %v274, %v187
    %v297 = vmul.f32 %v277, %v187
    %v298 = vmul.f32 %v280, %v187
    %v299 = vmul.f32 %v283, %v187
    %v300 = vadd.f32 %v284, 1e-05
    %v301 = vadd.f32 %v285, 1e-05
    %v302 = vadd.f32 %v286, 1e-05
    %v303 = vadd.f32 %v287, 1e-05
    %v304 = vadd.f32 %v288, 1e-05
    %v305 = vadd.f32 %v289, 1e-05
    %v306 = vadd.f32 %v290, 1e-05
    %v307 = vadd.f32 %v291, 1e-05
    %v308 = vadd.f32 %v292, 1e-05
    %v309 = vadd.f32 %v293, 1e-05
    %v310 = vadd.f32 %v294, 1e-05
    %v311 = vadd.f32 %v295, 1e-05
    %v312 = vadd.f32 %v296, 1e-05
    %v313 = vadd.f32 %v297, 1e-05
    %v314 = vadd.f32 %v298, 1e-05
    %v315 = vadd.f32 %v299, 1e-05
    %v316 = vrsqrt.pop %v300
    %v317 = vrsqrt.pop %v301
    %v318 = vrsqrt.pop %v302
    %v319 = vrsqrt.pop %v303
    %v320 = vrsqrt.pop %v304
    %v321 = vrsqrt.pop %v305
    %v322 = vrsqrt.pop %v306
    %v323 = vrsqrt.pop %v307
    %v324 = vrsqrt.pop %v308
    %v325 = vrsqrt.pop %v309
    %v326 = vrsqrt.pop %v310
    %v327 = vrsqrt.pop %v311
    %v328 = vrsqrt.pop %v312
    %v329 = vrsqrt.pop %v313
    %v330 = vrsqrt.pop %v314
    %v331 = vrsqrt.pop %v315
    %v332 = vmul.f32 %v204, %v316
    %v333 = vmul.f32 %v205, %v317
    %v334 = vmul.f32 %v206, %v318
    %v335 = vmul.f32 %v207, %v319
    %v336 = vmul.f32 %v208, %v320
    %v337 = vmul.f32 %v209, %v321
    %v338 = vmul.f32 %v210, %v322
    %v339 = vmul.f32 %v211, %v323
    %v340 = vmul.f32 %v212, %v324
    %v341 = vmul.f32 %v213, %v325
    %v342 = vmul.f32 %v214, %v326
    %v343 = vmul.f32 %v215, %v327
    %v344 = vmul.f32 %v216, %v328
    %v345 = vmul.f32 %v217, %v329
    %v346 = vmul.f32 %v218, %v330
    %v347 = vmul.f32 %v219, %v331
    %v348 = vld [vmem:[%s1] sm:$0x1]
    %v350 = vlaneseq
    %v351 = vshrl.u32 %v350, 7
    %v352 = vsub.s32 0, %v351
    %v353 = vrot.slane %v348, %v352
    %v355 = vmul.f32 %v332, %v353
    %v356 = vmul.f32 %v333, %v353
    %v357 = vmul.f32 %v334, %v353
    %v358 = vmul.f32 %v335, %v353
    %v359 = vmul.f32 %v336, %v353
    %v360 = vmul.f32 %v337, %v353
    %v361 = vmul.f32 %v338, %v353
    %v362 = vmul.f32 %v339, %v353
    %v363 = vmul.f32 %v340, %v353
    %v364 = vmul.f32 %v341, %v353
    %v365 = vmul.f32 %v342, %v353
    %v366 = vmul.f32 %v343, %v353
    %v367 = vmul.f32 %v344, %v353
    %v368 = vmul.f32 %v345, %v353
    %v369 = vmul.f32 %v346, %v353
    %v370 = vmul.f32 %v347, %v353
    %v371 = vld [vmem:[%s2] sm:$0x1]
    %v373 = vlaneseq
    %v374 = vshrl.u32 %v373, 7
    %v375 = vsub.s32 0, %v374
    %v376 = vrot.slane %v371, %v375
    %v378 = vadd.f32 %v355, %v376
    %v379 = vadd.f32 %v356, %v376
    %v380 = vadd.f32 %v357, %v376
    %v381 = vadd.f32 %v358, %v376
    %v382 = vadd.f32 %v359, %v376
    %v383 = vadd.f32 %v360, %v376
    %v384 = vadd.f32 %v361, %v376
    %v385 = vadd.f32 %v362, %v376
    %v386 = vadd.f32 %v363, %v376
    %v387 = vadd.f32 %v364, %v376
    %v388 = vadd.f32 %v365, %v376
    %v389 = vadd.f32 %v366, %v376
    %v390 = vadd.f32 %v367, %v376
    %v391 = vadd.f32 %v368, %v376
    %v392 = vadd.f32 %v369, %v376
    %v393 = vadd.f32 %v370, %v376
    %v394 = vld [vmem:[#allocation5] sm:$0xff]
    %v395 = vld [vmem:[#allocation5 + $0x8] sm:$0xff]
    %v396 = vld [vmem:[#allocation5 + $0x10] sm:$0xff]
    %v397 = vld [vmem:[#allocation5 + $0x18] sm:$0xff]
    %v399 = vsel %vm138, %v378, 0
    %v402 = vsel %vm138, %v379, 0
    %v405 = vsel %vm138, %v380, 0
    %v408 = vsel %vm138, %v381, 0
    %v411 = vsel %vm138, %v382, 0
    %v414 = vsel %vm138, %v383, 0
    %v417 = vsel %vm138, %v384, 0
    %v420 = vsel %vm138, %v385, 0
    %v423 = vsel %vm138, %v386, 0
    %v426 = vsel %vm138, %v387, 0
    %v429 = vsel %vm138, %v388, 0
    %v432 = vsel %vm138, %v389, 0
    %v435 = vsel %vm138, %v390, 0
    %v438 = vsel %vm138, %v391, 0
    %v441 = vsel %vm138, %v392, 0
    %v444 = vsel %vm138, %v393, 0
    %446 = vmatprep.subr.mxu0 0.0
    %447 = vmatpush1.msra.mxu0 %v394
    %448 = vmatprep.subr.mxu0 0.0
    %449 = vmatpush1.msra.mxu0 %v395
    %450 = vmatprep.subr.mxu0 0.0
    %451 = vmatpush1.msra.mxu0 %v396
    %452 = vmatprep.subr.mxu0 0.0
    %453 = vmatpush1.msra.mxu0 %v397
    %454 = vmatprep.subr.mxu0 0.0
    %455 = vmatpush1.msra.mxu0 0.0
    %456 = vmatprep.subr.mxu0 0.0
    %457 = vmatpush1.msra.mxu0 0.0
    %458 = vmatprep.subr.mxu0 0.0
    %459 = vmatpush1.msra.mxu0 0.0
    %460 = vmatprep.subr.mxu0 0.0
    %461 = vmatpush1.msra.mxu0 0.0
    %462 = vmatprep.subr.mxu0 0.0
    %463 = vmatpush1.msra.mxu0 0.0
    %464 = vmatprep.subr.mxu0 0.0
    %465 = vmatpush1.msra.mxu0 0.0
    %466 = vmatprep.subr.mxu0 0.0
    %467 = vmatpush1.msra.mxu0 0.0
    %468 = vmatprep.subr.mxu0 0.0
    %469 = vmatpush1.msra.mxu0 0.0
    %470 = vmatprep.subr.mxu0 0.0
    %471 = vmatpush1.msra.mxu0 0.0
    %472 = vmatprep.subr.mxu0 0.0
    %473 = vmatpush1.msra.mxu0 0.0
    %474 = vmatprep.subr.mxu0 0.0
    %475 = vmatpush1.msra.mxu0 0.0
    %476 = vmatprep.subr.mxu0 0.0
    %477 = vmatpush1.msra.mxu0 0.0
    %478 = vmatprep.subr.mxu0 0.0
    %479 = vmatpush1.msra.mxu0 0.0
    %480 = vmatprep.subr.mxu0 0.0
    %481 = vmatpush1.msra.mxu0 0.0
    %482 = vmatprep.subr.mxu0 0.0
    %483 = vmatpush1.msra.mxu0 0.0
    %484 = vmatprep.subr.mxu0 0.0
    %485 = vmatpush1.msra.mxu0 0.0
    %486 = vmatprep.subr.mxu0 0.0
    %487 = vmatpush1.msra.mxu0 0.0
    %488 = vmatprep.subr.mxu0 0.0
    %489 = vmatpush1.msra.mxu0 0.0
    %490 = vmatprep.subr.mxu0 0.0
    %491 = vmatpush1.msra.mxu0 0.0
    %492 = vmatprep.subr.mxu0 0.0
    %493 = vmatpush1.msra.mxu0 0.0
    %494 = vmatprep.subr.mxu0 0.0
    %495 = vmatpush1.msra.mxu0 0.0
    %496 = vmatprep.subr.mxu0 0.0
    %497 = vmatpush1.msra.mxu0 0.0
    %498 = vmatprep.subr.mxu0 0.0
    %499 = vmatpush1.msra.mxu0 0.0
    %500 = vmatprep.subr.mxu0 0.0
    %501 = vmatpush1.msra.mxu0 0.0
    %502 = vmatprep.subr.mxu0 0.0
    %503 = vmatpush1.msra.mxu0 0.0
    %504 = vmatprep.subr.mxu0 0.0
    %505 = vmatpush1.msra.mxu0 0.0
    %506 = vmatprep.subr.mxu0 0.0
    %507 = vmatpush1.msra.mxu0 0.0
    %508 = vmatprep.subr.mxu0 0.0
    %509 = vmatpush1.msra.mxu0 0.0
    %510 = vmatprep.mubr.f32.mxu0 0.0
    %511 = vmatmul.mubr.f32.gmra.mrb[0].mxu0 %v399
    %v512 = vpop.f32.mrb[0].mxu0
    %v513 = vadd.f32 0.0, %v512
    %v514 = vpop.f32.mrb[0].mxu0
    %515 = vmatprep.mubr.f32.mxu0 0.0
    %516 = vmatmul.mubr.f32.gmra.mrb[0].mxu0 %v402
    %v517 = vpop.f32.mrb[0].mxu0
    %v518 = vadd.f32 0.0, %v517
    %v519 = vpop.f32.mrb[0].mxu0
    %520 = vmatprep.mubr.f32.mxu0 0.0
    %521 = vmatmul.mubr.f32.gmra.mrb[0].mxu0 %v405
    %v522 = vpop.f32.mrb[0].mxu0
    %v523 = vadd.f32 0.0, %v522
    %v524 = vpop.f32.mrb[0].mxu0
    %525 = vmatprep.mubr.f32.mxu0 0.0
    %526 = vmatmul.mubr.f32.gmra.mrb[0].mxu0 %v408
    %v527 = vpop.f32.mrb[0].mxu0
    %v528 = vadd.f32 0.0, %v527
    %v529 = vpop.f32.mrb[0].mxu0
    %530 = vmatprep.mubr.f32.mxu0 0.0
    %531 = vmatmul.mubr.f32.gmra.mrb[0].mxu0 %v411
    %v532 = vpop.f32.mrb[0].mxu0
    %v533 = vadd.f32 0.0, %v532
    %v534 = vpop.f32.mrb[0].mxu0
    %535 = vmatprep.mubr.f32.mxu0 0.0
    %536 = vmatmul.mubr.f32.gmra.mrb[0].mxu0 %v414
    %v537 = vpop.f32.mrb[0].mxu0
    %v538 = vadd.f32 0.0, %v537
    %v539 = vpop.f32.mrb[0].mxu0
    %540 = vmatprep.mubr.f32.mxu0 0.0
    %541 = vmatmul.mubr.f32.gmra.mrb[0].mxu0 %v417
    %v542 = vpop.f32.mrb[0].mxu0
    %v543 = vadd.f32 0.0, %v542
    %v544 = vpop.f32.mrb[0].mxu0
    %545 = vmatprep.mubr.f32.mxu0 0.0
    %546 = vmatmul.mubr.f32.gmra.mrb[0].mxu0 %v420
    %v547 = vpop.f32.mrb[0].mxu0
    %v548 = vadd.f32 0.0, %v547
    %v549 = vpop.f32.mrb[0].mxu0
    %550 = vmatprep.mubr.f32.mxu0 0.0
    %551 = vmatmul.mubr.f32.gmra.mrb[0].mxu0 %v423
    %v552 = vpop.f32.mrb[0].mxu0
    %v553 = vadd.f32 0.0, %v552
    %v554 = vpop.f32.mrb[0].mxu0
    %555 = vmatprep.mubr.f32.mxu0 0.0
    %556 = vmatmul.mubr.f32.gmra.mrb[0].mxu0 %v426
    %v557 = vpop.f32.mrb[0].mxu0
    %v558 = vadd.f32 0.0, %v557
    %v559 = vpop.f32.mrb[0].mxu0
    %560 = vmatprep.mubr.f32.mxu0 0.0
    %561 = vmatmul.mubr.f32.gmra.mrb[0].mxu0 %v429
    %v562 = vpop.f32.mrb[0].mxu0
    %v563 = vadd.f32 0.0, %v562
    %v564 = vpop.f32.mrb[0].mxu0
    %565 = vmatprep.mubr.f32.mxu0 0.0
    %566 = vmatmul.mubr.f32.gmra.mrb[0].mxu0 %v432
    %v567 = vpop.f32.mrb[0].mxu0
    %v568 = vadd.f32 0.0, %v567
    %v569 = vpop.f32.mrb[0].mxu0
    %570 = vmatprep.mubr.f32.mxu0 0.0
    %571 = vmatmul.mubr.f32.gmra.mrb[0].mxu0 %v435
    %v572 = vpop.f32.mrb[0].mxu0
    %v573 = vadd.f32 0.0, %v572
    %v574 = vpop.f32.mrb[0].mxu0
    %575 = vmatprep.mubr.f32.mxu0 0.0
    %576 = vmatmul.mubr.f32.gmra.mrb[0].mxu0 %v438
    %v577 = vpop.f32.mrb[0].mxu0
    %v578 = vadd.f32 0.0, %v577
    %v579 = vpop.f32.mrb[0].mxu0
    %580 = vmatprep.mubr.f32.mxu0 0.0
    %581 = vmatmul.mubr.f32.gmra.mrb[0].mxu0 %v441
    %v582 = vpop.f32.mrb[0].mxu0
    %v583 = vadd.f32 0.0, %v582
    %v584 = vpop.f32.mrb[0].mxu0
    %585 = vmatprep.mubr.f32.mxu0 0.0
    %586 = vmatmul.mubr.f32.gmra.mrb[0].mxu0 %v444
    %v587 = vpop.f32.mrb[0].mxu0
    %v588 = vadd.f32 0.0, %v587
    %v589 = vpop.f32.mrb[0].mxu0
    %590 = vdwg.mxu0
    %v591 = vld [vmem:[#allocation7] sm:$0xff]
    %v592 = vld [vmem:[#allocation7 + $0x8] sm:$0xff]
    %v593 = vld [vmem:[#allocation7 + $0x10] sm:$0xff]
    %v594 = vld [vmem:[#allocation7 + $0x18] sm:$0xff]
    %603 = vrot.lane.b32.xlu0 %v513, 96
    %v604 = vpop.permute.xlu0 %603
    %605 = vrot.lane.b32.xlu0 %v518, 96
    %v606 = vpop.permute.xlu0 %605
    %607 = vrot.lane.b32.xlu0 %v523, 96
    %v608 = vpop.permute.xlu0 %607
    %609 = vrot.lane.b32.xlu0 %v528, 96
    %v610 = vpop.permute.xlu0 %609
    %611 = vrot.lane.b32.xlu0 %v533, 96
    %v612 = vpop.permute.xlu0 %611
    %613 = vrot.lane.b32.xlu0 %v538, 96
    %v614 = vpop.permute.xlu0 %613
    %615 = vrot.lane.b32.xlu0 %v543, 96
    %v616 = vpop.permute.xlu0 %615
    %617 = vrot.lane.b32.xlu0 %v548, 96
    %v618 = vpop.permute.xlu0 %617
    %vm619 = vcmask 64512
    %v620 = vsel %vm619, %v513, 0
    %v622 = vsel %vm619, %v518, 0
    %v624 = vsel %vm619, %v523, 0
    %v626 = vsel %vm619, %v528, 0
    %v628 = vsel %vm619, %v533, 0
    %v630 = vsel %vm619, %v538, 0
    %v632 = vsel %vm619, %v543, 0
    %v634 = vsel %vm619, %v548, 0
    %v636 = vsel %vm619, %v604, 0
    %v638 = vsel %vm619, %v606, 0
    %v640 = vsel %vm619, %v608, 0
    %v642 = vsel %vm619, %v610, 0
    %v644 = vsel %vm619, %v612, 0
    %v646 = vsel %vm619, %v614, 0
    %v648 = vsel %vm619, %v616, 0
    %v650 = vsel %vm619, %v618, 0
    %652 = vmatprep.subr.mxu0 0.0
    %653 = vmatpush1.xpose.msra.mxu0 %v636
    %654 = vmatprep.subr.mxu0 0.0
    %655 = vmatpush1.xpose.msra.mxu0 %v638
    %656 = vmatprep.subr.mxu0 0.0
    %657 = vmatpush1.xpose.msra.mxu0 %v640
    %658 = vmatprep.subr.mxu0 0.0
    %659 = vmatpush1.xpose.msra.mxu0 %v642
    %660 = vmatprep.subr.mxu0 0.0
    %661 = vmatpush1.xpose.msra.mxu0 %v644
    %662 = vmatprep.subr.mxu0 0.0
    %663 = vmatpush1.xpose.msra.mxu0 %v646
    %664 = vmatprep.subr.mxu0 0.0
    %665 = vmatpush1.xpose.msra.mxu0 %v648
    %666 = vmatprep.subr.mxu0 0.0
    %667 = vmatpush1.xpose.msra.mxu0 %v650
    %668 = vmatprep.subr.mxu0 0.0
    %669 = vmatpush1.xpose.msra.mxu0 0.0
    %670 = vmatprep.subr.mxu0 0.0
    %671 = vmatpush1.xpose.msra.mxu0 0.0
    %672 = vmatprep.subr.mxu0 0.0
    %673 = vmatpush1.xpose.msra.mxu0 0.0
    %674 = vmatprep.subr.mxu0 0.0
    %675 = vmatpush1.xpose.msra.mxu0 0.0
    %676 = vmatprep.subr.mxu0 0.0
    %677 = vmatpush1.xpose.msra.mxu0 0.0
    %678 = vmatprep.subr.mxu0 0.0
    %679 = vmatpush1.xpose.msra.mxu0 0.0
    %680 = vmatprep.subr.mxu0 0.0
    %681 = vmatpush1.xpose.msra.mxu0 0.0
    %682 = vmatprep.subr.mxu0 0.0
    %683 = vmatpush1.xpose.msra.mxu0 0.0
    %684 = vmatprep.subr.mxu0 0.0
    %685 = vmatpush1.xpose.msra.mxu0 0.0
    %686 = vmatprep.subr.mxu0 0.0
    %687 = vmatpush1.xpose.msra.mxu0 0.0
    %688 = vmatprep.subr.mxu0 0.0
    %689 = vmatpush1.xpose.msra.mxu0 0.0
    %690 = vmatprep.subr.mxu0 0.0
    %691 = vmatpush1.xpose.msra.mxu0 0.0
    %692 = vmatprep.subr.mxu0 0.0
    %693 = vmatpush1.xpose.msra.mxu0 0.0
    %694 = vmatprep.subr.mxu0 0.0
    %695 = vmatpush1.xpose.msra.mxu0 0.0
    %696 = vmatprep.subr.mxu0 0.0
    %697 = vmatpush1.xpose.msra.mxu0 0.0
    %698 = vmatprep.subr.mxu0 0.0
    %699 = vmatpush1.xpose.msra.mxu0 0.0
    %700 = vmatprep.subr.mxu0 0.0
    %701 = vmatpush1.xpose.msra.mxu0 0.0
    %702 = vmatprep.subr.mxu0 0.0
    %703 = vmatpush1.xpose.msra.mxu0 0.0
    %704 = vmatprep.subr.mxu0 0.0
    %705 = vmatpush1.xpose.msra.mxu0 0.0
    %706 = vmatprep.subr.mxu0 0.0
    %707 = vmatpush1.xpose.msra.mxu0 0.0
    %708 = vmatprep.subr.mxu0 0.0
    %709 = vmatpush1.xpose.msra.mxu0 0.0
    %710 = vmatprep.subr.mxu0 0.0
    %711 = vmatpush1.xpose.msra.mxu0 0.0
    %712 = vmatprep.subr.mxu0 0.0
    %713 = vmatpush1.xpose.msra.mxu0 0.0
    %714 = vmatprep.subr.mxu0 0.0
    %715 = vmatpush1.xpose.msra.mxu0 0.0
    %716 = vmatprep.mubr.f32.mxu0 0.0
    %717 = vmatmul.mubr.f32.gmra.mrb[0].mxu0 %v620
    %v718 = vpop.f32.mrb[0].mxu0
    %v719 = vadd.f32 0.0, %v718
    %v720 = vpop.f32.mrb[0].mxu0
    %721 = vmatprep.mubr.f32.mxu0 0.0
    %722 = vmatmul.mubr.f32.gmra.mrb[0].mxu0 %v622
    %v723 = vpop.f32.mrb[0].mxu0
    %v724 = vadd.f32 0.0, %v723
    %v725 = vpop.f32.mrb[0].mxu0
    %726 = vmatprep.mubr.f32.mxu0 0.0
    %727 = vmatmul.mubr.f32.gmra.mrb[0].mxu0 %v624
    %v728 = vpop.f32.mrb[0].mxu0
    %v729 = vadd.f32 0.0, %v728
    %v730 = vpop.f32.mrb[0].mxu0
    %731 = vmatprep.mubr.f32.mxu0 0.0
    %732 = vmatmul.mubr.f32.gmra.mrb[0].mxu0 %v626
    %v733 = vpop.f32.mrb[0].mxu0
    %v734 = vadd.f32 0.0, %v733
    %v735 = vpop.f32.mrb[0].mxu0
    %736 = vmatprep.mubr.f32.mxu0 0.0
    %737 = vmatmul.mubr.f32.gmra.mrb[0].mxu0 %v628
    %v738 = vpop.f32.mrb[0].mxu0
    %v739 = vadd.f32 0.0, %v738
    %v740 = vpop.f32.mrb[0].mxu0
    %741 = vmatprep.mubr.f32.mxu0 0.0
    %742 = vmatmul.mubr.f32.gmra.mrb[0].mxu0 %v630
    %v743 = vpop.f32.mrb[0].mxu0
    %v744 = vadd.f32 0.0, %v743
    %v745 = vpop.f32.mrb[0].mxu0
    %746 = vmatprep.mubr.f32.mxu0 0.0
    %747 = vmatmul.mubr.f32.gmra.mrb[0].mxu0 %v632
    %v748 = vpop.f32.mrb[0].mxu0
    %v749 = vadd.f32 0.0, %v748
    %v750 = vpop.f32.mrb[0].mxu0
    %751 = vmatprep.mubr.f32.mxu0 0.0
    %752 = vmatmul.mubr.f32.gmra.mrb[0].mxu0 %v634
    %v753 = vpop.f32.mrb[0].mxu0
    %v754 = vadd.f32 0.0, %v753
    %v755 = vpop.f32.mrb[0].mxu0
    %756 = vdwg.mxu0
    %765 = vrot.lane.b32.xlu0 %v553, 96
    %v766 = vpop.permute.xlu0 %765
    %767 = vrot.lane.b32.xlu0 %v558, 96
    %v768 = vpop.permute.xlu0 %767
    %769 = vrot.lane.b32.xlu0 %v563, 96
    %v770 = vpop.permute.xlu0 %769
    %771 = vrot.lane.b32.xlu0 %v568, 96
    %v772 = vpop.permute.xlu0 %771
    %773 = vrot.lane.b32.xlu0 %v573, 96
    %v774 = vpop.permute.xlu0 %773
    %775 = vrot.lane.b32.xlu0 %v578, 96
    %v776 = vpop.permute.xlu0 %775
    %777 = vrot.lane.b32.xlu0 %v583, 96
    %v778 = vpop.permute.xlu0 %777
    %779 = vrot.lane.b32.xlu0 %v588, 96
    %v780 = vpop.permute.xlu0 %779
    %v781 = vsel %vm619, %v553, 0
    %v783 = vsel %vm619, %v558, 0
    %v785 = vsel %vm619, %v563, 0
    %v787 = vsel %vm619, %v568, 0
    %v789 = vsel %vm619, %v573, 0
    %v791 = vsel %vm619, %v578, 0
    %v793 = vsel %vm619, %v583, 0
    %v795 = vsel %vm619, %v588, 0
    %v797 = vsel %vm619, %v766, 0
    %v799 = vsel %vm619, %v768, 0
    %v801 = vsel %vm619, %v770, 0
    %v803 = vsel %vm619, %v772, 0
    %v805 = vsel %vm619, %v774, 0
    %v807 = vsel %vm619, %v776, 0
    %v809 = vsel %vm619, %v778, 0
    %v811 = vsel %vm619, %v780, 0
    %813 = vmatprep.subr.mxu0 0.0
    %814 = vmatpush1.xpose.msra.mxu0 %v797
    %815 = vmatprep.subr.mxu0 0.0
    %816 = vmatpush1.xpose.msra.mxu0 %v799
    %817 = vmatprep.subr.mxu0 0.0
    %818 = vmatpush1.xpose.msra.mxu0 %v801
    %819 = vmatprep.subr.mxu0 0.0
    %820 = vmatpush1.xpose.msra.mxu0 %v803
    %821 = vmatprep.subr.mxu0 0.0
    %822 = vmatpush1.xpose.msra.mxu0 %v805
    %823 = vmatprep.subr.mxu0 0.0
    %824 = vmatpush1.xpose.msra.mxu0 %v807
    %825 = vmatprep.subr.mxu0 0.0
    %826 = vmatpush1.xpose.msra.mxu0 %v809
    %827 = vmatprep.subr.mxu0 0.0
    %828 = vmatpush1.xpose.msra.mxu0 %v811
    %829 = vmatprep.subr.mxu0 0.0
    %830 = vmatpush1.xpose.msra.mxu0 0.0
    %831 = vmatprep.subr.mxu0 0.0
    %832 = vmatpush1.xpose.msra.mxu0 0.0
    %833 = vmatprep.subr.mxu0 0.0
    %834 = vmatpush1.xpose.msra.mxu0 0.0
    %835 = vmatprep.subr.mxu0 0.0
    %836 = vmatpush1.xpose.msra.mxu0 0.0
    %837 = vmatprep.subr.mxu0 0.0
    %838 = vmatpush1.xpose.msra.mxu0 0.0
    %839 = vmatprep.subr.mxu0 0.0
    %840 = vmatpush1.xpose.msra.mxu0 0.0
    %841 = vmatprep.subr.mxu0 0.0
    %842 = vmatpush1.xpose.msra.mxu0 0.0
    %843 = vmatprep.subr.mxu0 0.0
    %844 = vmatpush1.xpose.msra.mxu0 0.0
    %845 = vmatprep.subr.mxu0 0.0
    %846 = vmatpush1.xpose.msra.mxu0 0.0
    %847 = vmatprep.subr.mxu0 0.0
    %848 = vmatpush1.xpose.msra.mxu0 0.0
    %849 = vmatprep.subr.mxu0 0.0
    %850 = vmatpush1.xpose.msra.mxu0 0.0
    %851 = vmatprep.subr.mxu0 0.0
    %852 = vmatpush1.xpose.msra.mxu0 0.0
    %853 = vmatprep.subr.mxu0 0.0
    %854 = vmatpush1.xpose.msra.mxu0 0.0
    %855 = vmatprep.subr.mxu0 0.0
    %856 = vmatpush1.xpose.msra.mxu0 0.0
    %857 = vmatprep.subr.mxu0 0.0
    %858 = vmatpush1.xpose.msra.mxu0 0.0
    %859 = vmatprep.subr.mxu0 0.0
    %860 = vmatpush1.xpose.msra.mxu0 0.0
    %861 = vmatprep.subr.mxu0 0.0
    %862 = vmatpush1.xpose.msra.mxu0 0.0
    %863 = vmatprep.subr.mxu0 0.0
    %864 = vmatpush1.xpose.msra.mxu0 0.0
    %865 = vmatprep.subr.mxu0 0.0
    %866 = vmatpush1.xpose.msra.mxu0 0.0
    %867 = vmatprep.subr.mxu0 0.0
    %868 = vmatpush1.xpose.msra.mxu0 0.0
    %869 = vmatprep.subr.mxu0 0.0
    %870 = vmatpush1.xpose.msra.mxu0 0.0
    %871 = vmatprep.subr.mxu0 0.0
    %872 = vmatpush1.xpose.msra.mxu0 0.0
    %873 = vmatprep.subr.mxu0 0.0
    %874 = vmatpush1.xpose.msra.mxu0 0.0
    %875 = vmatprep.subr.mxu0 0.0
    %876 = vmatpush1.xpose.msra.mxu0 0.0
    %877 = vmatprep.mubr.f32.mxu0 0.0
    %878 = vmatmul.mubr.f32.gmra.mrb[0].mxu0 %v781
    %v879 = vpop.f32.mrb[0].mxu0
    %v880 = vadd.f32 0.0, %v879
    %v881 = vpop.f32.mrb[0].mxu0
    %882 = vmatprep.mubr.f32.mxu0 0.0
    %883 = vmatmul.mubr.f32.gmra.mrb[0].mxu0 %v783
    %v884 = vpop.f32.mrb[0].mxu0
    %v885 = vadd.f32 0.0, %v884
    %v886 = vpop.f32.mrb[0].mxu0
    %887 = vmatprep.mubr.f32.mxu0 0.0
    %888 = vmatmul.mubr.f32.gmra.mrb[0].mxu0 %v785
    %v889 = vpop.f32.mrb[0].mxu0
    %v890 = vadd.f32 0.0, %v889
    %v891 = vpop.f32.mrb[0].mxu0
    %892 = vmatprep.mubr.f32.mxu0 0.0
    %893 = vmatmul.mubr.f32.gmra.mrb[0].mxu0 %v787
    %v894 = vpop.f32.mrb[0].mxu0
    %v895 = vadd.f32 0.0, %v894
    %v896 = vpop.f32.mrb[0].mxu0
    %897 = vmatprep.mubr.f32.mxu0 0.0
    %898 = vmatmul.mubr.f32.gmra.mrb[0].mxu0 %v789
    %v899 = vpop.f32.mrb[0].mxu0
    %v900 = vadd.f32 0.0, %v899
    %v901 = vpop.f32.mrb[0].mxu0
    %902 = vmatprep.mubr.f32.mxu0 0.0
    %903 = vmatmul.mubr.f32.gmra.mrb[0].mxu0 %v791
    %v904 = vpop.f32.mrb[0].mxu0
    %v905 = vadd.f32 0.0, %v904
    %v906 = vpop.f32.mrb[0].mxu0
    %907 = vmatprep.mubr.f32.mxu0 0.0
    %908 = vmatmul.mubr.f32.gmra.mrb[0].mxu0 %v793
    %v909 = vpop.f32.mrb[0].mxu0
    %v910 = vadd.f32 0.0, %v909
    %v911 = vpop.f32.mrb[0].mxu0
    %912 = vmatprep.mubr.f32.mxu0 0.0
    %913 = vmatmul.mubr.f32.gmra.mrb[0].mxu0 %v795
    %v914 = vpop.f32.mrb[0].mxu0
    %v915 = vadd.f32 0.0, %v914
    %v916 = vpop.f32.mrb[0].mxu0
    %917 = vdwg.mxu0
    %vm918 = vcmask 523264
    %v919 = vsel %vm918, %v719, -inf
    %920 = vmax.xlane.f32.xlu0 %v919
    %v921 = vpop.xlane.xlu0 %920
    %v922 = vsel %vm918, %v724, -inf
    %923 = vmax.xlane.f32.xlu0 %v922
    %v924 = vpop.xlane.xlu0 %923
    %v925 = vsel %vm918, %v729, -inf
    %926 = vmax.xlane.f32.xlu0 %v925
    %v927 = vpop.xlane.xlu0 %926
    %v928 = vsel %vm918, %v734, -inf
    %929 = vmax.xlane.f32.xlu0 %v928
    %v930 = vpop.xlane.xlu0 %929
    %v931 = vsel %vm918, %v739, -inf
    %932 = vmax.xlane.f32.xlu0 %v931
    %v933 = vpop.xlane.xlu0 %932
    %v934 = vsel %vm918, %v744, -inf
    %935 = vmax.xlane.f32.xlu0 %v934
    %v936 = vpop.xlane.xlu0 %935
    %v937 = vsel %vm918, %v749, -inf
    %938 = vmax.xlane.f32.xlu0 %v937
    %v939 = vpop.xlane.xlu0 %938
    %v940 = vsel %vm918, %v754, -inf
    %941 = vmax.xlane.f32.xlu0 %v940
    %v942 = vpop.xlane.xlu0 %941
    %v943 = vsel %vm918, %v880, -inf
    %944 = vmax.xlane.f32.xlu0 %v943
    %v945 = vpop.xlane.xlu0 %944
    %v946 = vsel %vm918, %v885, -inf
    %947 = vmax.xlane.f32.xlu0 %v946
    %v948 = vpop.xlane.xlu0 %947
    %v949 = vsel %vm918, %v890, -inf
    %950 = vmax.xlane.f32.xlu0 %v949
    %v951 = vpop.xlane.xlu0 %950
    %v952 = vsel %vm918, %v895, -inf
    %953 = vmax.xlane.f32.xlu0 %v952
    %v954 = vpop.xlane.xlu0 %953
    %v955 = vsel %vm918, %v900, -inf
    %956 = vmax.xlane.f32.xlu0 %v955
    %v957 = vpop.xlane.xlu0 %956
    %v958 = vsel %vm918, %v905, -inf
    %959 = vmax.xlane.f32.xlu0 %v958
    %v960 = vpop.xlane.xlu0 %959
    %v961 = vsel %vm918, %v910, -inf
    %962 = vmax.xlane.f32.xlu0 %v961
    %v963 = vpop.xlane.xlu0 %962
    %v964 = vsel %vm918, %v915, -inf
    %965 = vmax.xlane.f32.xlu0 %v964
    %v966 = vpop.xlane.xlu0 %965
    %v967 = vsub.f32 %v719, %v921
    %v968 = vsub.f32 %v724, %v924
    %v969 = vsub.f32 %v729, %v927
    %v970 = vsub.f32 %v734, %v930
    %v971 = vsub.f32 %v739, %v933
    %v972 = vsub.f32 %v744, %v936
    %v973 = vsub.f32 %v749, %v939
    %v974 = vsub.f32 %v754, %v942
    %v975 = vsub.f32 %v880, %v945
    %v976 = vsub.f32 %v885, %v948
    %v977 = vsub.f32 %v890, %v951
    %v978 = vsub.f32 %v895, %v954
    %v979 = vsub.f32 %v900, %v957
    %v980 = vsub.f32 %v905, %v960
    %v981 = vsub.f32 %v910, %v963
    %v982 = vsub.f32 %v915, %v966
    %v983 = vmul.f32 %v967, 1.442695
    %v984 = vpow.pop %v983
    %v985 = vmul.f32 %v968, 1.442695
    %v986 = vpow.pop %v985
    %v987 = vmul.f32 %v969, 1.442695
    %v988 = vpow.pop %v987
    %v989 = vmul.f32 %v970, 1.442695
    %v990 = vpow.pop %v989
    %v991 = vmul.f32 %v971, 1.442695
    %v992 = vpow.pop %v991
    %v993 = vmul.f32 %v972, 1.442695
    %v994 = vpow.pop %v993
    %v995 = vmul.f32 %v973, 1.442695
    %v996 = vpow.pop %v995
    %v997 = vmul.f32 %v974, 1.442695
    %v998 = vpow.pop %v997
    %v999 = vmul.f32 %v975, 1.442695
    %v1000 = vpow.pop %v999
    %v1001 = vmul.f32 %v976, 1.442695
    %v1002 = vpow.pop %v1001
    %v1003 = vmul.f32 %v977, 1.442695
    %v1004 = vpow.pop %v1003
    %v1005 = vmul.f32 %v978, 1.442695
    %v1006 = vpow.pop %v1005
    %v1007 = vmul.f32 %v979, 1.442695
    %v1008 = vpow.pop %v1007
    %v1009 = vmul.f32 %v980, 1.442695
    %v1010 = vpow.pop %v1009
    %v1011 = vmul.f32 %v981, 1.442695
    %v1012 = vpow.pop %v1011
    %v1013 = vmul.f32 %v982, 1.442695
    %v1014 = vpow.pop %v1013
    %v1015 = vsel %vm918, %v984, 0.0
    %1016 = vadd.xlane.f32.xlu0 %v1015
    %v1017 = vpop.xlane.xlu0 %1016
    %v1018 = vsel %vm918, %v986, 0.0
    %1019 = vadd.xlane.f32.xlu0 %v1018
    %v1020 = vpop.xlane.xlu0 %1019
    %v1021 = vsel %vm918, %v988, 0.0
    %1022 = vadd.xlane.f32.xlu0 %v1021
    %v1023 = vpop.xlane.xlu0 %1022
    %v1024 = vsel %vm918, %v990, 0.0
    %1025 = vadd.xlane.f32.xlu0 %v1024
    %v1026 = vpop.xlane.xlu0 %1025
    %v1027 = vsel %vm918, %v992, 0.0
    %1028 = vadd.xlane.f32.xlu0 %v1027
    %v1029 = vpop.xlane.xlu0 %1028
    %v1030 = vsel %vm918, %v994, 0.0
    %1031 = vadd.xlane.f32.xlu0 %v1030
    %v1032 = vpop.xlane.xlu0 %1031
    %v1033 = vsel %vm918, %v996, 0.0
    %1034 = vadd.xlane.f32.xlu0 %v1033
    %v1035 = vpop.xlane.xlu0 %1034
    %v1036 = vsel %vm918, %v998, 0.0
    %1037 = vadd.xlane.f32.xlu0 %v1036
    %v1038 = vpop.xlane.xlu0 %1037
    %v1039 = vsel %vm918, %v1000, 0.0
    %1040 = vadd.xlane.f32.xlu0 %v1039
    %v1041 = vpop.xlane.xlu0 %1040
    %v1042 = vsel %vm918, %v1002, 0.0
    %1043 = vadd.xlane.f32.xlu0 %v1042
    %v1044 = vpop.xlane.xlu0 %1043
    %v1045 = vsel %vm918, %v1004, 0.0
    %1046 = vadd.xlane.f32.xlu0 %v1045
    %v1047 = vpop.xlane.xlu0 %1046
    %v1048 = vsel %vm918, %v1006, 0.0
    %1049 = vadd.xlane.f32.xlu0 %v1048
    %v1050 = vpop.xlane.xlu0 %1049
    %v1051 = vsel %vm918, %v1008, 0.0
    %1052 = vadd.xlane.f32.xlu0 %v1051
    %v1053 = vpop.xlane.xlu0 %1052
    %v1054 = vsel %vm918, %v1010, 0.0
    %1055 = vadd.xlane.f32.xlu0 %v1054
    %v1056 = vpop.xlane.xlu0 %1055
    %v1057 = vsel %vm918, %v1012, 0.0
    %1058 = vadd.xlane.f32.xlu0 %v1057
    %v1059 = vpop.xlane.xlu0 %1058
    %v1060 = vsel %vm918, %v1014, 0.0
    %1061 = vadd.xlane.f32.xlu0 %v1060
    %v1062 = vpop.xlane.xlu0 %1061
    %1063 = vrot.lane.b32.xlu0 %v513, 64
    %v1064 = vpop.permute.xlu0 %1063
    %1065 = vrot.lane.b32.xlu0 %v518, 64
    %v1066 = vpop.permute.xlu0 %1065
    %1067 = vrot.lane.b32.xlu0 %v523, 64
    %v1068 = vpop.permute.xlu0 %1067
    %1069 = vrot.lane.b32.xlu0 %v528, 64
    %v1070 = vpop.permute.xlu0 %1069
    %1071 = vrot.lane.b32.xlu0 %v533, 64
    %v1072 = vpop.permute.xlu0 %1071
    %1073 = vrot.lane.b32.xlu0 %v538, 64
    %v1074 = vpop.permute.xlu0 %1073
    %1075 = vrot.lane.b32.xlu0 %v543, 64
    %v1076 = vpop.permute.xlu0 %1075
    %1077 = vrot.lane.b32.xlu0 %v548, 64
    %v1078 = vpop.permute.xlu0 %1077
    %v1088 = vsel %vm918, %v984, 0
    %v1091 = vsel %vm918, %v986, 0
    %v1094 = vsel %vm918, %v988, 0
    %v1097 = vsel %vm918, %v990, 0
    %v1100 = vsel %vm918, %v992, 0
    %v1103 = vsel %vm918, %v994, 0
    %v1106 = vsel %vm918, %v996, 0
    %v1109 = vsel %vm918, %v998, 0
    %1111 = vmatprep.subr.mxu0 0.0
    %1112 = vmatpush1.msra.mxu0 %v1064
    %1113 = vmatprep.subr.mxu0 0.0
    %1114 = vmatpush1.msra.mxu0 %v1066
    %1115 = vmatprep.subr.mxu0 0.0
    %1116 = vmatpush1.msra.mxu0 %v1068
    %1117 = vmatprep.subr.mxu0 0.0
    %1118 = vmatpush1.msra.mxu0 %v1070
    %1119 = vmatprep.subr.mxu0 0.0
    %1120 = vmatpush1.msra.mxu0 %v1072
    %1121 = vmatprep.subr.mxu0 0.0
    %1122 = vmatpush1.msra.mxu0 %v1074
    %1123 = vmatprep.subr.mxu0 0.0
    %1124 = vmatpush1.msra.mxu0 %v1076
    %1125 = vmatprep.subr.mxu0 0.0
    %1126 = vmatpush1.msra.mxu0 %v1078
    %1127 = vmatprep.subr.mxu0 0.0
    %1128 = vmatpush1.msra.mxu0 0.0
    %1129 = vmatprep.subr.mxu0 0.0
    %1130 = vmatpush1.msra.mxu0 0.0
    %1131 = vmatprep.subr.mxu0 0.0
    %1132 = vmatpush1.msra.mxu0 0.0
    %1133 = vmatprep.subr.mxu0 0.0
    %1134 = vmatpush1.msra.mxu0 0.0
    %1135 = vmatprep.subr.mxu0 0.0
    %1136 = vmatpush1.msra.mxu0 0.0
    %1137 = vmatprep.subr.mxu0 0.0
    %1138 = vmatpush1.msra.mxu0 0.0
    %1139 = vmatprep.subr.mxu0 0.0
    %1140 = vmatpush1.msra.mxu0 0.0
    %1141 = vmatprep.subr.mxu0 0.0
    %1142 = vmatpush1.msra.mxu0 0.0
    %1143 = vmatprep.subr.mxu0 0.0
    %1144 = vmatpush1.msra.mxu0 0.0
    %1145 = vmatprep.subr.mxu0 0.0
    %1146 = vmatpush1.msra.mxu0 0.0
    %1147 = vmatprep.subr.mxu0 0.0
    %1148 = vmatpush1.msra.mxu0 0.0
    %1149 = vmatprep.subr.mxu0 0.0
    %1150 = vmatpush1.msra.mxu0 0.0
    %1151 = vmatprep.subr.mxu0 0.0
    %1152 = vmatpush1.msra.mxu0 0.0
    %1153 = vmatprep.subr.mxu0 0.0
    %1154 = vmatpush1.msra.mxu0 0.0
    %1155 = vmatprep.subr.mxu0 0.0
    %1156 = vmatpush1.msra.mxu0 0.0
    %1157 = vmatprep.subr.mxu0 0.0
    %1158 = vmatpush1.msra.mxu0 0.0
    %1159 = vmatprep.subr.mxu0 0.0
    %1160 = vmatpush1.msra.mxu0 0.0
    %1161 = vmatprep.subr.mxu0 0.0
    %1162 = vmatpush1.msra.mxu0 0.0
    %1163 = vmatprep.subr.mxu0 0.0
    %1164 = vmatpush1.msra.mxu0 0.0
    %1165 = vmatprep.subr.mxu0 0.0
    %1166 = vmatpush1.msra.mxu0 0.0
    %1167 = vmatprep.subr.mxu0 0.0
    %1168 = vmatpush1.msra.mxu0 0.0
    %1169 = vmatprep.subr.mxu0 0.0
    %1170 = vmatpush1.msra.mxu0 0.0
    %1171 = vmatprep.subr.mxu0 0.0
    %1172 = vmatpush1.msra.mxu0 0.0
    %1173 = vmatprep.subr.mxu0 0.0
    %1174 = vmatpush1.msra.mxu0 0.0
    %1175 = vmatprep.mubr.f32.mxu0 0.0
    %1176 = vmatmul.mubr.f32.gmra.mrb[0].mxu0 %v1088
    %v1177 = vpop.f32.mrb[0].mxu0
    %v1178 = vadd.f32 0.0, %v1177
    %v1179 = vpop.f32.mrb[0].mxu0
    %1180 = vmatprep.mubr.f32.mxu0 0.0
    %1181 = vmatmul.mubr.f32.gmra.mrb[0].mxu0 %v1091
    %v1182 = vpop.f32.mrb[0].mxu0
    %v1183 = vadd.f32 0.0, %v1182
    %v1184 = vpop.f32.mrb[0].mxu0
    %1185 = vmatprep.mubr.f32.mxu0 0.0
    %1186 = vmatmul.mubr.f32.gmra.mrb[0].mxu0 %v1094
    %v1187 = vpop.f32.mrb[0].mxu0
    %v1188 = vadd.f32 0.0, %v1187
    %v1189 = vpop.f32.mrb[0].mxu0
    %1190 = vmatprep.mubr.f32.mxu0 0.0
    %1191 = vmatmul.mubr.f32.gmra.mrb[0].mxu0 %v1097
    %v1192 = vpop.f32.mrb[0].mxu0
    %v1193 = vadd.f32 0.0, %v1192
    %v1194 = vpop.f32.mrb[0].mxu0
    %1195 = vmatprep.mubr.f32.mxu0 0.0
    %1196 = vmatmul.mubr.f32.gmra.mrb[0].mxu0 %v1100
    %v1197 = vpop.f32.mrb[0].mxu0
    %v1198 = vadd.f32 0.0, %v1197
    %v1199 = vpop.f32.mrb[0].mxu0
    %1200 = vmatprep.mubr.f32.mxu0 0.0
    %1201 = vmatmul.mubr.f32.gmra.mrb[0].mxu0 %v1103
    %v1202 = vpop.f32.mrb[0].mxu0
    %v1203 = vadd.f32 0.0, %v1202
    %v1204 = vpop.f32.mrb[0].mxu0
    %1205 = vmatprep.mubr.f32.mxu0 0.0
    %1206 = vmatmul.mubr.f32.gmra.mrb[0].mxu0 %v1106
    %v1207 = vpop.f32.mrb[0].mxu0
    %v1208 = vadd.f32 0.0, %v1207
    %v1209 = vpop.f32.mrb[0].mxu0
    %1210 = vmatprep.mubr.f32.mxu0 0.0
    %1211 = vmatmul.mubr.f32.gmra.mrb[0].mxu0 %v1109
    %v1212 = vpop.f32.mrb[0].mxu0
    %v1213 = vadd.f32 0.0, %v1212
    %v1214 = vpop.f32.mrb[0].mxu0
    %1215 = vdwg.mxu0
    %1216 = vrot.lane.b32.xlu0 %v553, 64
    %v1217 = vpop.permute.xlu0 %1216
    %1218 = vrot.lane.b32.xlu0 %v558, 64
    %v1219 = vpop.permute.xlu0 %1218
    %1220 = vrot.lane.b32.xlu0 %v563, 64
    %v1221 = vpop.permute.xlu0 %1220
    %1222 = vrot.lane.b32.xlu0 %v568, 64
    %v1223 = vpop.permute.xlu0 %1222
    %1224 = vrot.lane.b32.xlu0 %v573, 64
    %v1225 = vpop.permute.xlu0 %1224
    %1226 = vrot.lane.b32.xlu0 %v578, 64
    %v1227 = vpop.permute.xlu0 %1226
    %1228 = vrot.lane.b32.xlu0 %v583, 64
    %v1229 = vpop.permute.xlu0 %1228
    %1230 = vrot.lane.b32.xlu0 %v588, 64
    %v1231 = vpop.permute.xlu0 %1230
    %v1241 = vsel %vm918, %v1000, 0
    %v1244 = vsel %vm918, %v1002, 0
    %v1247 = vsel %vm918, %v1004, 0
    %v1250 = vsel %vm918, %v1006, 0
    %v1253 = vsel %vm918, %v1008, 0
    %v1256 = vsel %vm918, %v1010, 0
    %v1259 = vsel %vm918, %v1012, 0
    %v1262 = vsel %vm918, %v1014, 0
    %1264 = vmatprep.subr.mxu0 0.0
    %1265 = vmatpush1.msra.mxu0 %v1217
    %1266 = vmatprep.subr.mxu0 0.0
    %1267 = vmatpush1.msra.mxu0 %v1219
    %1268 = vmatprep.subr.mxu0 0.0
    %1269 = vmatpush1.msra.mxu0 %v1221
    %1270 = vmatprep.subr.mxu0 0.0
    %1271 = vmatpush1.msra.mxu0 %v1223
    %1272 = vmatprep.subr.mxu0 0.0
    %1273 = vmatpush1.msra.mxu0 %v1225
    %1274 = vmatprep.subr.mxu0 0.0
    %1275 = vmatpush1.msra.mxu0 %v1227
    %1276 = vmatprep.subr.mxu0 0.0
    %1277 = vmatpush1.msra.mxu0 %v1229
    %1278 = vmatprep.subr.mxu0 0.0
    %1279 = vmatpush1.msra.mxu0 %v1231
    %1280 = vmatprep.subr.mxu0 0.0
    %1281 = vmatpush1.msra.mxu0 0.0
    %1282 = vmatprep.subr.mxu0 0.0
    %1283 = vmatpush1.msra.mxu0 0.0
    %1284 = vmatprep.subr.mxu0 0.0
    %1285 = vmatpush1.msra.mxu0 0.0
    %1286 = vmatprep.subr.mxu0 0.0
    %1287 = vmatpush1.msra.mxu0 0.0
    %1288 = vmatprep.subr.mxu0 0.0
    %1289 = vmatpush1.msra.mxu0 0.0
    %1290 = vmatprep.subr.mxu0 0.0
    %1291 = vmatpush1.msra.mxu0 0.0
    %1292 = vmatprep.subr.mxu0 0.0
    %1293 = vmatpush1.msra.mxu0 0.0
    %1294 = vmatprep.subr.mxu0 0.0
    %1295 = vmatpush1.msra.mxu0 0.0
    %1296 = vmatprep.subr.mxu0 0.0
    %1297 = vmatpush1.msra.mxu0 0.0
    %1298 = vmatprep.subr.mxu0 0.0
    %1299 = vmatpush1.msra.mxu0 0.0
    %1300 = vmatprep.subr.mxu0 0.0
    %1301 = vmatpush1.msra.mxu0 0.0
    %1302 = vmatprep.subr.mxu0 0.0
    %1303 = vmatpush1.msra.mxu0 0.0
    %1304 = vmatprep.subr.mxu0 0.0
    %1305 = vmatpush1.msra.mxu0 0.0
    %1306 = vmatprep.subr.mxu0 0.0
    %1307 = vmatpush1.msra.mxu0 0.0
    %1308 = vmatprep.subr.mxu0 0.0
    %1309 = vmatpush1.msra.mxu0 0.0
    %1310 = vmatprep.subr.mxu0 0.0
    %1311 = vmatpush1.msra.mxu0 0.0
    %1312 = vmatprep.subr.mxu0 0.0
    %1313 = vmatpush1.msra.mxu0 0.0
    %1314 = vmatprep.subr.mxu0 0.0
    %1315 = vmatpush1.msra.mxu0 0.0
    %1316 = vmatprep.subr.mxu0 0.0
    %1317 = vmatpush1.msra.mxu0 0.0
    %1318 = vmatprep.subr.mxu0 0.0
    %1319 = vmatpush1.msra.mxu0 0.0
    %1320 = vmatprep.subr.mxu0 0.0
    %1321 = vmatpush1.msra.mxu0 0.0
    %1322 = vmatprep.subr.mxu0 0.0
    %1323 = vmatpush1.msra.mxu0 0.0
    %1324 = vmatprep.subr.mxu0 0.0
    %1325 = vmatpush1.msra.mxu0 0.0
    %1326 = vmatprep.subr.mxu0 0.0
    %1327 = vmatpush1.msra.mxu0 0.0
    %1328 = vmatprep.mubr.f32.mxu0 0.0
    %1329 = vmatmul.mubr.f32.gmra.mrb[0].mxu0 %v1241
    %v1330 = vpop.f32.mrb[0].mxu0
    %v1331 = vadd.f32 0.0, %v1330
    %v1332 = vpop.f32.mrb[0].mxu0
    %1333 = vmatprep.mubr.f32.mxu0 0.0
    %1334 = vmatmul.mubr.f32.gmra.mrb[0].mxu0 %v1244
    %v1335 = vpop.f32.mrb[0].mxu0
    %v1336 = vadd.f32 0.0, %v1335
    %v1337 = vpop.f32.mrb[0].mxu0
    %1338 = vmatprep.mubr.f32.mxu0 0.0
    %1339 = vmatmul.mubr.f32.gmra.mrb[0].mxu0 %v1247
    %v1340 = vpop.f32.mrb[0].mxu0
    %v1341 = vadd.f32 0.0, %v1340
    %v1342 = vpop.f32.mrb[0].mxu0
    %1343 = vmatprep.mubr.f32.mxu0 0.0
    %1344 = vmatmul.mubr.f32.gmra.mrb[0].mxu0 %v1250
    %v1345 = vpop.f32.mrb[0].mxu0
    %v1346 = vadd.f32 0.0, %v1345
    %v1347 = vpop.f32.mrb[0].mxu0
    %1348 = vmatprep.mubr.f32.mxu0 0.0
    %1349 = vmatmul.mubr.f32.gmra.mrb[0].mxu0 %v1253
    %v1350 = vpop.f32.mrb[0].mxu0
    %v1351 = vadd.f32 0.0, %v1350
    %v1352 = vpop.f32.mrb[0].mxu0
    %1353 = vmatprep.mubr.f32.mxu0 0.0
    %1354 = vmatmul.mubr.f32.gmra.mrb[0].mxu0 %v1256
    %v1355 = vpop.f32.mrb[0].mxu0
    %v1356 = vadd.f32 0.0, %v1355
    %v1357 = vpop.f32.mrb[0].mxu0
    %1358 = vmatprep.mubr.f32.mxu0 0.0
    %1359 = vmatmul.mubr.f32.gmra.mrb[0].mxu0 %v1259
    %v1360 = vpop.f32.mrb[0].mxu0
    %v1361 = vadd.f32 0.0, %v1360
    %v1362 = vpop.f32.mrb[0].mxu0
    %1363 = vmatprep.mubr.f32.mxu0 0.0
    %1364 = vmatmul.mubr.f32.gmra.mrb[0].mxu0 %v1262
    %v1365 = vpop.f32.mrb[0].mxu0
    %v1366 = vadd.f32 0.0, %v1365
    %v1367 = vpop.f32.mrb[0].mxu0
    %1368 = vdwg.mxu0
    %v1369 = vrcp.pop %v1017
    %v1370 = vrcp.pop %v1020
    %v1371 = vrcp.pop %v1023
    %v1372 = vrcp.pop %v1026
    %v1373 = vrcp.pop %v1029
    %v1374 = vrcp.pop %v1032
    %v1375 = vrcp.pop %v1035
    %v1376 = vrcp.pop %v1038
    %v1377 = vrcp.pop %v1041
    %v1378 = vrcp.pop %v1044
    %v1379 = vrcp.pop %v1047
    %v1380 = vrcp.pop %v1050
    %v1381 = vrcp.pop %v1053
    %v1382 = vrcp.pop %v1056
    %v1383 = vrcp.pop %v1059
    %v1384 = vrcp.pop %v1062
    %v1385 = vmul.f32 %v1017, %v1369
    %v1386 = vmul.f32 %v1020, %v1370
    %v1387 = vmul.f32 %v1023, %v1371
    %v1388 = vmul.f32 %v1026, %v1372
    %v1389 = vmul.f32 %v1029, %v1373
    %v1390 = vmul.f32 %v1032, %v1374
    %v1391 = vmul.f32 %v1035, %v1375
    %v1392 = vmul.f32 %v1038, %v1376
    %v1393 = vmul.f32 %v1041, %v1377
    %v1394 = vmul.f32 %v1044, %v1378
    %v1395 = vmul.f32 %v1047, %v1379
    %v1396 = vmul.f32 %v1050, %v1380
    %v1397 = vmul.f32 %v1053, %v1381
    %v1398 = vmul.f32 %v1056, %v1382
    %v1399 = vmul.f32 %v1059, %v1383
    %v1400 = vmul.f32 %v1062, %v1384
    %v1401 = vsub.f32 2.0, %v1385
    %v1402 = vsub.f32 2.0, %v1386
    %v1403 = vsub.f32 2.0, %v1387
    %v1404 = vsub.f32 2.0, %v1388
    %v1405 = vsub.f32 2.0, %v1389
    %v1406 = vsub.f32 2.0, %v1390
    %v1407 = vsub.f32 2.0, %v1391
    %v1408 = vsub.f32 2.0, %v1392
    %v1409 = vsub.f32 2.0, %v1393
    %v1410 = vsub.f32 2.0, %v1394
    %v1411 = vsub.f32 2.0, %v1395
    %v1412 = vsub.f32 2.0, %v1396
    %v1413 = vsub.f32 2.0, %v1397
    %v1414 = vsub.f32 2.0, %v1398
    %v1415 = vsub.f32 2.0, %v1399
    %v1416 = vsub.f32 2.0, %v1400
    %v1417 = vmul.f32 %v1369, %v1401
    %v1418 = vmul.f32 %v1370, %v1402
    %v1419 = vmul.f32 %v1371, %v1403
    %v1420 = vmul.f32 %v1372, %v1404
    %v1421 = vmul.f32 %v1373, %v1405
    %v1422 = vmul.f32 %v1374, %v1406
    %v1423 = vmul.f32 %v1375, %v1407
    %v1424 = vmul.f32 %v1376, %v1408
    %v1425 = vmul.f32 %v1377, %v1409
    %v1426 = vmul.f32 %v1378, %v1410
    %v1427 = vmul.f32 %v1379, %v1411
    %v1428 = vmul.f32 %v1380, %v1412
    %v1429 = vmul.f32 %v1381, %v1413
    %v1430 = vmul.f32 %v1382, %v1414
    %v1431 = vmul.f32 %v1383, %v1415
    %v1432 = vmul.f32 %v1384, %v1416
    %v1433 = vmul.f32 %v1178, %v1417
    %v1434 = vmul.f32 %v1183, %v1418
    %v1435 = vmul.f32 %v1188, %v1419
    %v1436 = vmul.f32 %v1193, %v1420
    %v1437 = vmul.f32 %v1198, %v1421
    %v1438 = vmul.f32 %v1203, %v1422
    %v1439 = vmul.f32 %v1208, %v1423
    %v1440 = vmul.f32 %v1213, %v1424
    %v1441 = vmul.f32 %v1331, %v1425
    %v1442 = vmul.f32 %v1336, %v1426
    %v1443 = vmul.f32 %v1341, %v1427
    %v1444 = vmul.f32 %v1346, %v1428
    %v1445 = vmul.f32 %v1351, %v1429
    %v1446 = vmul.f32 %v1356, %v1430
    %v1447 = vmul.f32 %v1361, %v1431
    %v1448 = vmul.f32 %v1366, %v1432
    %1449 = vrot.lane.b32.xlu0 %v513, 120
    %v1450 = vpop.permute.xlu0 %1449
    %1451 = vrot.lane.b32.xlu0 %v518, 120
    %v1452 = vpop.permute.xlu0 %1451
    %1453 = vrot.lane.b32.xlu0 %v523, 120
    %v1454 = vpop.permute.xlu0 %1453
    %1455 = vrot.lane.b32.xlu0 %v528, 120
    %v1456 = vpop.permute.xlu0 %1455
    %1457 = vrot.lane.b32.xlu0 %v533, 120
    %v1458 = vpop.permute.xlu0 %1457
    %1459 = vrot.lane.b32.xlu0 %v538, 120
    %v1460 = vpop.permute.xlu0 %1459
    %1461 = vrot.lane.b32.xlu0 %v543, 120
    %v1462 = vpop.permute.xlu0 %1461
    %1463 = vrot.lane.b32.xlu0 %v548, 120
    %v1464 = vpop.permute.xlu0 %1463
    %1465 = vrot.lane.b32.xlu0 %v513, 88
    %v1466 = vpop.permute.xlu0 %1465
    %1467 = vrot.lane.b32.xlu0 %v518, 88
    %v1468 = vpop.permute.xlu0 %1467
    %1469 = vrot.lane.b32.xlu0 %v523, 88
    %v1470 = vpop.permute.xlu0 %1469
    %1471 = vrot.lane.b32.xlu0 %v528, 88
    %v1472 = vpop.permute.xlu0 %1471
    %1473 = vrot.lane.b32.xlu0 %v533, 88
    %v1474 = vpop.permute.xlu0 %1473
    %1475 = vrot.lane.b32.xlu0 %v538, 88
    %v1476 = vpop.permute.xlu0 %1475
    %1477 = vrot.lane.b32.xlu0 %v543, 88
    %v1478 = vpop.permute.xlu0 %1477
    %1479 = vrot.lane.b32.xlu0 %v548, 88
    %v1480 = vpop.permute.xlu0 %1479
    %v1481 = vsel %vm619, %v1450, 0
    %v1483 = vsel %vm619, %v1452, 0
    %v1485 = vsel %vm619, %v1454, 0
    %v1487 = vsel %vm619, %v1456, 0
    %v1489 = vsel %vm619, %v1458, 0
    %v1491 = vsel %vm619, %v1460, 0
    %v1493 = vsel %vm619, %v1462, 0
    %v1495 = vsel %vm619, %v1464, 0
    %v1497 = vsel %vm619, %v1466, 0
    %v1499 = vsel %vm619, %v1468, 0
    %v1501 = vsel %vm619, %v1470, 0
    %v1503 = vsel %vm619, %v1472, 0
    %v1505 = vsel %vm619, %v1474, 0
    %v1507 = vsel %vm619, %v1476, 0
    %v1509 = vsel %vm619, %v1478, 0
    %v1511 = vsel %vm619, %v1480, 0
    %1513 = vmatprep.subr.mxu0 0.0
    %1514 = vmatpush1.xpose.msra.mxu0 %v1497
    %1515 = vmatprep.subr.mxu0 0.0
    %1516 = vmatpush1.xpose.msra.mxu0 %v1499
    %1517 = vmatprep.subr.mxu0 0.0
    %1518 = vmatpush1.xpose.msra.mxu0 %v1501
    %1519 = vmatprep.subr.mxu0 0.0
    %1520 = vmatpush1.xpose.msra.mxu0 %v1503
    %1521 = vmatprep.subr.mxu0 0.0
    %1522 = vmatpush1.xpose.msra.mxu0 %v1505
    %1523 = vmatprep.subr.mxu0 0.0
    %1524 = vmatpush1.xpose.msra.mxu0 %v1507
    %1525 = vmatprep.subr.mxu0 0.0
    %1526 = vmatpush1.xpose.msra.mxu0 %v1509
    %1527 = vmatprep.subr.mxu0 0.0
    %1528 = vmatpush1.xpose.msra.mxu0 %v1511
    %1529 = vmatprep.subr.mxu0 0.0
    %1530 = vmatpush1.xpose.msra.mxu0 0.0
    %1531 = vmatprep.subr.mxu0 0.0
    %1532 = vmatpush1.xpose.msra.mxu0 0.0
    %1533 = vmatprep.subr.mxu0 0.0
    %1534 = vmatpush1.xpose.msra.mxu0 0.0
    %1535 = vmatprep.subr.mxu0 0.0
    %1536 = vmatpush1.xpose.msra.mxu0 0.0
    %1537 = vmatprep.subr.mxu0 0.0
    %1538 = vmatpush1.xpose.msra.mxu0 0.0
    %1539 = vmatprep.subr.mxu0 0.0
    %1540 = vmatpush1.xpose.msra.mxu0 0.0
    %1541 = vmatprep.subr.mxu0 0.0
    %1542 = vmatpush1.xpose.msra.mxu0 0.0
    %1543 = vmatprep.subr.mxu0 0.0
    %1544 = vmatpush1.xpose.msra.mxu0 0.0
    %1545 = vmatprep.subr.mxu0 0.0
    %1546 = vmatpush1.xpose.msra.mxu0 0.0
    %1547 = vmatprep.subr.mxu0 0.0
    %1548 = vmatpush1.xpose.msra.mxu0 0.0
    %1549 = vmatprep.subr.mxu0 0.0
    %1550 = vmatpush1.xpose.msra.mxu0 0.0
    %1551 = vmatprep.subr.mxu0 0.0
    %1552 = vmatpush1.xpose.msra.mxu0 0.0
    %1553 = vmatprep.subr.mxu0 0.0
    %1554 = vmatpush1.xpose.msra.mxu0 0.0
    %1555 = vmatprep.subr.mxu0 0.0
    %1556 = vmatpush1.xpose.msra.mxu0 0.0
    %1557 = vmatprep.subr.mxu0 0.0
    %1558 = vmatpush1.xpose.msra.mxu0 0.0
    %1559 = vmatprep.subr.mxu0 0.0
    %1560 = vmatpush1.xpose.msra.mxu0 0.0
    %1561 = vmatprep.subr.mxu0 0.0
    %1562 = vmatpush1.xpose.msra.mxu0 0.0
    %1563 = vmatprep.subr.mxu0 0.0
    %1564 = vmatpush1.xpose.msra.mxu0 0.0
    %1565 = vmatprep.subr.mxu0 0.0
    %1566 = vmatpush1.xpose.msra.mxu0 0.0
    %1567 = vmatprep.subr.mxu0 0.0
    %1568 = vmatpush1.xpose.msra.mxu0 0.0
    %1569 = vmatprep.subr.mxu0 0.0
    %1570 = vmatpush1.xpose.msra.mxu0 0.0
    %1571 = vmatprep.subr.mxu0 0.0
    %1572 = vmatpush1.xpose.msra.mxu0 0.0
    %1573 = vmatprep.subr.mxu0 0.0
    %1574 = vmatpush1.xpose.msra.mxu0 0.0
    %1575 = vmatprep.subr.mxu0 0.0
    %1576 = vmatpush1.xpose.msra.mxu0 0.0
    %1577 = vmatprep.mubr.f32.mxu0 0.0
    %1578 = vmatmul.mubr.f32.gmra.mrb[0].mxu0 %v1481
    %v1579 = vpop.f32.mrb[0].mxu0
    %v1580 = vadd.f32 0.0, %v1579
    %v1581 = vpop.f32.mrb[0].mxu0
    %1582 = vmatprep.mubr.f32.mxu0 0.0
    %1583 = vmatmul.mubr.f32.gmra.mrb[0].mxu0 %v1483
    %v1584 = vpop.f32.mrb[0].mxu0
    %v1585 = vadd.f32 0.0, %v1584
    %v1586 = vpop.f32.mrb[0].mxu0
    %1587 = vmatprep.mubr.f32.mxu0 0.0
    %1588 = vmatmul.mubr.f32.gmra.mrb[0].mxu0 %v1485
    %v1589 = vpop.f32.mrb[0].mxu0
    %v1590 = vadd.f32 0.0, %v1589
    %v1591 = vpop.f32.mrb[0].mxu0
    %1592 = vmatprep.mubr.f32.mxu0 0.0
    %1593 = vmatmul.mubr.f32.gmra.mrb[0].mxu0 %v1487
    %v1594 = vpop.f32.mrb[0].mxu0
    %v1595 = vadd.f32 0.0, %v1594
    %v1596 = vpop.f32.mrb[0].mxu0
    %1597 = vmatprep.mubr.f32.mxu0 0.0
    %1598 = vmatmul.mubr.f32.gmra.mrb[0].mxu0 %v1489
    %v1599 = vpop.f32.mrb[0].mxu0
    %v1600 = vadd.f32 0.0, %v1599
    %v1601 = vpop.f32.mrb[0].mxu0
    %1602 = vmatprep.mubr.f32.mxu0 0.0
    %1603 = vmatmul.mubr.f32.gmra.mrb[0].mxu0 %v1491
    %v1604 = vpop.f32.mrb[0].mxu0
    %v1605 = vadd.f32 0.0, %v1604
    %v1606 = vpop.f32.mrb[0].mxu0
    %1607 = vmatprep.mubr.f32.mxu0 0.0
    %1608 = vmatmul.mubr.f32.gmra.mrb[0].mxu0 %v1493
    %v1609 = vpop.f32.mrb[0].mxu0
    %v1610 = vadd.f32 0.0, %v1609
    %v1611 = vpop.f32.mrb[0].mxu0
    %1612 = vmatprep.mubr.f32.mxu0 0.0
    %1613 = vmatmul.mubr.f32.gmra.mrb[0].mxu0 %v1495
    %v1614 = vpop.f32.mrb[0].mxu0
    %v1615 = vadd.f32 0.0, %v1614
    %v1616 = vpop.f32.mrb[0].mxu0
    %1617 = vdwg.mxu0
    %1618 = vrot.lane.b32.xlu0 %v553, 120
    %v1619 = vpop.permute.xlu0 %1618
    %1620 = vrot.lane.b32.xlu0 %v558, 120
    %v1621 = vpop.permute.xlu0 %1620
    %1622 = vrot.lane.b32.xlu0 %v563, 120
    %v1623 = vpop.permute.xlu0 %1622
    %1624 = vrot.lane.b32.xlu0 %v568, 120
    %v1625 = vpop.permute.xlu0 %1624
    %1626 = vrot.lane.b32.xlu0 %v573, 120
    %v1627 = vpop.permute.xlu0 %1626
    %1628 = vrot.lane.b32.xlu0 %v578, 120
    %v1629 = vpop.permute.xlu0 %1628
    %1630 = vrot.lane.b32.xlu0 %v583, 120
    %v1631 = vpop.permute.xlu0 %1630
    %1632 = vrot.lane.b32.xlu0 %v588, 120
    %v1633 = vpop.permute.xlu0 %1632
    %1634 = vrot.lane.b32.xlu0 %v553, 88
    %v1635 = vpop.permute.xlu0 %1634
    %1636 = vrot.lane.b32.xlu0 %v558, 88
    %v1637 = vpop.permute.xlu0 %1636
    %1638 = vrot.lane.b32.xlu0 %v563, 88
    %v1639 = vpop.permute.xlu0 %1638
    %1640 = vrot.lane.b32.xlu0 %v568, 88
    %v1641 = vpop.permute.xlu0 %1640
    %1642 = vrot.lane.b32.xlu0 %v573, 88
    %v1643 = vpop.permute.xlu0 %1642
    %1644 = vrot.lane.b32.xlu0 %v578, 88
    %v1645 = vpop.permute.xlu0 %1644
    %1646 = vrot.lane.b32.xlu0 %v583, 88
    %v1647 = vpop.permute.xlu0 %1646
    %1648 = vrot.lane.b32.xlu0 %v588, 88
    %v1649 = vpop.permute.xlu0 %1648
    %v1650 = vsel %vm619, %v1619, 0
    %v1652 = vsel %vm619, %v1621, 0
    %v1654 = vsel %vm619, %v1623, 0
    %v1656 = vsel %vm619, %v1625, 0
    %v1658 = vsel %vm619, %v1627, 0
    %v1660 = vsel %vm619, %v1629, 0
    %v1662 = vsel %vm619, %v1631, 0
    %v1664 = vsel %vm619, %v1633, 0
    %v1666 = vsel %vm619, %v1635, 0
    %v1668 = vsel %vm619, %v1637, 0
    %v1670 = vsel %vm619, %v1639, 0
    %v1672 = vsel %vm619, %v1641, 0
    %v1674 = vsel %vm619, %v1643, 0
    %v1676 = vsel %vm619, %v1645, 0
    %v1678 = vsel %vm619, %v1647, 0
    %v1680 = vsel %vm619, %v1649, 0
    %1682 = vmatprep.subr.mxu0 0.0
    %1683 = vmatpush1.xpose.msra.mxu0 %v1666
    %1684 = vmatprep.subr.mxu0 0.0
    %1685 = vmatpush1.xpose.msra.mxu0 %v1668
    %1686 = vmatprep.subr.mxu0 0.0
    %1687 = vmatpush1.xpose.msra.mxu0 %v1670
    %1688 = vmatprep.subr.mxu0 0.0
    %1689 = vmatpush1.xpose.msra.mxu0 %v1672
    %1690 = vmatprep.subr.mxu0 0.0
    %1691 = vmatpush1.xpose.msra.mxu0 %v1674
    %1692 = vmatprep.subr.mxu0 0.0
    %1693 = vmatpush1.xpose.msra.mxu0 %v1676
    %1694 = vmatprep.subr.mxu0 0.0
    %1695 = vmatpush1.xpose.msra.mxu0 %v1678
    %1696 = vmatprep.subr.mxu0 0.0
    %1697 = vmatpush1.xpose.msra.mxu0 %v1680
    %1698 = vmatprep.subr.mxu0 0.0
    %1699 = vmatpush1.xpose.msra.mxu0 0.0
    %1700 = vmatprep.subr.mxu0 0.0
    %1701 = vmatpush1.xpose.msra.mxu0 0.0
    %1702 = vmatprep.subr.mxu0 0.0
    %1703 = vmatpush1.xpose.msra.mxu0 0.0
    %1704 = vmatprep.subr.mxu0 0.0
    %1705 = vmatpush1.xpose.msra.mxu0 0.0
    %1706 = vmatprep.subr.mxu0 0.0
    %1707 = vmatpush1.xpose.msra.mxu0 0.0
    %1708 = vmatprep.subr.mxu0 0.0
    %1709 = vmatpush1.xpose.msra.mxu0 0.0
    %1710 = vmatprep.subr.mxu0 0.0
    %1711 = vmatpush1.xpose.msra.mxu0 0.0
    %1712 = vmatprep.subr.mxu0 0.0
    %1713 = vmatpush1.xpose.msra.mxu0 0.0
    %1714 = vmatprep.subr.mxu0 0.0
    %1715 = vmatpush1.xpose.msra.mxu0 0.0
    %1716 = vmatprep.subr.mxu0 0.0
    %1717 = vmatpush1.xpose.msra.mxu0 0.0
    %1718 = vmatprep.subr.mxu0 0.0
    %1719 = vmatpush1.xpose.msra.mxu0 0.0
    %1720 = vmatprep.subr.mxu0 0.0
    %1721 = vmatpush1.xpose.msra.mxu0 0.0
    %1722 = vmatprep.subr.mxu0 0.0
    %1723 = vmatpush1.xpose.msra.mxu0 0.0
    %1724 = vmatprep.subr.mxu0 0.0
    %1725 = vmatpush1.xpose.msra.mxu0 0.0
    %1726 = vmatprep.subr.mxu0 0.0
    %1727 = vmatpush1.xpose.msra.mxu0 0.0
    %1728 = vmatprep.subr.mxu0 0.0
    %1729 = vmatpush1.xpose.msra.mxu0 0.0
    %1730 = vmatprep.subr.mxu0 0.0
    %1731 = vmatpush1.xpose.msra.mxu0 0.0
    %1732 = vmatprep.subr.mxu0 0.0
    %1733 = vmatpush1.xpose.msra.mxu0 0.0
    %1734 = vmatprep.subr.mxu0 0.0
    %1735 = vmatpush1.xpose.msra.mxu0 0.0
    %1736 = vmatprep.subr.mxu0 0.0
    %1737 = vmatpush1.xpose.msra.mxu0 0.0
    %1738 = vmatprep.subr.mxu0 0.0
    %1739 = vmatpush1.xpose.msra.mxu0 0.0
    %1740 = vmatprep.subr.mxu0 0.0
    %1741 = vmatpush1.xpose.msra.mxu0 0.0
    %1742 = vmatprep.subr.mxu0 0.0
    %1743 = vmatpush1.xpose.msra.mxu0 0.0
    %1744 = vmatprep.subr.mxu0 0.0
    %1745 = vmatpush1.xpose.msra.mxu0 0.0
    %1746 = vmatprep.mubr.f32.mxu0 0.0
    %1747 = vmatmul.mubr.f32.gmra.mrb[0].mxu0 %v1650
    %v1748 = vpop.f32.mrb[0].mxu0
    %v1749 = vadd.f32 0.0, %v1748
    %v1750 = vpop.f32.mrb[0].mxu0
    %1751 = vmatprep.mubr.f32.mxu0 0.0
    %1752 = vmatmul.mubr.f32.gmra.mrb[0].mxu0 %v1652
    %v1753 = vpop.f32.mrb[0].mxu0
    %v1754 = vadd.f32 0.0, %v1753
    %v1755 = vpop.f32.mrb[0].mxu0
    %1756 = vmatprep.mubr.f32.mxu0 0.0
    %1757 = vmatmul.mubr.f32.gmra.mrb[0].mxu0 %v1654
    %v1758 = vpop.f32.mrb[0].mxu0
    %v1759 = vadd.f32 0.0, %v1758
    %v1760 = vpop.f32.mrb[0].mxu0
    %1761 = vmatprep.mubr.f32.mxu0 0.0
    %1762 = vmatmul.mubr.f32.gmra.mrb[0].mxu0 %v1656
    %v1763 = vpop.f32.mrb[0].mxu0
    %v1764 = vadd.f32 0.0, %v1763
    %v1765 = vpop.f32.mrb[0].mxu0
    %1766 = vmatprep.mubr.f32.mxu0 0.0
    %1767 = vmatmul.mubr.f32.gmra.mrb[0].mxu0 %v1658
    %v1768 = vpop.f32.mrb[0].mxu0
    %v1769 = vadd.f32 0.0, %v1768
    %v1770 = vpop.f32.mrb[0].mxu0
    %1771 = vmatprep.mubr.f32.mxu0 0.0
    %1772 = vmatmul.mubr.f32.gmra.mrb[0].mxu0 %v1660
    %v1773 = vpop.f32.mrb[0].mxu0
    %v1774 = vadd.f32 0.0, %v1773
    %v1775 = vpop.f32.mrb[0].mxu0
    %1776 = vmatprep.mubr.f32.mxu0 0.0
    %1777 = vmatmul.mubr.f32.gmra.mrb[0].mxu0 %v1662
    %v1778 = vpop.f32.mrb[0].mxu0
    %v1779 = vadd.f32 0.0, %v1778
    %v1780 = vpop.f32.mrb[0].mxu0
    %1781 = vmatprep.mubr.f32.mxu0 0.0
    %1782 = vmatmul.mubr.f32.gmra.mrb[0].mxu0 %v1664
    %v1783 = vpop.f32.mrb[0].mxu0
    %v1784 = vadd.f32 0.0, %v1783
    %v1785 = vpop.f32.mrb[0].mxu0
    %1786 = vdwg.mxu0
    %v1787 = vsel %vm918, %v1580, -inf
    %1788 = vmax.xlane.f32.xlu0 %v1787
    %v1789 = vpop.xlane.xlu0 %1788
    %v1790 = vsel %vm918, %v1585, -inf
    %1791 = vmax.xlane.f32.xlu0 %v1790
    %v1792 = vpop.xlane.xlu0 %1791
    %v1793 = vsel %vm918, %v1590, -inf
    %1794 = vmax.xlane.f32.xlu0 %v1793
    %v1795 = vpop.xlane.xlu0 %1794
    %v1796 = vsel %vm918, %v1595, -inf
    %1797 = vmax.xlane.f32.xlu0 %v1796
    %v1798 = vpop.xlane.xlu0 %1797
    %v1799 = vsel %vm918, %v1600, -inf
    %1800 = vmax.xlane.f32.xlu0 %v1799
    %v1801 = vpop.xlane.xlu0 %1800
    %v1802 = vsel %vm918, %v1605, -inf
    %1803 = vmax.xlane.f32.xlu0 %v1802
    %v1804 = vpop.xlane.xlu0 %1803
    %v1805 = vsel %vm918, %v1610, -inf
    %1806 = vmax.xlane.f32.xlu0 %v1805
    %v1807 = vpop.xlane.xlu0 %1806
    %v1808 = vsel %vm918, %v1615, -inf
    %1809 = vmax.xlane.f32.xlu0 %v1808
    %v1810 = vpop.xlane.xlu0 %1809
    %v1811 = vsel %vm918, %v1749, -inf
    %1812 = vmax.xlane.f32.xlu0 %v1811
    %v1813 = vpop.xlane.xlu0 %1812
    %v1814 = vsel %vm918, %v1754, -inf
    %1815 = vmax.xlane.f32.xlu0 %v1814
    %v1816 = vpop.xlane.xlu0 %1815
    %v1817 = vsel %vm918, %v1759, -inf
    %1818 = vmax.xlane.f32.xlu0 %v1817
    %v1819 = vpop.xlane.xlu0 %1818
    %v1820 = vsel %vm918, %v1764, -inf
    %1821 = vmax.xlane.f32.xlu0 %v1820
    %v1822 = vpop.xlane.xlu0 %1821
    %v1823 = vsel %vm918, %v1769, -inf
    %1824 = vmax.xlane.f32.xlu0 %v1823
    %v1825 = vpop.xlane.xlu0 %1824
    %v1826 = vsel %vm918, %v1774, -inf
    %1827 = vmax.xlane.f32.xlu0 %v1826
    %v1828 = vpop.xlane.xlu0 %1827
    %v1829 = vsel %vm918, %v1779, -inf
    %1830 = vmax.xlane.f32.xlu0 %v1829
    %v1831 = vpop.xlane.xlu0 %1830
    %v1832 = vsel %vm918, %v1784, -inf
    %1833 = vmax.xlane.f32.xlu0 %v1832
    %v1834 = vpop.xlane.xlu0 %1833
    %v1835 = vsub.f32 %v1580, %v1789
    %v1836 = vsub.f32 %v1585, %v1792
    %v1837 = vsub.f32 %v1590, %v1795
    %v1838 = vsub.f32 %v1595, %v1798
    %v1839 = vsub.f32 %v1600, %v1801
    %v1840 = vsub.f32 %v1605, %v1804
    %v1841 = vsub.f32 %v1610, %v1807
    %v1842 = vsub.f32 %v1615, %v1810
    %v1843 = vsub.f32 %v1749, %v1813
    %v1844 = vsub.f32 %v1754, %v1816
    %v1845 = vsub.f32 %v1759, %v1819
    %v1846 = vsub.f32 %v1764, %v1822
    %v1847 = vsub.f32 %v1769, %v1825
    %v1848 = vsub.f32 %v1774, %v1828
    %v1849 = vsub.f32 %v1779, %v1831
    %v1850 = vsub.f32 %v1784, %v1834
    %v1851 = vmul.f32 %v1835, 1.442695
    %v1852 = vpow.pop %v1851
    %v1853 = vmul.f32 %v1836, 1.442695
    %v1854 = vpow.pop %v1853
    %v1855 = vmul.f32 %v1837, 1.442695
    %v1856 = vpow.pop %v1855
    %v1857 = vmul.f32 %v1838, 1.442695
    %v1858 = vpow.pop %v1857
    %v1859 = vmul.f32 %v1839, 1.442695
    %v1860 = vpow.pop %v1859
    %v1861 = vmul.f32 %v1840, 1.442695
    %v1862 = vpow.pop %v1861
    %v1863 = vmul.f32 %v1841, 1.442695
    %v1864 = vpow.pop %v1863
    %v1865 = vmul.f32 %v1842, 1.442695
    %v1866 = vpow.pop %v1865
    %v1867 = vmul.f32 %v1843, 1.442695
    %v1868 = vpow.pop %v1867
    %v1869 = vmul.f32 %v1844, 1.442695
    %v1870 = vpow.pop %v1869
    %v1871 = vmul.f32 %v1845, 1.442695
    %v1872 = vpow.pop %v1871
    %v1873 = vmul.f32 %v1846, 1.442695
    %v1874 = vpow.pop %v1873
    %v1875 = vmul.f32 %v1847, 1.442695
    %v1876 = vpow.pop %v1875
    %v1877 = vmul.f32 %v1848, 1.442695
    %v1878 = vpow.pop %v1877
    %v1879 = vmul.f32 %v1849, 1.442695
    %v1880 = vpow.pop %v1879
    %v1881 = vmul.f32 %v1850, 1.442695
    %v1882 = vpow.pop %v1881
    %v1883 = vsel %vm918, %v1852, 0.0
    %1884 = vadd.xlane.f32.xlu0 %v1883
    %v1885 = vpop.xlane.xlu0 %1884
    %v1886 = vsel %vm918, %v1854, 0.0
    %1887 = vadd.xlane.f32.xlu0 %v1886
    %v1888 = vpop.xlane.xlu0 %1887
    %v1889 = vsel %vm918, %v1856, 0.0
    %1890 = vadd.xlane.f32.xlu0 %v1889
    %v1891 = vpop.xlane.xlu0 %1890
    %v1892 = vsel %vm918, %v1858, 0.0
    %1893 = vadd.xlane.f32.xlu0 %v1892
    %v1894 = vpop.xlane.xlu0 %1893
    %v1895 = vsel %vm918, %v1860, 0.0
    %1896 = vadd.xlane.f32.xlu0 %v1895
    %v1897 = vpop.xlane.xlu0 %1896
    %v1898 = vsel %vm918, %v1862, 0.0
    %1899 = vadd.xlane.f32.xlu0 %v1898
    %v1900 = vpop.xlane.xlu0 %1899
    %v1901 = vsel %vm918, %v1864, 0.0
    %1902 = vadd.xlane.f32.xlu0 %v1901
    %v1903 = vpop.xlane.xlu0 %1902
    %v1904 = vsel %vm918, %v1866, 0.0
    %1905 = vadd.xlane.f32.xlu0 %v1904
    %v1906 = vpop.xlane.xlu0 %1905
    %v1907 = vsel %vm918, %v1868, 0.0
    %1908 = vadd.xlane.f32.xlu0 %v1907
    %v1909 = vpop.xlane.xlu0 %1908
    %v1910 = vsel %vm918, %v1870, 0.0
    %1911 = vadd.xlane.f32.xlu0 %v1910
    %v1912 = vpop.xlane.xlu0 %1911
    %v1913 = vsel %vm918, %v1872, 0.0
    %1914 = vadd.xlane.f32.xlu0 %v1913
    %v1915 = vpop.xlane.xlu0 %1914
    %v1916 = vsel %vm918, %v1874, 0.0
    %1917 = vadd.xlane.f32.xlu0 %v1916
    %v1918 = vpop.xlane.xlu0 %1917
    %v1919 = vsel %vm918, %v1876, 0.0
    %1920 = vadd.xlane.f32.xlu0 %v1919
    %v1921 = vpop.xlane.xlu0 %1920
    %v1922 = vsel %vm918, %v1878, 0.0
    %1923 = vadd.xlane.f32.xlu0 %v1922
    %v1924 = vpop.xlane.xlu0 %1923
    %v1925 = vsel %vm918, %v1880, 0.0
    %1926 = vadd.xlane.f32.xlu0 %v1925
    %v1927 = vpop.xlane.xlu0 %1926
    %v1928 = vsel %vm918, %v1882, 0.0
    %1929 = vadd.xlane.f32.xlu0 %v1928
    %v1930 = vpop.xlane.xlu0 %1929
    %1931 = vrot.lane.b32.xlu0 %v513, 56
    %v1932 = vpop.permute.xlu0 %1931
    %1933 = vrot.lane.b32.xlu0 %v518, 56
    %v1934 = vpop.permute.xlu0 %1933
    %1935 = vrot.lane.b32.xlu0 %v523, 56
    %v1936 = vpop.permute.xlu0 %1935
    %1937 = vrot.lane.b32.xlu0 %v528, 56
    %v1938 = vpop.permute.xlu0 %1937
    %1939 = vrot.lane.b32.xlu0 %v533, 56
    %v1940 = vpop.permute.xlu0 %1939
    %1941 = vrot.lane.b32.xlu0 %v538, 56
    %v1942 = vpop.permute.xlu0 %1941
    %1943 = vrot.lane.b32.xlu0 %v543, 56
    %v1944 = vpop.permute.xlu0 %1943
    %1945 = vrot.lane.b32.xlu0 %v548, 56
    %v1946 = vpop.permute.xlu0 %1945
    %v1956 = vsel %vm918, %v1852, 0
    %v1959 = vsel %vm918, %v1854, 0
    %v1962 = vsel %vm918, %v1856, 0
    %v1965 = vsel %vm918, %v1858, 0
    %v1968 = vsel %vm918, %v1860, 0
    %v1971 = vsel %vm918, %v1862, 0
    %v1974 = vsel %vm918, %v1864, 0
    %v1977 = vsel %vm918, %v1866, 0
    %1979 = vmatprep.subr.mxu0 0.0
    %1980 = vmatpush1.msra.mxu0 %v1932
    %1981 = vmatprep.subr.mxu0 0.0
    %1982 = vmatpush1.msra.mxu0 %v1934
    %1983 = vmatprep.subr.mxu0 0.0
    %1984 = vmatpush1.msra.mxu0 %v1936
    %1985 = vmatprep.subr.mxu0 0.0
    %1986 = vmatpush1.msra.mxu0 %v1938
    %1987 = vmatprep.subr.mxu0 0.0
    %1988 = vmatpush1.msra.mxu0 %v1940
    %1989 = vmatprep.subr.mxu0 0.0
    %1990 = vmatpush1.msra.mxu0 %v1942
    %1991 = vmatprep.subr.mxu0 0.0
    %1992 = vmatpush1.msra.mxu0 %v1944
    %1993 = vmatprep.subr.mxu0 0.0
    %1994 = vmatpush1.msra.mxu0 %v1946
    %1995 = vmatprep.subr.mxu0 0.0
    %1996 = vmatpush1.msra.mxu0 0.0
    %1997 = vmatprep.subr.mxu0 0.0
    %1998 = vmatpush1.msra.mxu0 0.0
    %1999 = vmatprep.subr.mxu0 0.0
    %2000 = vmatpush1.msra.mxu0 0.0
    %2001 = vmatprep.subr.mxu0 0.0
    %2002 = vmatpush1.msra.mxu0 0.0
    %2003 = vmatprep.subr.mxu0 0.0
    %2004 = vmatpush1.msra.mxu0 0.0
    %2005 = vmatprep.subr.mxu0 0.0
    %2006 = vmatpush1.msra.mxu0 0.0
    %2007 = vmatprep.subr.mxu0 0.0
    %2008 = vmatpush1.msra.mxu0 0.0
    %2009 = vmatprep.subr.mxu0 0.0
    %2010 = vmatpush1.msra.mxu0 0.0
    %2011 = vmatprep.subr.mxu0 0.0
    %2012 = vmatpush1.msra.mxu0 0.0
    %2013 = vmatprep.subr.mxu0 0.0
    %2014 = vmatpush1.msra.mxu0 0.0
    %2015 = vmatprep.subr.mxu0 0.0
    %2016 = vmatpush1.msra.mxu0 0.0
    %2017 = vmatprep.subr.mxu0 0.0
    %2018 = vmatpush1.msra.mxu0 0.0
    %2019 = vmatprep.subr.mxu0 0.0
    %2020 = vmatpush1.msra.mxu0 0.0
    %2021 = vmatprep.subr.mxu0 0.0
    %2022 = vmatpush1.msra.mxu0 0.0
    %2023 = vmatprep.subr.mxu0 0.0
    %2024 = vmatpush1.msra.mxu0 0.0
    %2025 = vmatprep.subr.mxu0 0.0
    %2026 = vmatpush1.msra.mxu0 0.0
    %2027 = vmatprep.subr.mxu0 0.0
    %2028 = vmatpush1.msra.mxu0 0.0
    %2029 = vmatprep.subr.mxu0 0.0
    %2030 = vmatpush1.msra.mxu0 0.0
    %2031 = vmatprep.subr.mxu0 0.0
    %2032 = vmatpush1.msra.mxu0 0.0
    %2033 = vmatprep.subr.mxu0 0.0
    %2034 = vmatpush1.msra.mxu0 0.0
    %2035 = vmatprep.subr.mxu0 0.0
    %2036 = vmatpush1.msra.mxu0 0.0
    %2037 = vmatprep.subr.mxu0 0.0
    %2038 = vmatpush1.msra.mxu0 0.0
    %2039 = vmatprep.subr.mxu0 0.0
    %2040 = vmatpush1.msra.mxu0 0.0
    %2041 = vmatprep.subr.mxu0 0.0
    %2042 = vmatpush1.msra.mxu0 0.0
    %2043 = vmatprep.mubr.f32.mxu0 0.0
    %2044 = vmatmul.mubr.f32.gmra.mrb[0].mxu0 %v1956
    %v2045 = vpop.f32.mrb[0].mxu0
    %v2046 = vadd.f32 0.0, %v2045
    %v2047 = vpop.f32.mrb[0].mxu0
    %2048 = vmatprep.mubr.f32.mxu0 0.0
    %2049 = vmatmul.mubr.f32.gmra.mrb[0].mxu0 %v1959
    %v2050 = vpop.f32.mrb[0].mxu0
    %v2051 = vadd.f32 0.0, %v2050
    %v2052 = vpop.f32.mrb[0].mxu0
    %2053 = vmatprep.mubr.f32.mxu0 0.0
    %2054 = vmatmul.mubr.f32.gmra.mrb[0].mxu0 %v1962
    %v2055 = vpop.f32.mrb[0].mxu0
    %v2056 = vadd.f32 0.0, %v2055
    %v2057 = vpop.f32.mrb[0].mxu0
    %2058 = vmatprep.mubr.f32.mxu0 0.0
    %2059 = vmatmul.mubr.f32.gmra.mrb[0].mxu0 %v1965
    %v2060 = vpop.f32.mrb[0].mxu0
    %v2061 = vadd.f32 0.0, %v2060
    %v2062 = vpop.f32.mrb[0].mxu0
    %2063 = vmatprep.mubr.f32.mxu0 0.0
    %2064 = vmatmul.mubr.f32.gmra.mrb[0].mxu0 %v1968
    %v2065 = vpop.f32.mrb[0].mxu0
    %v2066 = vadd.f32 0.0, %v2065
    %v2067 = vpop.f32.mrb[0].mxu0
    %2068 = vmatprep.mubr.f32.mxu0 0.0
    %2069 = vmatmul.mubr.f32.gmra.mrb[0].mxu0 %v1971
    %v2070 = vpop.f32.mrb[0].mxu0
    %v2071 = vadd.f32 0.0, %v2070
    %v2072 = vpop.f32.mrb[0].mxu0
    %2073 = vmatprep.mubr.f32.mxu0 0.0
    %2074 = vmatmul.mubr.f32.gmra.mrb[0].mxu0 %v1974
    %v2075 = vpop.f32.mrb[0].mxu0
    %v2076 = vadd.f32 0.0, %v2075
    %v2077 = vpop.f32.mrb[0].mxu0
    %2078 = vmatprep.mubr.f32.mxu0 0.0
    %2079 = vmatmul.mubr.f32.gmra.mrb[0].mxu0 %v1977
    %v2080 = vpop.f32.mrb[0].mxu0
    %v2081 = vadd.f32 0.0, %v2080
    %v2082 = vpop.f32.mrb[0].mxu0
    %2083 = vdwg.mxu0
    %2084 = vrot.lane.b32.xlu0 %v553, 56
    %v2085 = vpop.permute.xlu0 %2084
    %2086 = vrot.lane.b32.xlu0 %v558, 56
    %v2087 = vpop.permute.xlu0 %2086
    %2088 = vrot.lane.b32.xlu0 %v563, 56
    %v2089 = vpop.permute.xlu0 %2088
    %2090 = vrot.lane.b32.xlu0 %v568, 56
    %v2091 = vpop.permute.xlu0 %2090
    %2092 = vrot.lane.b32.xlu0 %v573, 56
    %v2093 = vpop.permute.xlu0 %2092
    %2094 = vrot.lane.b32.xlu0 %v578, 56
    %v2095 = vpop.permute.xlu0 %2094
    %2096 = vrot.lane.b32.xlu0 %v583, 56
    %v2097 = vpop.permute.xlu0 %2096
    %2098 = vrot.lane.b32.xlu0 %v588, 56
    %v2099 = vpop.permute.xlu0 %2098
    %v2109 = vsel %vm918, %v1868, 0
    %v2112 = vsel %vm918, %v1870, 0
    %v2115 = vsel %vm918, %v1872, 0
    %v2118 = vsel %vm918, %v1874, 0
    %v2121 = vsel %vm918, %v1876, 0
    %v2124 = vsel %vm918, %v1878, 0
    %v2127 = vsel %vm918, %v1880, 0
    %v2130 = vsel %vm918, %v1882, 0
    %2132 = vmatprep.subr.mxu0 0.0
    %2133 = vmatpush1.msra.mxu0 %v2085
    %2134 = vmatprep.subr.mxu0 0.0
    %2135 = vmatpush1.msra.mxu0 %v2087
    %2136 = vmatprep.subr.mxu0 0.0
    %2137 = vmatpush1.msra.mxu0 %v2089
    %2138 = vmatprep.subr.mxu0 0.0
    %2139 = vmatpush1.msra.mxu0 %v2091
    %2140 = vmatprep.subr.mxu0 0.0
    %2141 = vmatpush1.msra.mxu0 %v2093
    %2142 = vmatprep.subr.mxu0 0.0
    %2143 = vmatpush1.msra.mxu0 %v2095
    %2144 = vmatprep.subr.mxu0 0.0
    %2145 = vmatpush1.msra.mxu0 %v2097
    %2146 = vmatprep.subr.mxu0 0.0
    %2147 = vmatpush1.msra.mxu0 %v2099
    %2148 = vmatprep.subr.mxu0 0.0
    %2149 = vmatpush1.msra.mxu0 0.0
    %2150 = vmatprep.subr.mxu0 0.0
    %2151 = vmatpush1.msra.mxu0 0.0
    %2152 = vmatprep.subr.mxu0 0.0
    %2153 = vmatpush1.msra.mxu0 0.0
    %2154 = vmatprep.subr.mxu0 0.0
    %2155 = vmatpush1.msra.mxu0 0.0
    %2156 = vmatprep.subr.mxu0 0.0
    %2157 = vmatpush1.msra.mxu0 0.0
    %2158 = vmatprep.subr.mxu0 0.0
    %2159 = vmatpush1.msra.mxu0 0.0
    %2160 = vmatprep.subr.mxu0 0.0
    %2161 = vmatpush1.msra.mxu0 0.0
    %2162 = vmatprep.subr.mxu0 0.0
    %2163 = vmatpush1.msra.mxu0 0.0
    %2164 = vmatprep.subr.mxu0 0.0
    %2165 = vmatpush1.msra.mxu0 0.0
    %2166 = vmatprep.subr.mxu0 0.0
    %2167 = vmatpush1.msra.mxu0 0.0
    %2168 = vmatprep.subr.mxu0 0.0
    %2169 = vmatpush1.msra.mxu0 0.0
    %2170 = vmatprep.subr.mxu0 0.0
    %2171 = vmatpush1.msra.mxu0 0.0
    %2172 = vmatprep.subr.mxu0 0.0
    %2173 = vmatpush1.msra.mxu0 0.0
    %2174 = vmatprep.subr.mxu0 0.0
    %2175 = vmatpush1.msra.mxu0 0.0
    %2176 = vmatprep.subr.mxu0 0.0
    %2177 = vmatpush1.msra.mxu0 0.0
    %2178 = vmatprep.subr.mxu0 0.0
    %2179 = vmatpush1.msra.mxu0 0.0
    %2180 = vmatprep.subr.mxu0 0.0
    %2181 = vmatpush1.msra.mxu0 0.0
    %2182 = vmatprep.subr.mxu0 0.0
    %2183 = vmatpush1.msra.mxu0 0.0
    %2184 = vmatprep.subr.mxu0 0.0
    %2185 = vmatpush1.msra.mxu0 0.0
    %2186 = vmatprep.subr.mxu0 0.0
    %2187 = vmatpush1.msra.mxu0 0.0
    %2188 = vmatprep.subr.mxu0 0.0
    %2189 = vmatpush1.msra.mxu0 0.0
    %2190 = vmatprep.subr.mxu0 0.0
    %2191 = vmatpush1.msra.mxu0 0.0
    %2192 = vmatprep.subr.mxu0 0.0
    %2193 = vmatpush1.msra.mxu0 0.0
    %2194 = vmatprep.subr.mxu0 0.0
    %2195 = vmatpush1.msra.mxu0 0.0
    %2196 = vmatprep.mubr.f32.mxu0 0.0
    %2197 = vmatmul.mubr.f32.gmra.mrb[0].mxu0 %v2109
    %v2198 = vpop.f32.mrb[0].mxu0
    %v2199 = vadd.f32 0.0, %v2198
    %v2200 = vpop.f32.mrb[0].mxu0
    %2201 = vmatprep.mubr.f32.mxu0 0.0
    %2202 = vmatmul.mubr.f32.gmra.mrb[0].mxu0 %v2112
    %v2203 = vpop.f32.mrb[0].mxu0
    %v2204 = vadd.f32 0.0, %v2203
    %v2205 = vpop.f32.mrb[0].mxu0
    %2206 = vmatprep.mubr.f32.mxu0 0.0
    %2207 = vmatmul.mubr.f32.gmra.mrb[0].mxu0 %v2115
    %v2208 = vpop.f32.mrb[0].mxu0
    %v2209 = vadd.f32 0.0, %v2208
    %v2210 = vpop.f32.mrb[0].mxu0
    %2211 = vmatprep.mubr.f32.mxu0 0.0
    %2212 = vmatmul.mubr.f32.gmra.mrb[0].mxu0 %v2118
    %v2213 = vpop.f32.mrb[0].mxu0
    %v2214 = vadd.f32 0.0, %v2213
    %v2215 = vpop.f32.mrb[0].mxu0
    %2216 = vmatprep.mubr.f32.mxu0 0.0
    %2217 = vmatmul.mubr.f32.gmra.mrb[0].mxu0 %v2121
    %v2218 = vpop.f32.mrb[0].mxu0
    %v2219 = vadd.f32 0.0, %v2218
    %v2220 = vpop.f32.mrb[0].mxu0
    %2221 = vmatprep.mubr.f32.mxu0 0.0
    %2222 = vmatmul.mubr.f32.gmra.mrb[0].mxu0 %v2124
    %v2223 = vpop.f32.mrb[0].mxu0
    %v2224 = vadd.f32 0.0, %v2223
    %v2225 = vpop.f32.mrb[0].mxu0
    %2226 = vmatprep.mubr.f32.mxu0 0.0
    %2227 = vmatmul.mubr.f32.gmra.mrb[0].mxu0 %v2127
    %v2228 = vpop.f32.mrb[0].mxu0
    %v2229 = vadd.f32 0.0, %v2228
    %v2230 = vpop.f32.mrb[0].mxu0
    %2231 = vmatprep.mubr.f32.mxu0 0.0
    %2232 = vmatmul.mubr.f32.gmra.mrb[0].mxu0 %v2130
    %v2233 = vpop.f32.mrb[0].mxu0
    %v2234 = vadd.f32 0.0, %v2233
    %v2235 = vpop.f32.mrb[0].mxu0
    %2236 = vdwg.mxu0
    %v2237 = vrcp.pop %v1885
    %v2238 = vrcp.pop %v1888
    %v2239 = vrcp.pop %v1891
    %v2240 = vrcp.pop %v1894
    %v2241 = vrcp.pop %v1897
    %v2242 = vrcp.pop %v1900
    %v2243 = vrcp.pop %v1903
    %v2244 = vrcp.pop %v1906
    %v2245 = vrcp.pop %v1909
    %v2246 = vrcp.pop %v1912
    %v2247 = vrcp.pop %v1915
    %v2248 = vrcp.pop %v1918
    %v2249 = vrcp.pop %v1921
    %v2250 = vrcp.pop %v1924
    %v2251 = vrcp.pop %v1927
    %v2252 = vrcp.pop %v1930
    %v2253 = vmul.f32 %v1885, %v2237
    %v2254 = vmul.f32 %v1888, %v2238
    %v2255 = vmul.f32 %v1891, %v2239
    %v2256 = vmul.f32 %v1894, %v2240
    %v2257 = vmul.f32 %v1897, %v2241
    %v2258 = vmul.f32 %v1900, %v2242
    %v2259 = vmul.f32 %v1903, %v2243
    %v2260 = vmul.f32 %v1906, %v2244
    %v2261 = vmul.f32 %v1909, %v2245
    %v2262 = vmul.f32 %v1912, %v2246
    %v2263 = vmul.f32 %v1915, %v2247
    %v2264 = vmul.f32 %v1918, %v2248
    %v2265 = vmul.f32 %v1921, %v2249
    %v2266 = vmul.f32 %v1924, %v2250
    %v2267 = vmul.f32 %v1927, %v2251
    %v2268 = vmul.f32 %v1930, %v2252
    %v2269 = vsub.f32 2.0, %v2253
    %v2270 = vsub.f32 2.0, %v2254
    %v2271 = vsub.f32 2.0, %v2255
    %v2272 = vsub.f32 2.0, %v2256
    %v2273 = vsub.f32 2.0, %v2257
    %v2274 = vsub.f32 2.0, %v2258
    %v2275 = vsub.f32 2.0, %v2259
    %v2276 = vsub.f32 2.0, %v2260
    %v2277 = vsub.f32 2.0, %v2261
    %v2278 = vsub.f32 2.0, %v2262
    %v2279 = vsub.f32 2.0, %v2263
    %v2280 = vsub.f32 2.0, %v2264
    %v2281 = vsub.f32 2.0, %v2265
    %v2282 = vsub.f32 2.0, %v2266
    %v2283 = vsub.f32 2.0, %v2267
    %v2284 = vsub.f32 2.0, %v2268
    %v2285 = vmul.f32 %v2237, %v2269
    %v2286 = vmul.f32 %v2238, %v2270
    %v2287 = vmul.f32 %v2239, %v2271
    %v2288 = vmul.f32 %v2240, %v2272
    %v2289 = vmul.f32 %v2241, %v2273
    %v2290 = vmul.f32 %v2242, %v2274
    %v2291 = vmul.f32 %v2243, %v2275
    %v2292 = vmul.f32 %v2244, %v2276
    %v2293 = vmul.f32 %v2245, %v2277
    %v2294 = vmul.f32 %v2246, %v2278
    %v2295 = vmul.f32 %v2247, %v2279
    %v2296 = vmul.f32 %v2248, %v2280
    %v2297 = vmul.f32 %v2249, %v2281
    %v2298 = vmul.f32 %v2250, %v2282
    %v2299 = vmul.f32 %v2251, %v2283
    %v2300 = vmul.f32 %v2252, %v2284
    %v2301 = vmul.f32 %v2046, %v2285
    %v2302 = vmul.f32 %v2051, %v2286
    %v2303 = vmul.f32 %v2056, %v2287
    %v2304 = vmul.f32 %v2061, %v2288
    %v2305 = vmul.f32 %v2066, %v2289
    %v2306 = vmul.f32 %v2071, %v2290
    %v2307 = vmul.f32 %v2076, %v2291
    %v2308 = vmul.f32 %v2081, %v2292
    %v2309 = vmul.f32 %v2199, %v2293
    %v2310 = vmul.f32 %v2204, %v2294
    %v2311 = vmul.f32 %v2209, %v2295
    %v2312 = vmul.f32 %v2214, %v2296
    %v2313 = vmul.f32 %v2219, %v2297
    %v2314 = vmul.f32 %v2224, %v2298
    %v2315 = vmul.f32 %v2229, %v2299
    %v2316 = vmul.f32 %v2234, %v2300
    %v2318 = vsel %vm619, %v2301, 0
    %v2321 = vsel %vm619, %v2302, 0
    %v2324 = vsel %vm619, %v2303, 0
    %v2327 = vsel %vm619, %v2304, 0
    %v2330 = vsel %vm619, %v2305, 0
    %v2333 = vsel %vm619, %v2306, 0
    %v2336 = vsel %vm619, %v2307, 0
    %v2339 = vsel %vm619, %v2308, 0
    %v2342 = vsel %vm619, %v2309, 0
    %v2345 = vsel %vm619, %v2310, 0
    %v2348 = vsel %vm619, %v2311, 0
    %v2351 = vsel %vm619, %v2312, 0
    %v2354 = vsel %vm619, %v2313, 0
    %v2357 = vsel %vm619, %v2314, 0
    %v2360 = vsel %vm619, %v2315, 0
    %v2363 = vsel %vm619, %v2316, 0
    %2365 = vmatprep.subr.mxu0 0.0
    %2366 = vmatpush1.msra.mxu0 %v592
    %2367 = vmatprep.subr.mxu0 0.0
    %2368 = vmatpush1.msra.mxu0 0.0
    %2369 = vmatprep.subr.mxu0 0.0
    %2370 = vmatpush1.msra.mxu0 0.0
    %2371 = vmatprep.subr.mxu0 0.0
    %2372 = vmatpush1.msra.mxu0 0.0
    %2373 = vmatprep.subr.mxu0 0.0
    %2374 = vmatpush1.msra.mxu0 0.0
    %2375 = vmatprep.subr.mxu0 0.0
    %2376 = vmatpush1.msra.mxu0 0.0
    %2377 = vmatprep.subr.mxu0 0.0
    %2378 = vmatpush1.msra.mxu0 0.0
    %2379 = vmatprep.subr.mxu0 0.0
    %2380 = vmatpush1.msra.mxu0 0.0
    %2381 = vmatprep.subr.mxu0 0.0
    %2382 = vmatpush1.msra.mxu0 0.0
    %2383 = vmatprep.subr.mxu0 0.0
    %2384 = vmatpush1.msra.mxu0 0.0
    %2385 = vmatprep.subr.mxu0 0.0
    %2386 = vmatpush1.msra.mxu0 0.0
    %2387 = vmatprep.subr.mxu0 0.0
    %2388 = vmatpush1.msra.mxu0 0.0
    %2389 = vmatprep.subr.mxu0 0.0
    %2390 = vmatpush1.msra.mxu0 0.0
    %2391 = vmatprep.subr.mxu0 0.0
    %2392 = vmatpush1.msra.mxu0 0.0
    %2393 = vmatprep.subr.mxu0 0.0
    %2394 = vmatpush1.msra.mxu0 0.0
    %2395 = vmatprep.subr.mxu0 0.0
    %2396 = vmatpush1.msra.mxu0 0.0
    %2397 = vmatprep.subr.mxu0 0.0
    %2398 = vmatpush1.msra.mxu0 0.0
    %2399 = vmatprep.subr.mxu0 0.0
    %2400 = vmatpush1.msra.mxu0 0.0
    %2401 = vmatprep.subr.mxu0 0.0
    %2402 = vmatpush1.msra.mxu0 0.0
    %2403 = vmatprep.subr.mxu0 0.0
    %2404 = vmatpush1.msra.mxu0 0.0
    %2405 = vmatprep.subr.mxu0 0.0
    %2406 = vmatpush1.msra.mxu0 0.0
    %2407 = vmatprep.subr.mxu0 0.0
    %2408 = vmatpush1.msra.mxu0 0.0
    %2409 = vmatprep.subr.mxu0 0.0
    %2410 = vmatpush1.msra.mxu0 0.0
    %2411 = vmatprep.subr.mxu0 0.0
    %2412 = vmatpush1.msra.mxu0 0.0
    %2413 = vmatprep.subr.mxu0 0.0
    %2414 = vmatpush1.msra.mxu0 0.0
    %2415 = vmatprep.subr.mxu0 0.0
    %2416 = vmatpush1.msra.mxu0 0.0
    %2417 = vmatprep.subr.mxu0 0.0
    %2418 = vmatpush1.msra.mxu0 0.0
    %2419 = vmatprep.subr.mxu0 0.0
    %2420 = vmatpush1.msra.mxu0 0.0
    %2421 = vmatprep.subr.mxu0 0.0
    %2422 = vmatpush1.msra.mxu0 0.0
    %2423 = vmatprep.subr.mxu0 0.0
    %2424 = vmatpush1.msra.mxu0 0.0
    %2425 = vmatprep.subr.mxu0 0.0
    %2426 = vmatpush1.msra.mxu0 0.0
    %2427 = vmatprep.subr.mxu0 0.0
    %2428 = vmatpush1.msra.mxu0 0.0
    %2429 = vmatprep.mubr.f32.mxu0 0.0
    %2430 = vmatmul.mubr.f32.gmra.mrb[0].mxu0 %v2318
    %v2431 = vpop.f32.mrb[0].mxu0
    %v2432 = vadd.f32 0.0, %v2431
    %v2433 = vpop.f32.mrb[0].mxu0
    %2434 = vmatprep.mubr.f32.mxu0 0.0
    %2435 = vmatmul.mubr.f32.gmra.mrb[0].mxu0 %v2321
    %v2436 = vpop.f32.mrb[0].mxu0
    %v2437 = vadd.f32 0.0, %v2436
    %v2438 = vpop.f32.mrb[0].mxu0
    %2439 = vmatprep.mubr.f32.mxu0 0.0
    %2440 = vmatmul.mubr.f32.gmra.mrb[0].mxu0 %v2324
    %v2441 = vpop.f32.mrb[0].mxu0
    %v2442 = vadd.f32 0.0, %v2441
    %v2443 = vpop.f32.mrb[0].mxu0
    %2444 = vmatprep.mubr.f32.mxu0 0.0
    %2445 = vmatmul.mubr.f32.gmra.mrb[0].mxu0 %v2327
    %v2446 = vpop.f32.mrb[0].mxu0
    %v2447 = vadd.f32 0.0, %v2446
    %v2448 = vpop.f32.mrb[0].mxu0
    %2449 = vmatprep.mubr.f32.mxu0 0.0
    %2450 = vmatmul.mubr.f32.gmra.mrb[0].mxu0 %v2330
    %v2451 = vpop.f32.mrb[0].mxu0
    %v2452 = vadd.f32 0.0, %v2451
    %v2453 = vpop.f32.mrb[0].mxu0
    %2454 = vmatprep.mubr.f32.mxu0 0.0
    %2455 = vmatmul.mubr.f32.gmra.mrb[0].mxu0 %v2333
    %v2456 = vpop.f32.mrb[0].mxu0
    %v2457 = vadd.f32 0.0, %v2456
    %v2458 = vpop.f32.mrb[0].mxu0
    %2459 = vmatprep.mubr.f32.mxu0 0.0
    %2460 = vmatmul.mubr.f32.gmra.mrb[0].mxu0 %v2336
    %v2461 = vpop.f32.mrb[0].mxu0
    %v2462 = vadd.f32 0.0, %v2461
    %v2463 = vpop.f32.mrb[0].mxu0
    %2464 = vmatprep.mubr.f32.mxu0 0.0
    %2465 = vmatmul.mubr.f32.gmra.mrb[0].mxu0 %v2339
    %v2466 = vpop.f32.mrb[0].mxu0
    %v2467 = vadd.f32 0.0, %v2466
    %v2468 = vpop.f32.mrb[0].mxu0
    %2469 = vmatprep.mubr.f32.mxu0 0.0
    %2470 = vmatmul.mubr.f32.gmra.mrb[0].mxu0 %v2342
    %v2471 = vpop.f32.mrb[0].mxu0
    %v2472 = vadd.f32 0.0, %v2471
    %v2473 = vpop.f32.mrb[0].mxu0
    %2474 = vmatprep.mubr.f32.mxu0 0.0
    %2475 = vmatmul.mubr.f32.gmra.mrb[0].mxu0 %v2345
    %v2476 = vpop.f32.mrb[0].mxu0
    %v2477 = vadd.f32 0.0, %v2476
    %v2478 = vpop.f32.mrb[0].mxu0
    %2479 = vmatprep.mubr.f32.mxu0 0.0
    %2480 = vmatmul.mubr.f32.gmra.mrb[0].mxu0 %v2348
    %v2481 = vpop.f32.mrb[0].mxu0
    %v2482 = vadd.f32 0.0, %v2481
    %v2483 = vpop.f32.mrb[0].mxu0
    %2484 = vmatprep.mubr.f32.mxu0 0.0
    %2485 = vmatmul.mubr.f32.gmra.mrb[0].mxu0 %v2351
    %v2486 = vpop.f32.mrb[0].mxu0
    %v2487 = vadd.f32 0.0, %v2486
    %v2488 = vpop.f32.mrb[0].mxu0
    %2489 = vmatprep.mubr.f32.mxu0 0.0
    %2490 = vmatmul.mubr.f32.gmra.mrb[0].mxu0 %v2354
    %v2491 = vpop.f32.mrb[0].mxu0
    %v2492 = vadd.f32 0.0, %v2491
    %v2493 = vpop.f32.mrb[0].mxu0
    %2494 = vmatprep.mubr.f32.mxu0 0.0
    %2495 = vmatmul.mubr.f32.gmra.mrb[0].mxu0 %v2357
    %v2496 = vpop.f32.mrb[0].mxu0
    %v2497 = vadd.f32 0.0, %v2496
    %v2498 = vpop.f32.mrb[0].mxu0
    %2499 = vmatprep.mubr.f32.mxu0 0.0
    %2500 = vmatmul.mubr.f32.gmra.mrb[0].mxu0 %v2360
    %v2501 = vpop.f32.mrb[0].mxu0
    %v2502 = vadd.f32 0.0, %v2501
    %v2503 = vpop.f32.mrb[0].mxu0
    %2504 = vmatprep.mubr.f32.mxu0 0.0
    %2505 = vmatmul.mubr.f32.gmra.mrb[0].mxu0 %v2363
    %v2506 = vpop.f32.mrb[0].mxu0
    %v2507 = vadd.f32 0.0, %v2506
    %v2508 = vpop.f32.mrb[0].mxu0
    %2509 = vdwg.mxu0
    %v2511 = vsel %vm619, %v1433, 0
    %v2514 = vsel %vm619, %v1434, 0
    %v2517 = vsel %vm619, %v1435, 0
    %v2520 = vsel %vm619, %v1436, 0
    %v2523 = vsel %vm619, %v1437, 0
    %v2526 = vsel %vm619, %v1438, 0
    %v2529 = vsel %vm619, %v1439, 0
    %v2532 = vsel %vm619, %v1440, 0
    %v2535 = vsel %vm619, %v1441, 0
    %v2538 = vsel %vm619, %v1442, 0
    %v2541 = vsel %vm619, %v1443, 0
    %v2544 = vsel %vm619, %v1444, 0
    %v2547 = vsel %vm619, %v1445, 0
    %v2550 = vsel %vm619, %v1446, 0
    %v2553 = vsel %vm619, %v1447, 0
    %v2556 = vsel %vm619, %v1448, 0
    %2558 = vmatprep.subr.mxu0 0.0
    %2559 = vmatpush1.msra.mxu0 %v591
    %2560 = vmatprep.subr.mxu0 0.0
    %2561 = vmatpush1.msra.mxu0 0.0
    %2562 = vmatprep.subr.mxu0 0.0
    %2563 = vmatpush1.msra.mxu0 0.0
    %2564 = vmatprep.subr.mxu0 0.0
    %2565 = vmatpush1.msra.mxu0 0.0
    %2566 = vmatprep.subr.mxu0 0.0
    %2567 = vmatpush1.msra.mxu0 0.0
    %2568 = vmatprep.subr.mxu0 0.0
    %2569 = vmatpush1.msra.mxu0 0.0
    %2570 = vmatprep.subr.mxu0 0.0
    %2571 = vmatpush1.msra.mxu0 0.0
    %2572 = vmatprep.subr.mxu0 0.0
    %2573 = vmatpush1.msra.mxu0 0.0
    %2574 = vmatprep.subr.mxu0 0.0
    %2575 = vmatpush1.msra.mxu0 0.0
    %2576 = vmatprep.subr.mxu0 0.0
    %2577 = vmatpush1.msra.mxu0 0.0
    %2578 = vmatprep.subr.mxu0 0.0
    %2579 = vmatpush1.msra.mxu0 0.0
    %2580 = vmatprep.subr.mxu0 0.0
    %2581 = vmatpush1.msra.mxu0 0.0
    %2582 = vmatprep.subr.mxu0 0.0
    %2583 = vmatpush1.msra.mxu0 0.0
    %2584 = vmatprep.subr.mxu0 0.0
    %2585 = vmatpush1.msra.mxu0 0.0
    %2586 = vmatprep.subr.mxu0 0.0
    %2587 = vmatpush1.msra.mxu0 0.0
    %2588 = vmatprep.subr.mxu0 0.0
    %2589 = vmatpush1.msra.mxu0 0.0
    %2590 = vmatprep.subr.mxu0 0.0
    %2591 = vmatpush1.msra.mxu0 0.0
    %2592 = vmatprep.subr.mxu0 0.0
    %2593 = vmatpush1.msra.mxu0 0.0
    %2594 = vmatprep.subr.mxu0 0.0
    %2595 = vmatpush1.msra.mxu0 0.0
    %2596 = vmatprep.subr.mxu0 0.0
    %2597 = vmatpush1.msra.mxu0 0.0
    %2598 = vmatprep.subr.mxu0 0.0
    %2599 = vmatpush1.msra.mxu0 0.0
    %2600 = vmatprep.subr.mxu0 0.0
    %2601 = vmatpush1.msra.mxu0 0.0
    %2602 = vmatprep.subr.mxu0 0.0
    %2603 = vmatpush1.msra.mxu0 0.0
    %2604 = vmatprep.subr.mxu0 0.0
    %2605 = vmatpush1.msra.mxu0 0.0
    %2606 = vmatprep.subr.mxu0 0.0
    %2607 = vmatpush1.msra.mxu0 0.0
    %2608 = vmatprep.subr.mxu0 0.0
    %2609 = vmatpush1.msra.mxu0 0.0
    %2610 = vmatprep.subr.mxu0 0.0
    %2611 = vmatpush1.msra.mxu0 0.0
    %2612 = vmatprep.subr.mxu0 0.0
    %2613 = vmatpush1.msra.mxu0 0.0
    %2614 = vmatprep.subr.mxu0 0.0
    %2615 = vmatpush1.msra.mxu0 0.0
    %2616 = vmatprep.subr.mxu0 0.0
    %2617 = vmatpush1.msra.mxu0 0.0
    %2618 = vmatprep.subr.mxu0 0.0
    %2619 = vmatpush1.msra.mxu0 0.0
    %2620 = vmatprep.subr.mxu0 0.0
    %2621 = vmatpush1.msra.mxu0 0.0
    %2622 = vmatprep.mubr.f32.mxu0 0.0
    %2623 = vmatmul.mubr.f32.gmra.mrb[0].mxu0 %v2511
    %v2624 = vpop.f32.mrb[0].mxu0
    %v2625 = vadd.f32 %v2432, %v2624
    %v2626 = vpop.f32.mrb[0].mxu0
    %2627 = vmatprep.mubr.f32.mxu0 0.0
    %2628 = vmatmul.mubr.f32.gmra.mrb[0].mxu0 %v2514
    %v2629 = vpop.f32.mrb[0].mxu0
    %v2630 = vadd.f32 %v2437, %v2629
    %v2631 = vpop.f32.mrb[0].mxu0
    %2632 = vmatprep.mubr.f32.mxu0 0.0
    %2633 = vmatmul.mubr.f32.gmra.mrb[0].mxu0 %v2517
    %v2634 = vpop.f32.mrb[0].mxu0
    %v2635 = vadd.f32 %v2442, %v2634
    %v2636 = vpop.f32.mrb[0].mxu0
    %2637 = vmatprep.mubr.f32.mxu0 0.0
    %2638 = vmatmul.mubr.f32.gmra.mrb[0].mxu0 %v2520
    %v2639 = vpop.f32.mrb[0].mxu0
    %v2640 = vadd.f32 %v2447, %v2639
    %v2641 = vpop.f32.mrb[0].mxu0
    %2642 = vmatprep.mubr.f32.mxu0 0.0
    %2643 = vmatmul.mubr.f32.gmra.mrb[0].mxu0 %v2523
    %v2644 = vpop.f32.mrb[0].mxu0
    %v2645 = vadd.f32 %v2452, %v2644
    %v2646 = vpop.f32.mrb[0].mxu0
    %2647 = vmatprep.mubr.f32.mxu0 0.0
    %2648 = vmatmul.mubr.f32.gmra.mrb[0].mxu0 %v2526
    %v2649 = vpop.f32.mrb[0].mxu0
    %v2650 = vadd.f32 %v2457, %v2649
    %v2651 = vpop.f32.mrb[0].mxu0
    %2652 = vmatprep.mubr.f32.mxu0 0.0
    %2653 = vmatmul.mubr.f32.gmra.mrb[0].mxu0 %v2529
    %v2654 = vpop.f32.mrb[0].mxu0
    %v2655 = vadd.f32 %v2462, %v2654
    %v2656 = vpop.f32.mrb[0].mxu0
    %2657 = vmatprep.mubr.f32.mxu0 0.0
    %2658 = vmatmul.mubr.f32.gmra.mrb[0].mxu0 %v2532
    %v2659 = vpop.f32.mrb[0].mxu0
    %v2660 = vadd.f32 %v2467, %v2659
    %v2661 = vpop.f32.mrb[0].mxu0
    %2662 = vmatprep.mubr.f32.mxu0 0.0
    %2663 = vmatmul.mubr.f32.gmra.mrb[0].mxu0 %v2535
    %v2664 = vpop.f32.mrb[0].mxu0
    %v2665 = vadd.f32 %v2472, %v2664
    %v2666 = vpop.f32.mrb[0].mxu0
    %2667 = vmatprep.mubr.f32.mxu0 0.0
    %2668 = vmatmul.mubr.f32.gmra.mrb[0].mxu0 %v2538
    %v2669 = vpop.f32.mrb[0].mxu0
    %v2670 = vadd.f32 %v2477, %v2669
    %v2671 = vpop.f32.mrb[0].mxu0
    %2672 = vmatprep.mubr.f32.mxu0 0.0
    %2673 = vmatmul.mubr.f32.gmra.mrb[0].mxu0 %v2541
    %v2674 = vpop.f32.mrb[0].mxu0
    %v2675 = vadd.f32 %v2482, %v2674
    %v2676 = vpop.f32.mrb[0].mxu0
    %2677 = vmatprep.mubr.f32.mxu0 0.0
    %2678 = vmatmul.mubr.f32.gmra.mrb[0].mxu0 %v2544
    %v2679 = vpop.f32.mrb[0].mxu0
    %v2680 = vadd.f32 %v2487, %v2679
    %v2681 = vpop.f32.mrb[0].mxu0
    %2682 = vmatprep.mubr.f32.mxu0 0.0
    %2683 = vmatmul.mubr.f32.gmra.mrb[0].mxu0 %v2547
    %v2684 = vpop.f32.mrb[0].mxu0
    %v2685 = vadd.f32 %v2492, %v2684
    %v2686 = vpop.f32.mrb[0].mxu0
    %2687 = vmatprep.mubr.f32.mxu0 0.0
    %2688 = vmatmul.mubr.f32.gmra.mrb[0].mxu0 %v2550
    %v2689 = vpop.f32.mrb[0].mxu0
    %v2690 = vadd.f32 %v2497, %v2689
    %v2691 = vpop.f32.mrb[0].mxu0
    %2692 = vmatprep.mubr.f32.mxu0 0.0
    %2693 = vmatmul.mubr.f32.gmra.mrb[0].mxu0 %v2553
    %v2694 = vpop.f32.mrb[0].mxu0
    %v2695 = vadd.f32 %v2502, %v2694
    %v2696 = vpop.f32.mrb[0].mxu0
    %2697 = vmatprep.mubr.f32.mxu0 0.0
    %2698 = vmatmul.mubr.f32.gmra.mrb[0].mxu0 %v2556
    %v2699 = vpop.f32.mrb[0].mxu0
    %v2700 = vadd.f32 %v2507, %v2699
    %v2701 = vpop.f32.mrb[0].mxu0
    %2702 = vdwg.mxu0
    %2703 = vrot.lane.b32.xlu0 %v513, 112
    %v2704 = vpop.permute.xlu0 %2703
    %2705 = vrot.lane.b32.xlu0 %v518, 112
    %v2706 = vpop.permute.xlu0 %2705
    %2707 = vrot.lane.b32.xlu0 %v523, 112
    %v2708 = vpop.permute.xlu0 %2707
    %2709 = vrot.lane.b32.xlu0 %v528, 112
    %v2710 = vpop.permute.xlu0 %2709
    %2711 = vrot.lane.b32.xlu0 %v533, 112
    %v2712 = vpop.permute.xlu0 %2711
    %2713 = vrot.lane.b32.xlu0 %v538, 112
    %v2714 = vpop.permute.xlu0 %2713
    %2715 = vrot.lane.b32.xlu0 %v543, 112
    %v2716 = vpop.permute.xlu0 %2715
    %2717 = vrot.lane.b32.xlu0 %v548, 112
    %v2718 = vpop.permute.xlu0 %2717
    %2719 = vrot.lane.b32.xlu0 %v513, 80
    %v2720 = vpop.permute.xlu0 %2719
    %2721 = vrot.lane.b32.xlu0 %v518, 80
    %v2722 = vpop.permute.xlu0 %2721
    %2723 = vrot.lane.b32.xlu0 %v523, 80
    %v2724 = vpop.permute.xlu0 %2723
    %2725 = vrot.lane.b32.xlu0 %v528, 80
    %v2726 = vpop.permute.xlu0 %2725
    %2727 = vrot.lane.b32.xlu0 %v533, 80
    %v2728 = vpop.permute.xlu0 %2727
    %2729 = vrot.lane.b32.xlu0 %v538, 80
    %v2730 = vpop.permute.xlu0 %2729
    %2731 = vrot.lane.b32.xlu0 %v543, 80
    %v2732 = vpop.permute.xlu0 %2731
    %2733 = vrot.lane.b32.xlu0 %v548, 80
    %v2734 = vpop.permute.xlu0 %2733
    %v2735 = vsel %vm619, %v2704, 0
    %v2737 = vsel %vm619, %v2706, 0
    %v2739 = vsel %vm619, %v2708, 0
    %v2741 = vsel %vm619, %v2710, 0
    %v2743 = vsel %vm619, %v2712, 0
    %v2745 = vsel %vm619, %v2714, 0
    %v2747 = vsel %vm619, %v2716, 0
    %v2749 = vsel %vm619, %v2718, 0
    %v2751 = vsel %vm619, %v2720, 0
    %v2753 = vsel %vm619, %v2722, 0
    %v2755 = vsel %vm619, %v2724, 0
    %v2757 = vsel %vm619, %v2726, 0
    %v2759 = vsel %vm619, %v2728, 0
    %v2761 = vsel %vm619, %v2730, 0
    %v2763 = vsel %vm619, %v2732, 0
    %v2765 = vsel %vm619, %v2734, 0
    %2767 = vmatprep.subr.mxu0 0.0
    %2768 = vmatpush1.xpose.msra.mxu0 %v2751
    %2769 = vmatprep.subr.mxu0 0.0
    %2770 = vmatpush1.xpose.msra.mxu0 %v2753
    %2771 = vmatprep.subr.mxu0 0.0
    %2772 = vmatpush1.xpose.msra.mxu0 %v2755
    %2773 = vmatprep.subr.mxu0 0.0
    %2774 = vmatpush1.xpose.msra.mxu0 %v2757
    %2775 = vmatprep.subr.mxu0 0.0
    %2776 = vmatpush1.xpose.msra.mxu0 %v2759
    %2777 = vmatprep.subr.mxu0 0.0
    %2778 = vmatpush1.xpose.msra.mxu0 %v2761
    %2779 = vmatprep.subr.mxu0 0.0
    %2780 = vmatpush1.xpose.msra.mxu0 %v2763
    %2781 = vmatprep.subr.mxu0 0.0
    %2782 = vmatpush1.xpose.msra.mxu0 %v2765
    %2783 = vmatprep.subr.mxu0 0.0
    %2784 = vmatpush1.xpose.msra.mxu0 0.0
    %2785 = vmatprep.subr.mxu0 0.0
    %2786 = vmatpush1.xpose.msra.mxu0 0.0
    %2787 = vmatprep.subr.mxu0 0.0
    %2788 = vmatpush1.xpose.msra.mxu0 0.0
    %2789 = vmatprep.subr.mxu0 0.0
    %2790 = vmatpush1.xpose.msra.mxu0 0.0
    %2791 = vmatprep.subr.mxu0 0.0
    %2792 = vmatpush1.xpose.msra.mxu0 0.0
    %2793 = vmatprep.subr.mxu0 0.0
    %2794 = vmatpush1.xpose.msra.mxu0 0.0
    %2795 = vmatprep.subr.mxu0 0.0
    %2796 = vmatpush1.xpose.msra.mxu0 0.0
    %2797 = vmatprep.subr.mxu0 0.0
    %2798 = vmatpush1.xpose.msra.mxu0 0.0
    %2799 = vmatprep.subr.mxu0 0.0
    %2800 = vmatpush1.xpose.msra.mxu0 0.0
    %2801 = vmatprep.subr.mxu0 0.0
    %2802 = vmatpush1.xpose.msra.mxu0 0.0
    %2803 = vmatprep.subr.mxu0 0.0
    %2804 = vmatpush1.xpose.msra.mxu0 0.0
    %2805 = vmatprep.subr.mxu0 0.0
    %2806 = vmatpush1.xpose.msra.mxu0 0.0
    %2807 = vmatprep.subr.mxu0 0.0
    %2808 = vmatpush1.xpose.msra.mxu0 0.0
    %2809 = vmatprep.subr.mxu0 0.0
    %2810 = vmatpush1.xpose.msra.mxu0 0.0
    %2811 = vmatprep.subr.mxu0 0.0
    %2812 = vmatpush1.xpose.msra.mxu0 0.0
    %2813 = vmatprep.subr.mxu0 0.0
    %2814 = vmatpush1.xpose.msra.mxu0 0.0
    %2815 = vmatprep.subr.mxu0 0.0
    %2816 = vmatpush1.xpose.msra.mxu0 0.0
    %2817 = vmatprep.subr.mxu0 0.0
    %2818 = vmatpush1.xpose.msra.mxu0 0.0
    %2819 = vmatprep.subr.mxu0 0.0
    %2820 = vmatpush1.xpose.msra.mxu0 0.0
    %2821 = vmatprep.subr.mxu0 0.0
    %2822 = vmatpush1.xpose.msra.mxu0 0.0
    %2823 = vmatprep.subr.mxu0 0.0
    %2824 = vmatpush1.xpose.msra.mxu0 0.0
    %2825 = vmatprep.subr.mxu0 0.0
    %2826 = vmatpush1.xpose.msra.mxu0 0.0
    %2827 = vmatprep.subr.mxu0 0.0
    %2828 = vmatpush1.xpose.msra.mxu0 0.0
    %2829 = vmatprep.subr.mxu0 0.0
    %2830 = vmatpush1.xpose.msra.mxu0 0.0
    %2831 = vmatprep.mubr.f32.mxu0 0.0
    %2832 = vmatmul.mubr.f32.gmra.mrb[0].mxu0 %v2735
    %v2833 = vpop.f32.mrb[0].mxu0
    %v2834 = vadd.f32 0.0, %v2833
    %v2835 = vpop.f32.mrb[0].mxu0
    %2836 = vmatprep.mubr.f32.mxu0 0.0
    %2837 = vmatmul.mubr.f32.gmra.mrb[0].mxu0 %v2737
    %v2838 = vpop.f32.mrb[0].mxu0
    %v2839 = vadd.f32 0.0, %v2838
    %v2840 = vpop.f32.mrb[0].mxu0
    %2841 = vmatprep.mubr.f32.mxu0 0.0
    %2842 = vmatmul.mubr.f32.gmra.mrb[0].mxu0 %v2739
    %v2843 = vpop.f32.mrb[0].mxu0
    %v2844 = vadd.f32 0.0, %v2843
    %v2845 = vpop.f32.mrb[0].mxu0
    %2846 = vmatprep.mubr.f32.mxu0 0.0
    %2847 = vmatmul.mubr.f32.gmra.mrb[0].mxu0 %v2741
    %v2848 = vpop.f32.mrb[0].mxu0
    %v2849 = vadd.f32 0.0, %v2848
    %v2850 = vpop.f32.mrb[0].mxu0
    %2851 = vmatprep.mubr.f32.mxu0 0.0
    %2852 = vmatmul.mubr.f32.gmra.mrb[0].mxu0 %v2743
    %v2853 = vpop.f32.mrb[0].mxu0
    %v2854 = vadd.f32 0.0, %v2853
    %v2855 = vpop.f32.mrb[0].mxu0
    %2856 = vmatprep.mubr.f32.mxu0 0.0
    %2857 = vmatmul.mubr.f32.gmra.mrb[0].mxu0 %v2745
    %v2858 = vpop.f32.mrb[0].mxu0
    %v2859 = vadd.f32 0.0, %v2858
    %v2860 = vpop.f32.mrb[0].mxu0
    %2861 = vmatprep.mubr.f32.mxu0 0.0
    %2862 = vmatmul.mubr.f32.gmra.mrb[0].mxu0 %v2747
    %v2863 = vpop.f32.mrb[0].mxu0
    %v2864 = vadd.f32 0.0, %v2863
    %v2865 = vpop.f32.mrb[0].mxu0
    %2866 = vmatprep.mubr.f32.mxu0 0.0
    %2867 = vmatmul.mubr.f32.gmra.mrb[0].mxu0 %v2749
    %v2868 = vpop.f32.mrb[0].mxu0
    %v2869 = vadd.f32 0.0, %v2868
    %v2870 = vpop.f32.mrb[0].mxu0
    %2871 = vdwg.mxu0
    %2872 = vrot.lane.b32.xlu0 %v553, 112
    %v2873 = vpop.permute.xlu0 %2872
    %2874 = vrot.lane.b32.xlu0 %v558, 112
    %v2875 = vpop.permute.xlu0 %2874
    %2876 = vrot.lane.b32.xlu0 %v563, 112
    %v2877 = vpop.permute.xlu0 %2876
    %2878 = vrot.lane.b32.xlu0 %v568, 112
    %v2879 = vpop.permute.xlu0 %2878
    %2880 = vrot.lane.b32.xlu0 %v573, 112
    %v2881 = vpop.permute.xlu0 %2880
    %2882 = vrot.lane.b32.xlu0 %v578, 112
    %v2883 = vpop.permute.xlu0 %2882
    %2884 = vrot.lane.b32.xlu0 %v583, 112
    %v2885 = vpop.permute.xlu0 %2884
    %2886 = vrot.lane.b32.xlu0 %v588, 112
    %v2887 = vpop.permute.xlu0 %2886
    %2888 = vrot.lane.b32.xlu0 %v553, 80
    %v2889 = vpop.permute.xlu0 %2888
    %2890 = vrot.lane.b32.xlu0 %v558, 80
    %v2891 = vpop.permute.xlu0 %2890
    %2892 = vrot.lane.b32.xlu0 %v563, 80
    %v2893 = vpop.permute.xlu0 %2892
    %2894 = vrot.lane.b32.xlu0 %v568, 80
    %v2895 = vpop.permute.xlu0 %2894
    %2896 = vrot.lane.b32.xlu0 %v573, 80
    %v2897 = vpop.permute.xlu0 %2896
    %2898 = vrot.lane.b32.xlu0 %v578, 80
    %v2899 = vpop.permute.xlu0 %2898
    %2900 = vrot.lane.b32.xlu0 %v583, 80
    %v2901 = vpop.permute.xlu0 %2900
    %2902 = vrot.lane.b32.xlu0 %v588, 80
    %v2903 = vpop.permute.xlu0 %2902
    %v2904 = vsel %vm619, %v2873, 0
    %v2906 = vsel %vm619, %v2875, 0
    %v2908 = vsel %vm619, %v2877, 0
    %v2910 = vsel %vm619, %v2879, 0
    %v2912 = vsel %vm619, %v2881, 0
    %v2914 = vsel %vm619, %v2883, 0
    %v2916 = vsel %vm619, %v2885, 0
    %v2918 = vsel %vm619, %v2887, 0
    %v2920 = vsel %vm619, %v2889, 0
    %v2922 = vsel %vm619, %v2891, 0
    %v2924 = vsel %vm619, %v2893, 0
    %v2926 = vsel %vm619, %v2895, 0
    %v2928 = vsel %vm619, %v2897, 0
    %v2930 = vsel %vm619, %v2899, 0
    %v2932 = vsel %vm619, %v2901, 0
    %v2934 = vsel %vm619, %v2903, 0
    %2936 = vmatprep.subr.mxu0 0.0
    %2937 = vmatpush1.xpose.msra.mxu0 %v2920
    %2938 = vmatprep.subr.mxu0 0.0
    %2939 = vmatpush1.xpose.msra.mxu0 %v2922
    %2940 = vmatprep.subr.mxu0 0.0
    %2941 = vmatpush1.xpose.msra.mxu0 %v2924
    %2942 = vmatprep.subr.mxu0 0.0
    %2943 = vmatpush1.xpose.msra.mxu0 %v2926
    %2944 = vmatprep.subr.mxu0 0.0
    %2945 = vmatpush1.xpose.msra.mxu0 %v2928
    %2946 = vmatprep.subr.mxu0 0.0
    %2947 = vmatpush1.xpose.msra.mxu0 %v2930
    %2948 = vmatprep.subr.mxu0 0.0
    %2949 = vmatpush1.xpose.msra.mxu0 %v2932
    %2950 = vmatprep.subr.mxu0 0.0
    %2951 = vmatpush1.xpose.msra.mxu0 %v2934
    %2952 = vmatprep.subr.mxu0 0.0
    %2953 = vmatpush1.xpose.msra.mxu0 0.0
    %2954 = vmatprep.subr.mxu0 0.0
    %2955 = vmatpush1.xpose.msra.mxu0 0.0
    %2956 = vmatprep.subr.mxu0 0.0
    %2957 = vmatpush1.xpose.msra.mxu0 0.0
    %2958 = vmatprep.subr.mxu0 0.0
    %2959 = vmatpush1.xpose.msra.mxu0 0.0
    %2960 = vmatprep.subr.mxu0 0.0
    %2961 = vmatpush1.xpose.msra.mxu0 0.0
    %2962 = vmatprep.subr.mxu0 0.0
    %2963 = vmatpush1.xpose.msra.mxu0 0.0
    %2964 = vmatprep.subr.mxu0 0.0
    %2965 = vmatpush1.xpose.msra.mxu0 0.0
    %2966 = vmatprep.subr.mxu0 0.0
    %2967 = vmatpush1.xpose.msra.mxu0 0.0
    %2968 = vmatprep.subr.mxu0 0.0
    %2969 = vmatpush1.xpose.msra.mxu0 0.0
    %2970 = vmatprep.subr.mxu0 0.0
    %2971 = vmatpush1.xpose.msra.mxu0 0.0
    %2972 = vmatprep.subr.mxu0 0.0
    %2973 = vmatpush1.xpose.msra.mxu0 0.0
    %2974 = vmatprep.subr.mxu0 0.0
    %2975 = vmatpush1.xpose.msra.mxu0 0.0
    %2976 = vmatprep.subr.mxu0 0.0
    %2977 = vmatpush1.xpose.msra.mxu0 0.0
    %2978 = vmatprep.subr.mxu0 0.0
    %2979 = vmatpush1.xpose.msra.mxu0 0.0
    %2980 = vmatprep.subr.mxu0 0.0
    %2981 = vmatpush1.xpose.msra.mxu0 0.0
    %2982 = vmatprep.subr.mxu0 0.0
    %2983 = vmatpush1.xpose.msra.mxu0 0.0
    %2984 = vmatprep.subr.mxu0 0.0
    %2985 = vmatpush1.xpose.msra.mxu0 0.0
    %2986 = vmatprep.subr.mxu0 0.0
    %2987 = vmatpush1.xpose.msra.mxu0 0.0
    %2988 = vmatprep.subr.mxu0 0.0
    %2989 = vmatpush1.xpose.msra.mxu0 0.0
    %2990 = vmatprep.subr.mxu0 0.0
    %2991 = vmatpush1.xpose.msra.mxu0 0.0
    %2992 = vmatprep.subr.mxu0 0.0
    %2993 = vmatpush1.xpose.msra.mxu0 0.0
    %2994 = vmatprep.subr.mxu0 0.0
    %2995 = vmatpush1.xpose.msra.mxu0 0.0
    %2996 = vmatprep.subr.mxu0 0.0
    %2997 = vmatpush1.xpose.msra.mxu0 0.0
    %2998 = vmatprep.subr.mxu0 0.0
    %2999 = vmatpush1.xpose.msra.mxu0 0.0
    %3000 = vmatprep.mubr.f32.mxu0 0.0
    %3001 = vmatmul.mubr.f32.gmra.mrb[0].mxu0 %v2904
    %v3002 = vpop.f32.mrb[0].mxu0
    %v3003 = vadd.f32 0.0, %v3002
    %v3004 = vpop.f32.mrb[0].mxu0
    %3005 = vmatprep.mubr.f32.mxu0 0.0
    %3006 = vmatmul.mubr.f32.gmra.mrb[0].mxu0 %v2906
    %v3007 = vpop.f32.mrb[0].mxu0
    %v3008 = vadd.f32 0.0, %v3007
    %v3009 = vpop.f32.mrb[0].mxu0
    %3010 = vmatprep.mubr.f32.mxu0 0.0
    %3011 = vmatmul.mubr.f32.gmra.mrb[0].mxu0 %v2908
    %v3012 = vpop.f32.mrb[0].mxu0
    %v3013 = vadd.f32 0.0, %v3012
    %v3014 = vpop.f32.mrb[0].mxu0
    %3015 = vmatprep.mubr.f32.mxu0 0.0
    %3016 = vmatmul.mubr.f32.gmra.mrb[0].mxu0 %v2910
    %v3017 = vpop.f32.mrb[0].mxu0
    %v3018 = vadd.f32 0.0, %v3017
    %v3019 = vpop.f32.mrb[0].mxu0
    %3020 = vmatprep.mubr.f32.mxu0 0.0
    %3021 = vmatmul.mubr.f32.gmra.mrb[0].mxu0 %v2912
    %v3022 = vpop.f32.mrb[0].mxu0
    %v3023 = vadd.f32 0.0, %v3022
    %v3024 = vpop.f32.mrb[0].mxu0
    %3025 = vmatprep.mubr.f32.mxu0 0.0
    %3026 = vmatmul.mubr.f32.gmra.mrb[0].mxu0 %v2914
    %v3027 = vpop.f32.mrb[0].mxu0
    %v3028 = vadd.f32 0.0, %v3027
    %v3029 = vpop.f32.mrb[0].mxu0
    %3030 = vmatprep.mubr.f32.mxu0 0.0
    %3031 = vmatmul.mubr.f32.gmra.mrb[0].mxu0 %v2916
    %v3032 = vpop.f32.mrb[0].mxu0
    %v3033 = vadd.f32 0.0, %v3032
    %v3034 = vpop.f32.mrb[0].mxu0
    %3035 = vmatprep.mubr.f32.mxu0 0.0
    %3036 = vmatmul.mubr.f32.gmra.mrb[0].mxu0 %v2918
    %v3037 = vpop.f32.mrb[0].mxu0
    %v3038 = vadd.f32 0.0, %v3037
    %v3039 = vpop.f32.mrb[0].mxu0
    %3040 = vdwg.mxu0
    %v3041 = vsel %vm918, %v2834, -inf
    %3042 = vmax.xlane.f32.xlu0 %v3041
    %v3043 = vpop.xlane.xlu0 %3042
    %v3044 = vsel %vm918, %v2839, -inf
    %3045 = vmax.xlane.f32.xlu0 %v3044
    %v3046 = vpop.xlane.xlu0 %3045
    %v3047 = vsel %vm918, %v2844, -inf
    %3048 = vmax.xlane.f32.xlu0 %v3047
    %v3049 = vpop.xlane.xlu0 %3048
    %v3050 = vsel %vm918, %v2849, -inf
    %3051 = vmax.xlane.f32.xlu0 %v3050
    %v3052 = vpop.xlane.xlu0 %3051
    %v3053 = vsel %vm918, %v2854, -inf
    %3054 = vmax.xlane.f32.xlu0 %v3053
    %v3055 = vpop.xlane.xlu0 %3054
    %v3056 = vsel %vm918, %v2859, -inf
    %3057 = vmax.xlane.f32.xlu0 %v3056
    %v3058 = vpop.xlane.xlu0 %3057
    %v3059 = vsel %vm918, %v2864, -inf
    %3060 = vmax.xlane.f32.xlu0 %v3059
    %v3061 = vpop.xlane.xlu0 %3060
    %v3062 = vsel %vm918, %v2869, -inf
    %3063 = vmax.xlane.f32.xlu0 %v3062
    %v3064 = vpop.xlane.xlu0 %3063
    %v3065 = vsel %vm918, %v3003, -inf
    %3066 = vmax.xlane.f32.xlu0 %v3065
    %v3067 = vpop.xlane.xlu0 %3066
    %v3068 = vsel %vm918, %v3008, -inf
    %3069 = vmax.xlane.f32.xlu0 %v3068
    %v3070 = vpop.xlane.xlu0 %3069
    %v3071 = vsel %vm918, %v3013, -inf
    %3072 = vmax.xlane.f32.xlu0 %v3071
    %v3073 = vpop.xlane.xlu0 %3072
    %v3074 = vsel %vm918, %v3018, -inf
    %3075 = vmax.xlane.f32.xlu0 %v3074
    %v3076 = vpop.xlane.xlu0 %3075
    %v3077 = vsel %vm918, %v3023, -inf
    %3078 = vmax.xlane.f32.xlu0 %v3077
    %v3079 = vpop.xlane.xlu0 %3078
    %v3080 = vsel %vm918, %v3028, -inf
    %3081 = vmax.xlane.f32.xlu0 %v3080
    %v3082 = vpop.xlane.xlu0 %3081
    %v3083 = vsel %vm918, %v3033, -inf
    %3084 = vmax.xlane.f32.xlu0 %v3083
    %v3085 = vpop.xlane.xlu0 %3084
    %v3086 = vsel %vm918, %v3038, -inf
    %3087 = vmax.xlane.f32.xlu0 %v3086
    %v3088 = vpop.xlane.xlu0 %3087
    %v3089 = vsub.f32 %v2834, %v3043
    %v3090 = vsub.f32 %v2839, %v3046
    %v3091 = vsub.f32 %v2844, %v3049
    %v3092 = vsub.f32 %v2849, %v3052
    %v3093 = vsub.f32 %v2854, %v3055
    %v3094 = vsub.f32 %v2859, %v3058
    %v3095 = vsub.f32 %v2864, %v3061
    %v3096 = vsub.f32 %v2869, %v3064
    %v3097 = vsub.f32 %v3003, %v3067
    %v3098 = vsub.f32 %v3008, %v3070
    %v3099 = vsub.f32 %v3013, %v3073
    %v3100 = vsub.f32 %v3018, %v3076
    %v3101 = vsub.f32 %v3023, %v3079
    %v3102 = vsub.f32 %v3028, %v3082
    %v3103 = vsub.f32 %v3033, %v3085
    %v3104 = vsub.f32 %v3038, %v3088
    %v3105 = vmul.f32 %v3089, 1.442695
    %v3106 = vpow.pop %v3105
    %v3107 = vmul.f32 %v3090, 1.442695
    %v3108 = vpow.pop %v3107
    %v3109 = vmul.f32 %v3091, 1.442695
    %v3110 = vpow.pop %v3109
    %v3111 = vmul.f32 %v3092, 1.442695
    %v3112 = vpow.pop %v3111
    %v3113 = vmul.f32 %v3093, 1.442695
    %v3114 = vpow.pop %v3113
    %v3115 = vmul.f32 %v3094, 1.442695
    %v3116 = vpow.pop %v3115
    %v3117 = vmul.f32 %v3095, 1.442695
    %v3118 = vpow.pop %v3117
    %v3119 = vmul.f32 %v3096, 1.442695
    %v3120 = vpow.pop %v3119
    %v3121 = vmul.f32 %v3097, 1.442695
    %v3122 = vpow.pop %v3121
    %v3123 = vmul.f32 %v3098, 1.442695
    %v3124 = vpow.pop %v3123
    %v3125 = vmul.f32 %v3099, 1.442695
    %v3126 = vpow.pop %v3125
    %v3127 = vmul.f32 %v3100, 1.442695
    %v3128 = vpow.pop %v3127
    %v3129 = vmul.f32 %v3101, 1.442695
    %v3130 = vpow.pop %v3129
    %v3131 = vmul.f32 %v3102, 1.442695
    %v3132 = vpow.pop %v3131
    %v3133 = vmul.f32 %v3103, 1.442695
    %v3134 = vpow.pop %v3133
    %v3135 = vmul.f32 %v3104, 1.442695
    %v3136 = vpow.pop %v3135
    %v3137 = vsel %vm918, %v3106, 0.0
    %3138 = vadd.xlane.f32.xlu0 %v3137
    %v3139 = vpop.xlane.xlu0 %3138
    %v3140 = vsel %vm918, %v3108, 0.0
    %3141 = vadd.xlane.f32.xlu0 %v3140
    %v3142 = vpop.xlane.xlu0 %3141
    %v3143 = vsel %vm918, %v3110, 0.0
    %3144 = vadd.xlane.f32.xlu0 %v3143
    %v3145 = vpop.xlane.xlu0 %3144
    %v3146 = vsel %vm918, %v3112, 0.0
    %3147 = vadd.xlane.f32.xlu0 %v3146
    %v3148 = vpop.xlane.xlu0 %3147
    %v3149 = vsel %vm918, %v3114, 0.0
    %3150 = vadd.xlane.f32.xlu0 %v3149
    %v3151 = vpop.xlane.xlu0 %3150
    %v3152 = vsel %vm918, %v3116, 0.0
    %3153 = vadd.xlane.f32.xlu0 %v3152
    %v3154 = vpop.xlane.xlu0 %3153
    %v3155 = vsel %vm918, %v3118, 0.0
    %3156 = vadd.xlane.f32.xlu0 %v3155
    %v3157 = vpop.xlane.xlu0 %3156
    %v3158 = vsel %vm918, %v3120, 0.0
    %3159 = vadd.xlane.f32.xlu0 %v3158
    %v3160 = vpop.xlane.xlu0 %3159
    %v3161 = vsel %vm918, %v3122, 0.0
    %3162 = vadd.xlane.f32.xlu0 %v3161
    %v3163 = vpop.xlane.xlu0 %3162
    %v3164 = vsel %vm918, %v3124, 0.0
    %3165 = vadd.xlane.f32.xlu0 %v3164
    %v3166 = vpop.xlane.xlu0 %3165
    %v3167 = vsel %vm918, %v3126, 0.0
    %3168 = vadd.xlane.f32.xlu0 %v3167
    %v3169 = vpop.xlane.xlu0 %3168
    %v3170 = vsel %vm918, %v3128, 0.0
    %3171 = vadd.xlane.f32.xlu0 %v3170
    %v3172 = vpop.xlane.xlu0 %3171
    %v3173 = vsel %vm918, %v3130, 0.0
    %3174 = vadd.xlane.f32.xlu0 %v3173
    %v3175 = vpop.xlane.xlu0 %3174
    %v3176 = vsel %vm918, %v3132, 0.0
    %3177 = vadd.xlane.f32.xlu0 %v3176
    %v3178 = vpop.xlane.xlu0 %3177
    %v3179 = vsel %vm918, %v3134, 0.0
    %3180 = vadd.xlane.f32.xlu0 %v3179
    %v3181 = vpop.xlane.xlu0 %3180
    %v3182 = vsel %vm918, %v3136, 0.0
    %3183 = vadd.xlane.f32.xlu0 %v3182
    %v3184 = vpop.xlane.xlu0 %3183
    %3185 = vrot.lane.b32.xlu0 %v513, 48
    %v3186 = vpop.permute.xlu0 %3185
    %3187 = vrot.lane.b32.xlu0 %v518, 48
    %v3188 = vpop.permute.xlu0 %3187
    %3189 = vrot.lane.b32.xlu0 %v523, 48
    %v3190 = vpop.permute.xlu0 %3189
    %3191 = vrot.lane.b32.xlu0 %v528, 48
    %v3192 = vpop.permute.xlu0 %3191
    %3193 = vrot.lane.b32.xlu0 %v533, 48
    %v3194 = vpop.permute.xlu0 %3193
    %3195 = vrot.lane.b32.xlu0 %v538, 48
    %v3196 = vpop.permute.xlu0 %3195
    %3197 = vrot.lane.b32.xlu0 %v543, 48
    %v3198 = vpop.permute.xlu0 %3197
    %3199 = vrot.lane.b32.xlu0 %v548, 48
    %v3200 = vpop.permute.xlu0 %3199
    %v3210 = vsel %vm918, %v3106, 0
    %v3213 = vsel %vm918, %v3108, 0
    %v3216 = vsel %vm918, %v3110, 0
    %v3219 = vsel %vm918, %v3112, 0
    %v3222 = vsel %vm918, %v3114, 0
    %v3225 = vsel %vm918, %v3116, 0
    %v3228 = vsel %vm918, %v3118, 0
    %v3231 = vsel %vm918, %v3120, 0
    %3233 = vmatprep.subr.mxu0 0.0
    %3234 = vmatpush1.msra.mxu0 %v3186
    %3235 = vmatprep.subr.mxu0 0.0
    %3236 = vmatpush1.msra.mxu0 %v3188
    %3237 = vmatprep.subr.mxu0 0.0
    %3238 = vmatpush1.msra.mxu0 %v3190
    %3239 = vmatprep.subr.mxu0 0.0
    %3240 = vmatpush1.msra.mxu0 %v3192
    %3241 = vmatprep.subr.mxu0 0.0
    %3242 = vmatpush1.msra.mxu0 %v3194
    %3243 = vmatprep.subr.mxu0 0.0
    %3244 = vmatpush1.msra.mxu0 %v3196
    %3245 = vmatprep.subr.mxu0 0.0
    %3246 = vmatpush1.msra.mxu0 %v3198
    %3247 = vmatprep.subr.mxu0 0.0
    %3248 = vmatpush1.msra.mxu0 %v3200
    %3249 = vmatprep.subr.mxu0 0.0
    %3250 = vmatpush1.msra.mxu0 0.0
    %3251 = vmatprep.subr.mxu0 0.0
    %3252 = vmatpush1.msra.mxu0 0.0
    %3253 = vmatprep.subr.mxu0 0.0
    %3254 = vmatpush1.msra.mxu0 0.0
    %3255 = vmatprep.subr.mxu0 0.0
    %3256 = vmatpush1.msra.mxu0 0.0
    %3257 = vmatprep.subr.mxu0 0.0
    %3258 = vmatpush1.msra.mxu0 0.0
    %3259 = vmatprep.subr.mxu0 0.0
    %3260 = vmatpush1.msra.mxu0 0.0
    %3261 = vmatprep.subr.mxu0 0.0
    %3262 = vmatpush1.msra.mxu0 0.0
    %3263 = vmatprep.subr.mxu0 0.0
    %3264 = vmatpush1.msra.mxu0 0.0
    %3265 = vmatprep.subr.mxu0 0.0
    %3266 = vmatpush1.msra.mxu0 0.0
    %3267 = vmatprep.subr.mxu0 0.0
    %3268 = vmatpush1.msra.mxu0 0.0
    %3269 = vmatprep.subr.mxu0 0.0
    %3270 = vmatpush1.msra.mxu0 0.0
    %3271 = vmatprep.subr.mxu0 0.0
    %3272 = vmatpush1.msra.mxu0 0.0
    %3273 = vmatprep.subr.mxu0 0.0
    %3274 = vmatpush1.msra.mxu0 0.0
    %3275 = vmatprep.subr.mxu0 0.0
    %3276 = vmatpush1.msra.mxu0 0.0
    %3277 = vmatprep.subr.mxu0 0.0
    %3278 = vmatpush1.msra.mxu0 0.0
    %3279 = vmatprep.subr.mxu0 0.0
    %3280 = vmatpush1.msra.mxu0 0.0
    %3281 = vmatprep.subr.mxu0 0.0
    %3282 = vmatpush1.msra.mxu0 0.0
    %3283 = vmatprep.subr.mxu0 0.0
    %3284 = vmatpush1.msra.mxu0 0.0
    %3285 = vmatprep.subr.mxu0 0.0
    %3286 = vmatpush1.msra.mxu0 0.0
    %3287 = vmatprep.subr.mxu0 0.0
    %3288 = vmatpush1.msra.mxu0 0.0
    %3289 = vmatprep.subr.mxu0 0.0
    %3290 = vmatpush1.msra.mxu0 0.0
    %3291 = vmatprep.subr.mxu0 0.0
    %3292 = vmatpush1.msra.mxu0 0.0
    %3293 = vmatprep.subr.mxu0 0.0
    %3294 = vmatpush1.msra.mxu0 0.0
    %3295 = vmatprep.subr.mxu0 0.0
    %3296 = vmatpush1.msra.mxu0 0.0
    %3297 = vmatprep.mubr.f32.mxu0 0.0
    %3298 = vmatmul.mubr.f32.gmra.mrb[0].mxu0 %v3210
    %v3299 = vpop.f32.mrb[0].mxu0
    %v3300 = vadd.f32 0.0, %v3299
    %v3301 = vpop.f32.mrb[0].mxu0
    %3302 = vmatprep.mubr.f32.mxu0 0.0
    %3303 = vmatmul.mubr.f32.gmra.mrb[0].mxu0 %v3213
    %v3304 = vpop.f32.mrb[0].mxu0
    %v3305 = vadd.f32 0.0, %v3304
    %v3306 = vpop.f32.mrb[0].mxu0
    %3307 = vmatprep.mubr.f32.mxu0 0.0
    %3308 = vmatmul.mubr.f32.gmra.mrb[0].mxu0 %v3216
    %v3309 = vpop.f32.mrb[0].mxu0
    %v3310 = vadd.f32 0.0, %v3309
    %v3311 = vpop.f32.mrb[0].mxu0
    %3312 = vmatprep.mubr.f32.mxu0 0.0
    %3313 = vmatmul.mubr.f32.gmra.mrb[0].mxu0 %v3219
    %v3314 = vpop.f32.mrb[0].mxu0
    %v3315 = vadd.f32 0.0, %v3314
    %v3316 = vpop.f32.mrb[0].mxu0
    %3317 = vmatprep.mubr.f32.mxu0 0.0
    %3318 = vmatmul.mubr.f32.gmra.mrb[0].mxu0 %v3222
    %v3319 = vpop.f32.mrb[0].mxu0
    %v3320 = vadd.f32 0.0, %v3319
    %v3321 = vpop.f32.mrb[0].mxu0
    %3322 = vmatprep.mubr.f32.mxu0 0.0
    %3323 = vmatmul.mubr.f32.gmra.mrb[0].mxu0 %v3225
    %v3324 = vpop.f32.mrb[0].mxu0
    %v3325 = vadd.f32 0.0, %v3324
    %v3326 = vpop.f32.mrb[0].mxu0
    %3327 = vmatprep.mubr.f32.mxu0 0.0
    %3328 = vmatmul.mubr.f32.gmra.mrb[0].mxu0 %v3228
    %v3329 = vpop.f32.mrb[0].mxu0
    %v3330 = vadd.f32 0.0, %v3329
    %v3331 = vpop.f32.mrb[0].mxu0
    %3332 = vmatprep.mubr.f32.mxu0 0.0
    %3333 = vmatmul.mubr.f32.gmra.mrb[0].mxu0 %v3231
    %v3334 = vpop.f32.mrb[0].mxu0
    %v3335 = vadd.f32 0.0, %v3334
    %v3336 = vpop.f32.mrb[0].mxu0
    %3337 = vdwg.mxu0
    %3338 = vrot.lane.b32.xlu0 %v553, 48
    %v3339 = vpop.permute.xlu0 %3338
    %3340 = vrot.lane.b32.xlu0 %v558, 48
    %v3341 = vpop.permute.xlu0 %3340
    %3342 = vrot.lane.b32.xlu0 %v563, 48
    %v3343 = vpop.permute.xlu0 %3342
    %3344 = vrot.lane.b32.xlu0 %v568, 48
    %v3345 = vpop.permute.xlu0 %3344
    %3346 = vrot.lane.b32.xlu0 %v573, 48
    %v3347 = vpop.permute.xlu0 %3346
    %3348 = vrot.lane.b32.xlu0 %v578, 48
    %v3349 = vpop.permute.xlu0 %3348
    %3350 = vrot.lane.b32.xlu0 %v583, 48
    %v3351 = vpop.permute.xlu0 %3350
    %3352 = vrot.lane.b32.xlu0 %v588, 48
    %v3353 = vpop.permute.xlu0 %3352
    %v3363 = vsel %vm918, %v3122, 0
    %v3366 = vsel %vm918, %v3124, 0
    %v3369 = vsel %vm918, %v3126, 0
    %v3372 = vsel %vm918, %v3128, 0
    %v3375 = vsel %vm918, %v3130, 0
    %v3378 = vsel %vm918, %v3132, 0
    %v3381 = vsel %vm918, %v3134, 0
    %v3384 = vsel %vm918, %v3136, 0
    %3386 = vmatprep.subr.mxu0 0.0
    %3387 = vmatpush1.msra.mxu0 %v3339
    %3388 = vmatprep.subr.mxu0 0.0
    %3389 = vmatpush1.msra.mxu0 %v3341
    %3390 = vmatprep.subr.mxu0 0.0
    %3391 = vmatpush1.msra.mxu0 %v3343
    %3392 = vmatprep.subr.mxu0 0.0
    %3393 = vmatpush1.msra.mxu0 %v3345
    %3394 = vmatprep.subr.mxu0 0.0
    %3395 = vmatpush1.msra.mxu0 %v3347
    %3396 = vmatprep.subr.mxu0 0.0
    %3397 = vmatpush1.msra.mxu0 %v3349
    %3398 = vmatprep.subr.mxu0 0.0
    %3399 = vmatpush1.msra.mxu0 %v3351
    %3400 = vmatprep.subr.mxu0 0.0
    %3401 = vmatpush1.msra.mxu0 %v3353
    %3402 = vmatprep.subr.mxu0 0.0
    %3403 = vmatpush1.msra.mxu0 0.0
    %3404 = vmatprep.subr.mxu0 0.0
    %3405 = vmatpush1.msra.mxu0 0.0
    %3406 = vmatprep.subr.mxu0 0.0
    %3407 = vmatpush1.msra.mxu0 0.0
    %3408 = vmatprep.subr.mxu0 0.0
    %3409 = vmatpush1.msra.mxu0 0.0
    %3410 = vmatprep.subr.mxu0 0.0
    %3411 = vmatpush1.msra.mxu0 0.0
    %3412 = vmatprep.subr.mxu0 0.0
    %3413 = vmatpush1.msra.mxu0 0.0
    %3414 = vmatprep.subr.mxu0 0.0
    %3415 = vmatpush1.msra.mxu0 0.0
    %3416 = vmatprep.subr.mxu0 0.0
    %3417 = vmatpush1.msra.mxu0 0.0
    %3418 = vmatprep.subr.mxu0 0.0
    %3419 = vmatpush1.msra.mxu0 0.0
    %3420 = vmatprep.subr.mxu0 0.0
    %3421 = vmatpush1.msra.mxu0 0.0
    %3422 = vmatprep.subr.mxu0 0.0
    %3423 = vmatpush1.msra.mxu0 0.0
    %3424 = vmatprep.subr.mxu0 0.0
    %3425 = vmatpush1.msra.mxu0 0.0
    %3426 = vmatprep.subr.mxu0 0.0
    %3427 = vmatpush1.msra.mxu0 0.0
    %3428 = vmatprep.subr.mxu0 0.0
    %3429 = vmatpush1.msra.mxu0 0.0
    %3430 = vmatprep.subr.mxu0 0.0
    %3431 = vmatpush1.msra.mxu0 0.0
    %3432 = vmatprep.subr.mxu0 0.0
    %3433 = vmatpush1.msra.mxu0 0.0
    %3434 = vmatprep.subr.mxu0 0.0
    %3435 = vmatpush1.msra.mxu0 0.0
    %3436 = vmatprep.subr.mxu0 0.0
    %3437 = vmatpush1.msra.mxu0 0.0
    %3438 = vmatprep.subr.mxu0 0.0
    %3439 = vmatpush1.msra.mxu0 0.0
    %3440 = vmatprep.subr.mxu0 0.0
    %3441 = vmatpush1.msra.mxu0 0.0
    %3442 = vmatprep.subr.mxu0 0.0
    %3443 = vmatpush1.msra.mxu0 0.0
    %3444 = vmatprep.subr.mxu0 0.0
    %3445 = vmatpush1.msra.mxu0 0.0
    %3446 = vmatprep.subr.mxu0 0.0
    %3447 = vmatpush1.msra.mxu0 0.0
    %3448 = vmatprep.subr.mxu0 0.0
    %3449 = vmatpush1.msra.mxu0 0.0
    %3450 = vmatprep.mubr.f32.mxu0 0.0
    %3451 = vmatmul.mubr.f32.gmra.mrb[0].mxu0 %v3363
    %v3452 = vpop.f32.mrb[0].mxu0
    %v3453 = vadd.f32 0.0, %v3452
    %v3454 = vpop.f32.mrb[0].mxu0
    %3455 = vmatprep.mubr.f32.mxu0 0.0
    %3456 = vmatmul.mubr.f32.gmra.mrb[0].mxu0 %v3366
    %v3457 = vpop.f32.mrb[0].mxu0
    %v3458 = vadd.f32 0.0, %v3457
    %v3459 = vpop.f32.mrb[0].mxu0
    %3460 = vmatprep.mubr.f32.mxu0 0.0
    %3461 = vmatmul.mubr.f32.gmra.mrb[0].mxu0 %v3369
    %v3462 = vpop.f32.mrb[0].mxu0
    %v3463 = vadd.f32 0.0, %v3462
    %v3464 = vpop.f32.mrb[0].mxu0
    %3465 = vmatprep.mubr.f32.mxu0 0.0
    %3466 = vmatmul.mubr.f32.gmra.mrb[0].mxu0 %v3372
    %v3467 = vpop.f32.mrb[0].mxu0
    %v3468 = vadd.f32 0.0, %v3467
    %v3469 = vpop.f32.mrb[0].mxu0
    %3470 = vmatprep.mubr.f32.mxu0 0.0
    %3471 = vmatmul.mubr.f32.gmra.mrb[0].mxu0 %v3375
    %v3472 = vpop.f32.mrb[0].mxu0
    %v3473 = vadd.f32 0.0, %v3472
    %v3474 = vpop.f32.mrb[0].mxu0
    %3475 = vmatprep.mubr.f32.mxu0 0.0
    %3476 = vmatmul.mubr.f32.gmra.mrb[0].mxu0 %v3378
    %v3477 = vpop.f32.mrb[0].mxu0
    %v3478 = vadd.f32 0.0, %v3477
    %v3479 = vpop.f32.mrb[0].mxu0
    %3480 = vmatprep.mubr.f32.mxu0 0.0
    %3481 = vmatmul.mubr.f32.gmra.mrb[0].mxu0 %v3381
    %v3482 = vpop.f32.mrb[0].mxu0
    %v3483 = vadd.f32 0.0, %v3482
    %v3484 = vpop.f32.mrb[0].mxu0
    %3485 = vmatprep.mubr.f32.mxu0 0.0
    %3486 = vmatmul.mubr.f32.gmra.mrb[0].mxu0 %v3384
    %v3487 = vpop.f32.mrb[0].mxu0
    %v3488 = vadd.f32 0.0, %v3487
    %v3489 = vpop.f32.mrb[0].mxu0
    %3490 = vdwg.mxu0
    %v3491 = vrcp.pop %v3139
    %v3492 = vrcp.pop %v3142
    %v3493 = vrcp.pop %v3145
    %v3494 = vrcp.pop %v3148
    %v3495 = vrcp.pop %v3151
    %v3496 = vrcp.pop %v3154
    %v3497 = vrcp.pop %v3157
    %v3498 = vrcp.pop %v3160
    %v3499 = vrcp.pop %v3163
    %v3500 = vrcp.pop %v3166
    %v3501 = vrcp.pop %v3169
    %v3502 = vrcp.pop %v3172
    %v3503 = vrcp.pop %v3175
    %v3504 = vrcp.pop %v3178
    %v3505 = vrcp.pop %v3181
    %v3506 = vrcp.pop %v3184
    %v3507 = vmul.f32 %v3139, %v3491
    %v3508 = vmul.f32 %v3142, %v3492
    %v3509 = vmul.f32 %v3145, %v3493
    %v3510 = vmul.f32 %v3148, %v3494
    %v3511 = vmul.f32 %v3151, %v3495
    %v3512 = vmul.f32 %v3154, %v3496
    %v3513 = vmul.f32 %v3157, %v3497
    %v3514 = vmul.f32 %v3160, %v3498
    %v3515 = vmul.f32 %v3163, %v3499
    %v3516 = vmul.f32 %v3166, %v3500
    %v3517 = vmul.f32 %v3169, %v3501
    %v3518 = vmul.f32 %v3172, %v3502
    %v3519 = vmul.f32 %v3175, %v3503
    %v3520 = vmul.f32 %v3178, %v3504
    %v3521 = vmul.f32 %v3181, %v3505
    %v3522 = vmul.f32 %v3184, %v3506
    %v3523 = vsub.f32 2.0, %v3507
    %v3524 = vsub.f32 2.0, %v3508
    %v3525 = vsub.f32 2.0, %v3509
    %v3526 = vsub.f32 2.0, %v3510
    %v3527 = vsub.f32 2.0, %v3511
    %v3528 = vsub.f32 2.0, %v3512
    %v3529 = vsub.f32 2.0, %v3513
    %v3530 = vsub.f32 2.0, %v3514
    %v3531 = vsub.f32 2.0, %v3515
    %v3532 = vsub.f32 2.0, %v3516
    %v3533 = vsub.f32 2.0, %v3517
    %v3534 = vsub.f32 2.0, %v3518
    %v3535 = vsub.f32 2.0, %v3519
    %v3536 = vsub.f32 2.0, %v3520
    %v3537 = vsub.f32 2.0, %v3521
    %v3538 = vsub.f32 2.0, %v3522
    %v3539 = vmul.f32 %v3491, %v3523
    %v3540 = vmul.f32 %v3492, %v3524
    %v3541 = vmul.f32 %v3493, %v3525
    %v3542 = vmul.f32 %v3494, %v3526
    %v3543 = vmul.f32 %v3495, %v3527
    %v3544 = vmul.f32 %v3496, %v3528
    %v3545 = vmul.f32 %v3497, %v3529
    %v3546 = vmul.f32 %v3498, %v3530
    %v3547 = vmul.f32 %v3499, %v3531
    %v3548 = vmul.f32 %v3500, %v3532
    %v3549 = vmul.f32 %v3501, %v3533
    %v3550 = vmul.f32 %v3502, %v3534
    %v3551 = vmul.f32 %v3503, %v3535
    %v3552 = vmul.f32 %v3504, %v3536
    %v3553 = vmul.f32 %v3505, %v3537
    %v3554 = vmul.f32 %v3506, %v3538
    %v3555 = vmul.f32 %v3300, %v3539
    %v3556 = vmul.f32 %v3305, %v3540
    %v3557 = vmul.f32 %v3310, %v3541
    %v3558 = vmul.f32 %v3315, %v3542
    %v3559 = vmul.f32 %v3320, %v3543
    %v3560 = vmul.f32 %v3325, %v3544
    %v3561 = vmul.f32 %v3330, %v3545
    %v3562 = vmul.f32 %v3335, %v3546
    %v3563 = vmul.f32 %v3453, %v3547
    %v3564 = vmul.f32 %v3458, %v3548
    %v3565 = vmul.f32 %v3463, %v3549
    %v3566 = vmul.f32 %v3468, %v3550
    %v3567 = vmul.f32 %v3473, %v3551
    %v3568 = vmul.f32 %v3478, %v3552
    %v3569 = vmul.f32 %v3483, %v3553
    %v3570 = vmul.f32 %v3488, %v3554
    %v3572 = vsel %vm619, %v3555, 0
    %v3575 = vsel %vm619, %v3556, 0
    %v3578 = vsel %vm619, %v3557, 0
    %v3581 = vsel %vm619, %v3558, 0
    %v3584 = vsel %vm619, %v3559, 0
    %v3587 = vsel %vm619, %v3560, 0
    %v3590 = vsel %vm619, %v3561, 0
    %v3593 = vsel %vm619, %v3562, 0
    %v3596 = vsel %vm619, %v3563, 0
    %v3599 = vsel %vm619, %v3564, 0
    %v3602 = vsel %vm619, %v3565, 0
    %v3605 = vsel %vm619, %v3566, 0
    %v3608 = vsel %vm619, %v3567, 0
    %v3611 = vsel %vm619, %v3568, 0
    %v3614 = vsel %vm619, %v3569, 0
    %v3617 = vsel %vm619, %v3570, 0
    %3619 = vmatprep.subr.mxu0 0.0
    %3620 = vmatpush1.msra.mxu0 %v593
    %3621 = vmatprep.subr.mxu0 0.0
    %3622 = vmatpush1.msra.mxu0 0.0
    %3623 = vmatprep.subr.mxu0 0.0
    %3624 = vmatpush1.msra.mxu0 0.0
    %3625 = vmatprep.subr.mxu0 0.0
    %3626 = vmatpush1.msra.mxu0 0.0
    %3627 = vmatprep.subr.mxu0 0.0
    %3628 = vmatpush1.msra.mxu0 0.0
    %3629 = vmatprep.subr.mxu0 0.0
    %3630 = vmatpush1.msra.mxu0 0.0
    %3631 = vmatprep.subr.mxu0 0.0
    %3632 = vmatpush1.msra.mxu0 0.0
    %3633 = vmatprep.subr.mxu0 0.0
    %3634 = vmatpush1.msra.mxu0 0.0
    %3635 = vmatprep.subr.mxu0 0.0
    %3636 = vmatpush1.msra.mxu0 0.0
    %3637 = vmatprep.subr.mxu0 0.0
    %3638 = vmatpush1.msra.mxu0 0.0
    %3639 = vmatprep.subr.mxu0 0.0
    %3640 = vmatpush1.msra.mxu0 0.0
    %3641 = vmatprep.subr.mxu0 0.0
    %3642 = vmatpush1.msra.mxu0 0.0
    %3643 = vmatprep.subr.mxu0 0.0
    %3644 = vmatpush1.msra.mxu0 0.0
    %3645 = vmatprep.subr.mxu0 0.0
    %3646 = vmatpush1.msra.mxu0 0.0
    %3647 = vmatprep.subr.mxu0 0.0
    %3648 = vmatpush1.msra.mxu0 0.0
    %3649 = vmatprep.subr.mxu0 0.0
    %3650 = vmatpush1.msra.mxu0 0.0
    %3651 = vmatprep.subr.mxu0 0.0
    %3652 = vmatpush1.msra.mxu0 0.0
    %3653 = vmatprep.subr.mxu0 0.0
    %3654 = vmatpush1.msra.mxu0 0.0
    %3655 = vmatprep.subr.mxu0 0.0
    %3656 = vmatpush1.msra.mxu0 0.0
    %3657 = vmatprep.subr.mxu0 0.0
    %3658 = vmatpush1.msra.mxu0 0.0
    %3659 = vmatprep.subr.mxu0 0.0
    %3660 = vmatpush1.msra.mxu0 0.0
    %3661 = vmatprep.subr.mxu0 0.0
    %3662 = vmatpush1.msra.mxu0 0.0
    %3663 = vmatprep.subr.mxu0 0.0
    %3664 = vmatpush1.msra.mxu0 0.0
    %3665 = vmatprep.subr.mxu0 0.0
    %3666 = vmatpush1.msra.mxu0 0.0
    %3667 = vmatprep.subr.mxu0 0.0
    %3668 = vmatpush1.msra.mxu0 0.0
    %3669 = vmatprep.subr.mxu0 0.0
    %3670 = vmatpush1.msra.mxu0 0.0
    %3671 = vmatprep.subr.mxu0 0.0
    %3672 = vmatpush1.msra.mxu0 0.0
    %3673 = vmatprep.subr.mxu0 0.0
    %3674 = vmatpush1.msra.mxu0 0.0
    %3675 = vmatprep.subr.mxu0 0.0
    %3676 = vmatpush1.msra.mxu0 0.0
    %3677 = vmatprep.subr.mxu0 0.0
    %3678 = vmatpush1.msra.mxu0 0.0
    %3679 = vmatprep.subr.mxu0 0.0
    %3680 = vmatpush1.msra.mxu0 0.0
    %3681 = vmatprep.subr.mxu0 0.0
    %3682 = vmatpush1.msra.mxu0 0.0
    %3683 = vmatprep.mubr.f32.mxu0 0.0
    %3684 = vmatmul.mubr.f32.gmra.mrb[0].mxu0 %v3572
    %v3685 = vpop.f32.mrb[0].mxu0
    %v3686 = vadd.f32 0.0, %v3685
    %v3687 = vpop.f32.mrb[0].mxu0
    %3688 = vmatprep.mubr.f32.mxu0 0.0
    %3689 = vmatmul.mubr.f32.gmra.mrb[0].mxu0 %v3575
    %v3690 = vpop.f32.mrb[0].mxu0
    %v3691 = vadd.f32 0.0, %v3690
    %v3692 = vpop.f32.mrb[0].mxu0
    %3693 = vmatprep.mubr.f32.mxu0 0.0
    %3694 = vmatmul.mubr.f32.gmra.mrb[0].mxu0 %v3578
    %v3695 = vpop.f32.mrb[0].mxu0
    %v3696 = vadd.f32 0.0, %v3695
    %v3697 = vpop.f32.mrb[0].mxu0
    %3698 = vmatprep.mubr.f32.mxu0 0.0
    %3699 = vmatmul.mubr.f32.gmra.mrb[0].mxu0 %v3581
    %v3700 = vpop.f32.mrb[0].mxu0
    %v3701 = vadd.f32 0.0, %v3700
    %v3702 = vpop.f32.mrb[0].mxu0
    %3703 = vmatprep.mubr.f32.mxu0 0.0
    %3704 = vmatmul.mubr.f32.gmra.mrb[0].mxu0 %v3584
    %v3705 = vpop.f32.mrb[0].mxu0
    %v3706 = vadd.f32 0.0, %v3705
    %v3707 = vpop.f32.mrb[0].mxu0
    %3708 = vmatprep.mubr.f32.mxu0 0.0
    %3709 = vmatmul.mubr.f32.gmra.mrb[0].mxu0 %v3587
    %v3710 = vpop.f32.mrb[0].mxu0
    %v3711 = vadd.f32 0.0, %v3710
    %v3712 = vpop.f32.mrb[0].mxu0
    %3713 = vmatprep.mubr.f32.mxu0 0.0
    %3714 = vmatmul.mubr.f32.gmra.mrb[0].mxu0 %v3590
    %v3715 = vpop.f32.mrb[0].mxu0
    %v3716 = vadd.f32 0.0, %v3715
    %v3717 = vpop.f32.mrb[0].mxu0
    %3718 = vmatprep.mubr.f32.mxu0 0.0
    %3719 = vmatmul.mubr.f32.gmra.mrb[0].mxu0 %v3593
    %v3720 = vpop.f32.mrb[0].mxu0
    %v3721 = vadd.f32 0.0, %v3720
    %v3722 = vpop.f32.mrb[0].mxu0
    %3723 = vmatprep.mubr.f32.mxu0 0.0
    %3724 = vmatmul.mubr.f32.gmra.mrb[0].mxu0 %v3596
    %v3725 = vpop.f32.mrb[0].mxu0
    %v3726 = vadd.f32 0.0, %v3725
    %v3727 = vpop.f32.mrb[0].mxu0
    %3728 = vmatprep.mubr.f32.mxu0 0.0
    %3729 = vmatmul.mubr.f32.gmra.mrb[0].mxu0 %v3599
    %v3730 = vpop.f32.mrb[0].mxu0
    %v3731 = vadd.f32 0.0, %v3730
    %v3732 = vpop.f32.mrb[0].mxu0
    %3733 = vmatprep.mubr.f32.mxu0 0.0
    %3734 = vmatmul.mubr.f32.gmra.mrb[0].mxu0 %v3602
    %v3735 = vpop.f32.mrb[0].mxu0
    %v3736 = vadd.f32 0.0, %v3735
    %v3737 = vpop.f32.mrb[0].mxu0
    %3738 = vmatprep.mubr.f32.mxu0 0.0
    %3739 = vmatmul.mubr.f32.gmra.mrb[0].mxu0 %v3605
    %v3740 = vpop.f32.mrb[0].mxu0
    %v3741 = vadd.f32 0.0, %v3740
    %v3742 = vpop.f32.mrb[0].mxu0
    %3743 = vmatprep.mubr.f32.mxu0 0.0
    %3744 = vmatmul.mubr.f32.gmra.mrb[0].mxu0 %v3608
    %v3745 = vpop.f32.mrb[0].mxu0
    %v3746 = vadd.f32 0.0, %v3745
    %v3747 = vpop.f32.mrb[0].mxu0
    %3748 = vmatprep.mubr.f32.mxu0 0.0
    %3749 = vmatmul.mubr.f32.gmra.mrb[0].mxu0 %v3611
    %v3750 = vpop.f32.mrb[0].mxu0
    %v3751 = vadd.f32 0.0, %v3750
    %v3752 = vpop.f32.mrb[0].mxu0
    %3753 = vmatprep.mubr.f32.mxu0 0.0
    %3754 = vmatmul.mubr.f32.gmra.mrb[0].mxu0 %v3614
    %v3755 = vpop.f32.mrb[0].mxu0
    %v3756 = vadd.f32 0.0, %v3755
    %v3757 = vpop.f32.mrb[0].mxu0
    %3758 = vmatprep.mubr.f32.mxu0 0.0
    %3759 = vmatmul.mubr.f32.gmra.mrb[0].mxu0 %v3617
    %v3760 = vpop.f32.mrb[0].mxu0
    %v3761 = vadd.f32 0.0, %v3760
    %v3762 = vpop.f32.mrb[0].mxu0
    %3763 = vdwg.mxu0
    %v3764 = vadd.f32 %v2625, %v3686
    %v3765 = vadd.f32 %v2630, %v3691
    %v3766 = vadd.f32 %v2635, %v3696
    %v3767 = vadd.f32 %v2640, %v3701
    %v3768 = vadd.f32 %v2645, %v3706
    %v3769 = vadd.f32 %v2650, %v3711
    %v3770 = vadd.f32 %v2655, %v3716
    %v3771 = vadd.f32 %v2660, %v3721
    %v3772 = vadd.f32 %v2665, %v3726
    %v3773 = vadd.f32 %v2670, %v3731
    %v3774 = vadd.f32 %v2675, %v3736
    %v3775 = vadd.f32 %v2680, %v3741
    %v3776 = vadd.f32 %v2685, %v3746
    %v3777 = vadd.f32 %v2690, %v3751
    %v3778 = vadd.f32 %v2695, %v3756
    %v3779 = vadd.f32 %v2700, %v3761
    %3780 = vrot.lane.b32.xlu0 %v513, 104
    %v3781 = vpop.permute.xlu0 %3780
    %3782 = vrot.lane.b32.xlu0 %v518, 104
    %v3783 = vpop.permute.xlu0 %3782
    %3784 = vrot.lane.b32.xlu0 %v523, 104
    %v3785 = vpop.permute.xlu0 %3784
    %3786 = vrot.lane.b32.xlu0 %v528, 104
    %v3787 = vpop.permute.xlu0 %3786
    %3788 = vrot.lane.b32.xlu0 %v533, 104
    %v3789 = vpop.permute.xlu0 %3788
    %3790 = vrot.lane.b32.xlu0 %v538, 104
    %v3791 = vpop.permute.xlu0 %3790
    %3792 = vrot.lane.b32.xlu0 %v543, 104
    %v3793 = vpop.permute.xlu0 %3792
    %3794 = vrot.lane.b32.xlu0 %v548, 104
    %v3795 = vpop.permute.xlu0 %3794
    %3796 = vrot.lane.b32.xlu0 %v513, 72
    %v3797 = vpop.permute.xlu0 %3796
    %3798 = vrot.lane.b32.xlu0 %v518, 72
    %v3799 = vpop.permute.xlu0 %3798
    %3800 = vrot.lane.b32.xlu0 %v523, 72
    %v3801 = vpop.permute.xlu0 %3800
    %3802 = vrot.lane.b32.xlu0 %v528, 72
    %v3803 = vpop.permute.xlu0 %3802
    %3804 = vrot.lane.b32.xlu0 %v533, 72
    %v3805 = vpop.permute.xlu0 %3804
    %3806 = vrot.lane.b32.xlu0 %v538, 72
    %v3807 = vpop.permute.xlu0 %3806
    %3808 = vrot.lane.b32.xlu0 %v543, 72
    %v3809 = vpop.permute.xlu0 %3808
    %3810 = vrot.lane.b32.xlu0 %v548, 72
    %v3811 = vpop.permute.xlu0 %3810
    %v3812 = vsel %vm619, %v3781, 0
    %v3814 = vsel %vm619, %v3783, 0
    %v3816 = vsel %vm619, %v3785, 0
    %v3818 = vsel %vm619, %v3787, 0
    %v3820 = vsel %vm619, %v3789, 0
    %v3822 = vsel %vm619, %v3791, 0
    %v3824 = vsel %vm619, %v3793, 0
    %v3826 = vsel %vm619, %v3795, 0
    %v3828 = vsel %vm619, %v3797, 0
    %v3830 = vsel %vm619, %v3799, 0
    %v3832 = vsel %vm619, %v3801, 0
    %v3834 = vsel %vm619, %v3803, 0
    %v3836 = vsel %vm619, %v3805, 0
    %v3838 = vsel %vm619, %v3807, 0
    %v3840 = vsel %vm619, %v3809, 0
    %v3842 = vsel %vm619, %v3811, 0
    %3844 = vmatprep.subr.mxu0 0.0
    %3845 = vmatpush1.xpose.msra.mxu0 %v3828
    %3846 = vmatprep.subr.mxu0 0.0
    %3847 = vmatpush1.xpose.msra.mxu0 %v3830
    %3848 = vmatprep.subr.mxu0 0.0
    %3849 = vmatpush1.xpose.msra.mxu0 %v3832
    %3850 = vmatprep.subr.mxu0 0.0
    %3851 = vmatpush1.xpose.msra.mxu0 %v3834
    %3852 = vmatprep.subr.mxu0 0.0
    %3853 = vmatpush1.xpose.msra.mxu0 %v3836
    %3854 = vmatprep.subr.mxu0 0.0
    %3855 = vmatpush1.xpose.msra.mxu0 %v3838
    %3856 = vmatprep.subr.mxu0 0.0
    %3857 = vmatpush1.xpose.msra.mxu0 %v3840
    %3858 = vmatprep.subr.mxu0 0.0
    %3859 = vmatpush1.xpose.msra.mxu0 %v3842
    %3860 = vmatprep.subr.mxu0 0.0
    %3861 = vmatpush1.xpose.msra.mxu0 0.0
    %3862 = vmatprep.subr.mxu0 0.0
    %3863 = vmatpush1.xpose.msra.mxu0 0.0
    %3864 = vmatprep.subr.mxu0 0.0
    %3865 = vmatpush1.xpose.msra.mxu0 0.0
    %3866 = vmatprep.subr.mxu0 0.0
    %3867 = vmatpush1.xpose.msra.mxu0 0.0
    %3868 = vmatprep.subr.mxu0 0.0
    %3869 = vmatpush1.xpose.msra.mxu0 0.0
    %3870 = vmatprep.subr.mxu0 0.0
    %3871 = vmatpush1.xpose.msra.mxu0 0.0
    %3872 = vmatprep.subr.mxu0 0.0
    %3873 = vmatpush1.xpose.msra.mxu0 0.0
    %3874 = vmatprep.subr.mxu0 0.0
    %3875 = vmatpush1.xpose.msra.mxu0 0.0
    %3876 = vmatprep.subr.mxu0 0.0
    %3877 = vmatpush1.xpose.msra.mxu0 0.0
    %3878 = vmatprep.subr.mxu0 0.0
    %3879 = vmatpush1.xpose.msra.mxu0 0.0
    %3880 = vmatprep.subr.mxu0 0.0
    %3881 = vmatpush1.xpose.msra.mxu0 0.0
    %3882 = vmatprep.subr.mxu0 0.0
    %3883 = vmatpush1.xpose.msra.mxu0 0.0
    %3884 = vmatprep.subr.mxu0 0.0
    %3885 = vmatpush1.xpose.msra.mxu0 0.0
    %3886 = vmatprep.subr.mxu0 0.0
    %3887 = vmatpush1.xpose.msra.mxu0 0.0
    %3888 = vmatprep.subr.mxu0 0.0
    %3889 = vmatpush1.xpose.msra.mxu0 0.0
    %3890 = vmatprep.subr.mxu0 0.0
    %3891 = vmatpush1.xpose.msra.mxu0 0.0
    %3892 = vmatprep.subr.mxu0 0.0
    %3893 = vmatpush1.xpose.msra.mxu0 0.0
    %3894 = vmatprep.subr.mxu0 0.0
    %3895 = vmatpush1.xpose.msra.mxu0 0.0
    %3896 = vmatprep.subr.mxu0 0.0
    %3897 = vmatpush1.xpose.msra.mxu0 0.0
    %3898 = vmatprep.subr.mxu0 0.0
    %3899 = vmatpush1.xpose.msra.mxu0 0.0
    %3900 = vmatprep.subr.mxu0 0.0
    %3901 = vmatpush1.xpose.msra.mxu0 0.0
    %3902 = vmatprep.subr.mxu0 0.0
    %3903 = vmatpush1.xpose.msra.mxu0 0.0
    %3904 = vmatprep.subr.mxu0 0.0
    %3905 = vmatpush1.xpose.msra.mxu0 0.0
    %3906 = vmatprep.subr.mxu0 0.0
    %3907 = vmatpush1.xpose.msra.mxu0 0.0
    %3908 = vmatprep.mubr.f32.mxu0 0.0
    %3909 = vmatmul.mubr.f32.gmra.mrb[0].mxu0 %v3812
    %v3910 = vpop.f32.mrb[0].mxu0
    %v3911 = vadd.f32 0.0, %v3910
    %v3912 = vpop.f32.mrb[0].mxu0
    %3913 = vmatprep.mubr.f32.mxu0 0.0
    %3914 = vmatmul.mubr.f32.gmra.mrb[0].mxu0 %v3814
    %v3915 = vpop.f32.mrb[0].mxu0
    %v3916 = vadd.f32 0.0, %v3915
    %v3917 = vpop.f32.mrb[0].mxu0
    %3918 = vmatprep.mubr.f32.mxu0 0.0
    %3919 = vmatmul.mubr.f32.gmra.mrb[0].mxu0 %v3816
    %v3920 = vpop.f32.mrb[0].mxu0
    %v3921 = vadd.f32 0.0, %v3920
    %v3922 = vpop.f32.mrb[0].mxu0
    %3923 = vmatprep.mubr.f32.mxu0 0.0
    %3924 = vmatmul.mubr.f32.gmra.mrb[0].mxu0 %v3818
    %v3925 = vpop.f32.mrb[0].mxu0
    %v3926 = vadd.f32 0.0, %v3925
    %v3927 = vpop.f32.mrb[0].mxu0
    %3928 = vmatprep.mubr.f32.mxu0 0.0
    %3929 = vmatmul.mubr.f32.gmra.mrb[0].mxu0 %v3820
    %v3930 = vpop.f32.mrb[0].mxu0
    %v3931 = vadd.f32 0.0, %v3930
    %v3932 = vpop.f32.mrb[0].mxu0
    %3933 = vmatprep.mubr.f32.mxu0 0.0
    %3934 = vmatmul.mubr.f32.gmra.mrb[0].mxu0 %v3822
    %v3935 = vpop.f32.mrb[0].mxu0
    %v3936 = vadd.f32 0.0, %v3935
    %v3937 = vpop.f32.mrb[0].mxu0
    %3938 = vmatprep.mubr.f32.mxu0 0.0
    %3939 = vmatmul.mubr.f32.gmra.mrb[0].mxu0 %v3824
    %v3940 = vpop.f32.mrb[0].mxu0
    %v3941 = vadd.f32 0.0, %v3940
    %v3942 = vpop.f32.mrb[0].mxu0
    %3943 = vmatprep.mubr.f32.mxu0 0.0
    %3944 = vmatmul.mubr.f32.gmra.mrb[0].mxu0 %v3826
    %v3945 = vpop.f32.mrb[0].mxu0
    %v3946 = vadd.f32 0.0, %v3945
    %v3947 = vpop.f32.mrb[0].mxu0
    %3948 = vdwg.mxu0
    %3949 = vrot.lane.b32.xlu0 %v553, 104
    %v3950 = vpop.permute.xlu0 %3949
    %3951 = vrot.lane.b32.xlu0 %v558, 104
    %v3952 = vpop.permute.xlu0 %3951
    %3953 = vrot.lane.b32.xlu0 %v563, 104
    %v3954 = vpop.permute.xlu0 %3953
    %3955 = vrot.lane.b32.xlu0 %v568, 104
    %v3956 = vpop.permute.xlu0 %3955
    %3957 = vrot.lane.b32.xlu0 %v573, 104
    %v3958 = vpop.permute.xlu0 %3957
    %3959 = vrot.lane.b32.xlu0 %v578, 104
    %v3960 = vpop.permute.xlu0 %3959
    %3961 = vrot.lane.b32.xlu0 %v583, 104
    %v3962 = vpop.permute.xlu0 %3961
    %3963 = vrot.lane.b32.xlu0 %v588, 104
    %v3964 = vpop.permute.xlu0 %3963
    %3965 = vrot.lane.b32.xlu0 %v553, 72
    %v3966 = vpop.permute.xlu0 %3965
    %3967 = vrot.lane.b32.xlu0 %v558, 72
    %v3968 = vpop.permute.xlu0 %3967
    %3969 = vrot.lane.b32.xlu0 %v563, 72
    %v3970 = vpop.permute.xlu0 %3969
    %3971 = vrot.lane.b32.xlu0 %v568, 72
    %v3972 = vpop.permute.xlu0 %3971
    %3973 = vrot.lane.b32.xlu0 %v573, 72
    %v3974 = vpop.permute.xlu0 %3973
    %3975 = vrot.lane.b32.xlu0 %v578, 72
    %v3976 = vpop.permute.xlu0 %3975
    %3977 = vrot.lane.b32.xlu0 %v583, 72
    %v3978 = vpop.permute.xlu0 %3977
    %3979 = vrot.lane.b32.xlu0 %v588, 72
    %v3980 = vpop.permute.xlu0 %3979
    %v3981 = vsel %vm619, %v3950, 0
    %v3983 = vsel %vm619, %v3952, 0
    %v3985 = vsel %vm619, %v3954, 0
    %v3987 = vsel %vm619, %v3956, 0
    %v3989 = vsel %vm619, %v3958, 0
    %v3991 = vsel %vm619, %v3960, 0
    %v3993 = vsel %vm619, %v3962, 0
    %v3995 = vsel %vm619, %v3964, 0
    %v3997 = vsel %vm619, %v3966, 0
    %v3999 = vsel %vm619, %v3968, 0
    %v4001 = vsel %vm619, %v3970, 0
    %v4003 = vsel %vm619, %v3972, 0
    %v4005 = vsel %vm619, %v3974, 0
    %v4007 = vsel %vm619, %v3976, 0
    %v4009 = vsel %vm619, %v3978, 0
    %v4011 = vsel %vm619, %v3980, 0
    %4013 = vmatprep.subr.mxu0 0.0
    %4014 = vmatpush1.xpose.msra.mxu0 %v3997
    %4015 = vmatprep.subr.mxu0 0.0
    %4016 = vmatpush1.xpose.msra.mxu0 %v3999
    %4017 = vmatprep.subr.mxu0 0.0
    %4018 = vmatpush1.xpose.msra.mxu0 %v4001
    %4019 = vmatprep.subr.mxu0 0.0
    %4020 = vmatpush1.xpose.msra.mxu0 %v4003
    %4021 = vmatprep.subr.mxu0 0.0
    %4022 = vmatpush1.xpose.msra.mxu0 %v4005
    %4023 = vmatprep.subr.mxu0 0.0
    %4024 = vmatpush1.xpose.msra.mxu0 %v4007
    %4025 = vmatprep.subr.mxu0 0.0
    %4026 = vmatpush1.xpose.msra.mxu0 %v4009
    %4027 = vmatprep.subr.mxu0 0.0
    %4028 = vmatpush1.xpose.msra.mxu0 %v4011
    %4029 = vmatprep.subr.mxu0 0.0
    %4030 = vmatpush1.xpose.msra.mxu0 0.0
    %4031 = vmatprep.subr.mxu0 0.0
    %4032 = vmatpush1.xpose.msra.mxu0 0.0
    %4033 = vmatprep.subr.mxu0 0.0
    %4034 = vmatpush1.xpose.msra.mxu0 0.0
    %4035 = vmatprep.subr.mxu0 0.0
    %4036 = vmatpush1.xpose.msra.mxu0 0.0
    %4037 = vmatprep.subr.mxu0 0.0
    %4038 = vmatpush1.xpose.msra.mxu0 0.0
    %4039 = vmatprep.subr.mxu0 0.0
    %4040 = vmatpush1.xpose.msra.mxu0 0.0
    %4041 = vmatprep.subr.mxu0 0.0
    %4042 = vmatpush1.xpose.msra.mxu0 0.0
    %4043 = vmatprep.subr.mxu0 0.0
    %4044 = vmatpush1.xpose.msra.mxu0 0.0
    %4045 = vmatprep.subr.mxu0 0.0
    %4046 = vmatpush1.xpose.msra.mxu0 0.0
    %4047 = vmatprep.subr.mxu0 0.0
    %4048 = vmatpush1.xpose.msra.mxu0 0.0
    %4049 = vmatprep.subr.mxu0 0.0
    %4050 = vmatpush1.xpose.msra.mxu0 0.0
    %4051 = vmatprep.subr.mxu0 0.0
    %4052 = vmatpush1.xpose.msra.mxu0 0.0
    %4053 = vmatprep.subr.mxu0 0.0
    %4054 = vmatpush1.xpose.msra.mxu0 0.0
    %4055 = vmatprep.subr.mxu0 0.0
    %4056 = vmatpush1.xpose.msra.mxu0 0.0
    %4057 = vmatprep.subr.mxu0 0.0
    %4058 = vmatpush1.xpose.msra.mxu0 0.0
    %4059 = vmatprep.subr.mxu0 0.0
    %4060 = vmatpush1.xpose.msra.mxu0 0.0
    %4061 = vmatprep.subr.mxu0 0.0
    %4062 = vmatpush1.xpose.msra.mxu0 0.0
    %4063 = vmatprep.subr.mxu0 0.0
    %4064 = vmatpush1.xpose.msra.mxu0 0.0
    %4065 = vmatprep.subr.mxu0 0.0
    %4066 = vmatpush1.xpose.msra.mxu0 0.0
    %4067 = vmatprep.subr.mxu0 0.0
    %4068 = vmatpush1.xpose.msra.mxu0 0.0
    %4069 = vmatprep.subr.mxu0 0.0
    %4070 = vmatpush1.xpose.msra.mxu0 0.0
    %4071 = vmatprep.subr.mxu0 0.0
    %4072 = vmatpush1.xpose.msra.mxu0 0.0
    %4073 = vmatprep.subr.mxu0 0.0
    %4074 = vmatpush1.xpose.msra.mxu0 0.0
    %4075 = vmatprep.subr.mxu0 0.0
    %4076 = vmatpush1.xpose.msra.mxu0 0.0
    %4077 = vmatprep.mubr.f32.mxu0 0.0
    %4078 = vmatmul.mubr.f32.gmra.mrb[0].mxu0 %v3981
    %v4079 = vpop.f32.mrb[0].mxu0
    %v4080 = vadd.f32 0.0, %v4079
    %v4081 = vpop.f32.mrb[0].mxu0
    %4082 = vmatprep.mubr.f32.mxu0 0.0
    %4083 = vmatmul.mubr.f32.gmra.mrb[0].mxu0 %v3983
    %v4084 = vpop.f32.mrb[0].mxu0
    %v4085 = vadd.f32 0.0, %v4084
    %v4086 = vpop.f32.mrb[0].mxu0
    %4087 = vmatprep.mubr.f32.mxu0 0.0
    %4088 = vmatmul.mubr.f32.gmra.mrb[0].mxu0 %v3985
    %v4089 = vpop.f32.mrb[0].mxu0
    %v4090 = vadd.f32 0.0, %v4089
    %v4091 = vpop.f32.mrb[0].mxu0
    %4092 = vmatprep.mubr.f32.mxu0 0.0
    %4093 = vmatmul.mubr.f32.gmra.mrb[0].mxu0 %v3987
    %v4094 = vpop.f32.mrb[0].mxu0
    %v4095 = vadd.f32 0.0, %v4094
    %v4096 = vpop.f32.mrb[0].mxu0
    %4097 = vmatprep.mubr.f32.mxu0 0.0
    %4098 = vmatmul.mubr.f32.gmra.mrb[0].mxu0 %v3989
    %v4099 = vpop.f32.mrb[0].mxu0
    %v4100 = vadd.f32 0.0, %v4099
    %v4101 = vpop.f32.mrb[0].mxu0
    %4102 = vmatprep.mubr.f32.mxu0 0.0
    %4103 = vmatmul.mubr.f32.gmra.mrb[0].mxu0 %v3991
    %v4104 = vpop.f32.mrb[0].mxu0
    %v4105 = vadd.f32 0.0, %v4104
    %v4106 = vpop.f32.mrb[0].mxu0
    %4107 = vmatprep.mubr.f32.mxu0 0.0
    %4108 = vmatmul.mubr.f32.gmra.mrb[0].mxu0 %v3993
    %v4109 = vpop.f32.mrb[0].mxu0
    %v4110 = vadd.f32 0.0, %v4109
    %v4111 = vpop.f32.mrb[0].mxu0
    %4112 = vmatprep.mubr.f32.mxu0 0.0
    %4113 = vmatmul.mubr.f32.gmra.mrb[0].mxu0 %v3995
    %v4114 = vpop.f32.mrb[0].mxu0
    %v4115 = vadd.f32 0.0, %v4114
    %v4116 = vpop.f32.mrb[0].mxu0
    %4117 = vdwg.mxu0
    %v4118 = vsel %vm918, %v3911, -inf
    %4119 = vmax.xlane.f32.xlu0 %v4118
    %v4120 = vpop.xlane.xlu0 %4119
    %v4121 = vsel %vm918, %v3916, -inf
    %4122 = vmax.xlane.f32.xlu0 %v4121
    %v4123 = vpop.xlane.xlu0 %4122
    %v4124 = vsel %vm918, %v3921, -inf
    %4125 = vmax.xlane.f32.xlu0 %v4124
    %v4126 = vpop.xlane.xlu0 %4125
    %v4127 = vsel %vm918, %v3926, -inf
    %4128 = vmax.xlane.f32.xlu0 %v4127
    %v4129 = vpop.xlane.xlu0 %4128
    %v4130 = vsel %vm918, %v3931, -inf
    %4131 = vmax.xlane.f32.xlu0 %v4130
    %v4132 = vpop.xlane.xlu0 %4131
    %v4133 = vsel %vm918, %v3936, -inf
    %4134 = vmax.xlane.f32.xlu0 %v4133
    %v4135 = vpop.xlane.xlu0 %4134
    %v4136 = vsel %vm918, %v3941, -inf
    %4137 = vmax.xlane.f32.xlu0 %v4136
    %v4138 = vpop.xlane.xlu0 %4137
    %v4139 = vsel %vm918, %v3946, -inf
    %4140 = vmax.xlane.f32.xlu0 %v4139
    %v4141 = vpop.xlane.xlu0 %4140
    %v4142 = vsel %vm918, %v4080, -inf
    %4143 = vmax.xlane.f32.xlu0 %v4142
    %v4144 = vpop.xlane.xlu0 %4143
    %v4145 = vsel %vm918, %v4085, -inf
    %4146 = vmax.xlane.f32.xlu0 %v4145
    %v4147 = vpop.xlane.xlu0 %4146
    %v4148 = vsel %vm918, %v4090, -inf
    %4149 = vmax.xlane.f32.xlu0 %v4148
    %v4150 = vpop.xlane.xlu0 %4149
    %v4151 = vsel %vm918, %v4095, -inf
    %4152 = vmax.xlane.f32.xlu0 %v4151
    %v4153 = vpop.xlane.xlu0 %4152
    %v4154 = vsel %vm918, %v4100, -inf
    %4155 = vmax.xlane.f32.xlu0 %v4154
    %v4156 = vpop.xlane.xlu0 %4155
    %v4157 = vsel %vm918, %v4105, -inf
    %4158 = vmax.xlane.f32.xlu0 %v4157
    %v4159 = vpop.xlane.xlu0 %4158
    %v4160 = vsel %vm918, %v4110, -inf
    %4161 = vmax.xlane.f32.xlu0 %v4160
    %v4162 = vpop.xlane.xlu0 %4161
    %v4163 = vsel %vm918, %v4115, -inf
    %4164 = vmax.xlane.f32.xlu0 %v4163
    %v4165 = vpop.xlane.xlu0 %4164
    %v4166 = vsub.f32 %v3911, %v4120
    %v4167 = vsub.f32 %v3916, %v4123
    %v4168 = vsub.f32 %v3921, %v4126
    %v4169 = vsub.f32 %v3926, %v4129
    %v4170 = vsub.f32 %v3931, %v4132
    %v4171 = vsub.f32 %v3936, %v4135
    %v4172 = vsub.f32 %v3941, %v4138
    %v4173 = vsub.f32 %v3946, %v4141
    %v4174 = vsub.f32 %v4080, %v4144
    %v4175 = vsub.f32 %v4085, %v4147
    %v4176 = vsub.f32 %v4090, %v4150
    %v4177 = vsub.f32 %v4095, %v4153
    %v4178 = vsub.f32 %v4100, %v4156
    %v4179 = vsub.f32 %v4105, %v4159
    %v4180 = vsub.f32 %v4110, %v4162
    %v4181 = vsub.f32 %v4115, %v4165
    %v4182 = vmul.f32 %v4166, 1.442695
    %v4183 = vpow.pop %v4182
    %v4184 = vmul.f32 %v4167, 1.442695
    %v4185 = vpow.pop %v4184
    %v4186 = vmul.f32 %v4168, 1.442695
    %v4187 = vpow.pop %v4186
    %v4188 = vmul.f32 %v4169, 1.442695
    %v4189 = vpow.pop %v4188
    %v4190 = vmul.f32 %v4170, 1.442695
    %v4191 = vpow.pop %v4190
    %v4192 = vmul.f32 %v4171, 1.442695
    %v4193 = vpow.pop %v4192
    %v4194 = vmul.f32 %v4172, 1.442695
    %v4195 = vpow.pop %v4194
    %v4196 = vmul.f32 %v4173, 1.442695
    %v4197 = vpow.pop %v4196
    %v4198 = vmul.f32 %v4174, 1.442695
    %v4199 = vpow.pop %v4198
    %v4200 = vmul.f32 %v4175, 1.442695
    %v4201 = vpow.pop %v4200
    %v4202 = vmul.f32 %v4176, 1.442695
    %v4203 = vpow.pop %v4202
    %v4204 = vmul.f32 %v4177, 1.442695
    %v4205 = vpow.pop %v4204
    %v4206 = vmul.f32 %v4178, 1.442695
    %v4207 = vpow.pop %v4206
    %v4208 = vmul.f32 %v4179, 1.442695
    %v4209 = vpow.pop %v4208
    %v4210 = vmul.f32 %v4180, 1.442695
    %v4211 = vpow.pop %v4210
    %v4212 = vmul.f32 %v4181, 1.442695
    %v4213 = vpow.pop %v4212
    %v4214 = vsel %vm918, %v4183, 0.0
    %4215 = vadd.xlane.f32.xlu0 %v4214
    %v4216 = vpop.xlane.xlu0 %4215
    %v4217 = vsel %vm918, %v4185, 0.0
    %4218 = vadd.xlane.f32.xlu0 %v4217
    %v4219 = vpop.xlane.xlu0 %4218
    %v4220 = vsel %vm918, %v4187, 0.0
    %4221 = vadd.xlane.f32.xlu0 %v4220
    %v4222 = vpop.xlane.xlu0 %4221
    %v4223 = vsel %vm918, %v4189, 0.0
    %4224 = vadd.xlane.f32.xlu0 %v4223
    %v4225 = vpop.xlane.xlu0 %4224
    %v4226 = vsel %vm918, %v4191, 0.0
    %4227 = vadd.xlane.f32.xlu0 %v4226
    %v4228 = vpop.xlane.xlu0 %4227
    %v4229 = vsel %vm918, %v4193, 0.0
    %4230 = vadd.xlane.f32.xlu0 %v4229
    %v4231 = vpop.xlane.xlu0 %4230
    %v4232 = vsel %vm918, %v4195, 0.0
    %4233 = vadd.xlane.f32.xlu0 %v4232
    %v4234 = vpop.xlane.xlu0 %4233
    %v4235 = vsel %vm918, %v4197, 0.0
    %4236 = vadd.xlane.f32.xlu0 %v4235
    %v4237 = vpop.xlane.xlu0 %4236
    %v4238 = vsel %vm918, %v4199, 0.0
    %4239 = vadd.xlane.f32.xlu0 %v4238
    %v4240 = vpop.xlane.xlu0 %4239
    %v4241 = vsel %vm918, %v4201, 0.0
    %4242 = vadd.xlane.f32.xlu0 %v4241
    %v4243 = vpop.xlane.xlu0 %4242
    %v4244 = vsel %vm918, %v4203, 0.0
    %4245 = vadd.xlane.f32.xlu0 %v4244
    %v4246 = vpop.xlane.xlu0 %4245
    %v4247 = vsel %vm918, %v4205, 0.0
    %4248 = vadd.xlane.f32.xlu0 %v4247
    %v4249 = vpop.xlane.xlu0 %4248
    %v4250 = vsel %vm918, %v4207, 0.0
    %4251 = vadd.xlane.f32.xlu0 %v4250
    %v4252 = vpop.xlane.xlu0 %4251
    %v4253 = vsel %vm918, %v4209, 0.0
    %4254 = vadd.xlane.f32.xlu0 %v4253
    %v4255 = vpop.xlane.xlu0 %4254
    %v4256 = vsel %vm918, %v4211, 0.0
    %4257 = vadd.xlane.f32.xlu0 %v4256
    %v4258 = vpop.xlane.xlu0 %4257
    %v4259 = vsel %vm918, %v4213, 0.0
    %4260 = vadd.xlane.f32.xlu0 %v4259
    %v4261 = vpop.xlane.xlu0 %4260
    %4262 = vrot.lane.b32.xlu0 %v513, 40
    %v4263 = vpop.permute.xlu0 %4262
    %4264 = vrot.lane.b32.xlu0 %v518, 40
    %v4265 = vpop.permute.xlu0 %4264
    %4266 = vrot.lane.b32.xlu0 %v523, 40
    %v4267 = vpop.permute.xlu0 %4266
    %4268 = vrot.lane.b32.xlu0 %v528, 40
    %v4269 = vpop.permute.xlu0 %4268
    %4270 = vrot.lane.b32.xlu0 %v533, 40
    %v4271 = vpop.permute.xlu0 %4270
    %4272 = vrot.lane.b32.xlu0 %v538, 40
    %v4273 = vpop.permute.xlu0 %4272
    %4274 = vrot.lane.b32.xlu0 %v543, 40
    %v4275 = vpop.permute.xlu0 %4274
    %4276 = vrot.lane.b32.xlu0 %v548, 40
    %v4277 = vpop.permute.xlu0 %4276
    %v4287 = vsel %vm918, %v4183, 0
    %v4290 = vsel %vm918, %v4185, 0
    %v4293 = vsel %vm918, %v4187, 0
    %v4296 = vsel %vm918, %v4189, 0
    %v4299 = vsel %vm918, %v4191, 0
    %v4302 = vsel %vm918, %v4193, 0
    %v4305 = vsel %vm918, %v4195, 0
    %v4308 = vsel %vm918, %v4197, 0
    %4310 = vmatprep.subr.mxu0 0.0
    %4311 = vmatpush1.msra.mxu0 %v4263
    %4312 = vmatprep.subr.mxu0 0.0
    %4313 = vmatpush1.msra.mxu0 %v4265
    %4314 = vmatprep.subr.mxu0 0.0
    %4315 = vmatpush1.msra.mxu0 %v4267
    %4316 = vmatprep.subr.mxu0 0.0
    %4317 = vmatpush1.msra.mxu0 %v4269
    %4318 = vmatprep.subr.mxu0 0.0
    %4319 = vmatpush1.msra.mxu0 %v4271
    %4320 = vmatprep.subr.mxu0 0.0
    %4321 = vmatpush1.msra.mxu0 %v4273
    %4322 = vmatprep.subr.mxu0 0.0
    %4323 = vmatpush1.msra.mxu0 %v4275
    %4324 = vmatprep.subr.mxu0 0.0
    %4325 = vmatpush1.msra.mxu0 %v4277
    %4326 = vmatprep.subr.mxu0 0.0
    %4327 = vmatpush1.msra.mxu0 0.0
    %4328 = vmatprep.subr.mxu0 0.0
    %4329 = vmatpush1.msra.mxu0 0.0
    %4330 = vmatprep.subr.mxu0 0.0
    %4331 = vmatpush1.msra.mxu0 0.0
    %4332 = vmatprep.subr.mxu0 0.0
    %4333 = vmatpush1.msra.mxu0 0.0
    %4334 = vmatprep.subr.mxu0 0.0
    %4335 = vmatpush1.msra.mxu0 0.0
    %4336 = vmatprep.subr.mxu0 0.0
    %4337 = vmatpush1.msra.mxu0 0.0
    %4338 = vmatprep.subr.mxu0 0.0
    %4339 = vmatpush1.msra.mxu0 0.0
    %4340 = vmatprep.subr.mxu0 0.0
    %4341 = vmatpush1.msra.mxu0 0.0
    %4342 = vmatprep.subr.mxu0 0.0
    %4343 = vmatpush1.msra.mxu0 0.0
    %4344 = vmatprep.subr.mxu0 0.0
    %4345 = vmatpush1.msra.mxu0 0.0
    %4346 = vmatprep.subr.mxu0 0.0
    %4347 = vmatpush1.msra.mxu0 0.0
    %4348 = vmatprep.subr.mxu0 0.0
    %4349 = vmatpush1.msra.mxu0 0.0
    %4350 = vmatprep.subr.mxu0 0.0
    %4351 = vmatpush1.msra.mxu0 0.0
    %4352 = vmatprep.subr.mxu0 0.0
    %4353 = vmatpush1.msra.mxu0 0.0
    %4354 = vmatprep.subr.mxu0 0.0
    %4355 = vmatpush1.msra.mxu0 0.0
    %4356 = vmatprep.subr.mxu0 0.0
    %4357 = vmatpush1.msra.mxu0 0.0
    %4358 = vmatprep.subr.mxu0 0.0
    %4359 = vmatpush1.msra.mxu0 0.0
    %4360 = vmatprep.subr.mxu0 0.0
    %4361 = vmatpush1.msra.mxu0 0.0
    %4362 = vmatprep.subr.mxu0 0.0
    %4363 = vmatpush1.msra.mxu0 0.0
    %4364 = vmatprep.subr.mxu0 0.0
    %4365 = vmatpush1.msra.mxu0 0.0
    %4366 = vmatprep.subr.mxu0 0.0
    %4367 = vmatpush1.msra.mxu0 0.0
    %4368 = vmatprep.subr.mxu0 0.0
    %4369 = vmatpush1.msra.mxu0 0.0
    %4370 = vmatprep.subr.mxu0 0.0
    %4371 = vmatpush1.msra.mxu0 0.0
    %4372 = vmatprep.subr.mxu0 0.0
    %4373 = vmatpush1.msra.mxu0 0.0
    %4374 = vmatprep.mubr.f32.mxu0 0.0
    %4375 = vmatmul.mubr.f32.gmra.mrb[0].mxu0 %v4287
    %v4376 = vpop.f32.mrb[0].mxu0
    %v4377 = vadd.f32 0.0, %v4376
    %v4378 = vpop.f32.mrb[0].mxu0
    %4379 = vmatprep.mubr.f32.mxu0 0.0
    %4380 = vmatmul.mubr.f32.gmra.mrb[0].mxu0 %v4290
    %v4381 = vpop.f32.mrb[0].mxu0
    %v4382 = vadd.f32 0.0, %v4381
    %v4383 = vpop.f32.mrb[0].mxu0
    %4384 = vmatprep.mubr.f32.mxu0 0.0
    %4385 = vmatmul.mubr.f32.gmra.mrb[0].mxu0 %v4293
    %v4386 = vpop.f32.mrb[0].mxu0
    %v4387 = vadd.f32 0.0, %v4386
    %v4388 = vpop.f32.mrb[0].mxu0
    %4389 = vmatprep.mubr.f32.mxu0 0.0
    %4390 = vmatmul.mubr.f32.gmra.mrb[0].mxu0 %v4296
    %v4391 = vpop.f32.mrb[0].mxu0
    %v4392 = vadd.f32 0.0, %v4391
    %v4393 = vpop.f32.mrb[0].mxu0
    %4394 = vmatprep.mubr.f32.mxu0 0.0
    %4395 = vmatmul.mubr.f32.gmra.mrb[0].mxu0 %v4299
    %v4396 = vpop.f32.mrb[0].mxu0
    %v4397 = vadd.f32 0.0, %v4396
    %v4398 = vpop.f32.mrb[0].mxu0
    %4399 = vmatprep.mubr.f32.mxu0 0.0
    %4400 = vmatmul.mubr.f32.gmra.mrb[0].mxu0 %v4302
    %v4401 = vpop.f32.mrb[0].mxu0
    %v4402 = vadd.f32 0.0, %v4401
    %v4403 = vpop.f32.mrb[0].mxu0
    %4404 = vmatprep.mubr.f32.mxu0 0.0
    %4405 = vmatmul.mubr.f32.gmra.mrb[0].mxu0 %v4305
    %v4406 = vpop.f32.mrb[0].mxu0
    %v4407 = vadd.f32 0.0, %v4406
    %v4408 = vpop.f32.mrb[0].mxu0
    %4409 = vmatprep.mubr.f32.mxu0 0.0
    %4410 = vmatmul.mubr.f32.gmra.mrb[0].mxu0 %v4308
    %v4411 = vpop.f32.mrb[0].mxu0
    %v4412 = vadd.f32 0.0, %v4411
    %v4413 = vpop.f32.mrb[0].mxu0
    %4414 = vdwg.mxu0
    %4415 = vrot.lane.b32.xlu0 %v553, 40
    %v4416 = vpop.permute.xlu0 %4415
    %4417 = vrot.lane.b32.xlu0 %v558, 40
    %v4418 = vpop.permute.xlu0 %4417
    %4419 = vrot.lane.b32.xlu0 %v563, 40
    %v4420 = vpop.permute.xlu0 %4419
    %4421 = vrot.lane.b32.xlu0 %v568, 40
    %v4422 = vpop.permute.xlu0 %4421
    %4423 = vrot.lane.b32.xlu0 %v573, 40
    %v4424 = vpop.permute.xlu0 %4423
    %4425 = vrot.lane.b32.xlu0 %v578, 40
    %v4426 = vpop.permute.xlu0 %4425
    %4427 = vrot.lane.b32.xlu0 %v583, 40
    %v4428 = vpop.permute.xlu0 %4427
    %4429 = vrot.lane.b32.xlu0 %v588, 40
    %v4430 = vpop.permute.xlu0 %4429
    %v4440 = vsel %vm918, %v4199, 0
    %v4443 = vsel %vm918, %v4201, 0
    %v4446 = vsel %vm918, %v4203, 0
    %v4449 = vsel %vm918, %v4205, 0
    %v4452 = vsel %vm918, %v4207, 0
    %v4455 = vsel %vm918, %v4209, 0
    %v4458 = vsel %vm918, %v4211, 0
    %v4461 = vsel %vm918, %v4213, 0
    %4463 = vmatprep.subr.mxu0 0.0
    %4464 = vmatpush1.msra.mxu0 %v4416
    %4465 = vmatprep.subr.mxu0 0.0
    %4466 = vmatpush1.msra.mxu0 %v4418
    %4467 = vmatprep.subr.mxu0 0.0
    %4468 = vmatpush1.msra.mxu0 %v4420
    %4469 = vmatprep.subr.mxu0 0.0
    %4470 = vmatpush1.msra.mxu0 %v4422
    %4471 = vmatprep.subr.mxu0 0.0
    %4472 = vmatpush1.msra.mxu0 %v4424
    %4473 = vmatprep.subr.mxu0 0.0
    %4474 = vmatpush1.msra.mxu0 %v4426
    %4475 = vmatprep.subr.mxu0 0.0
    %4476 = vmatpush1.msra.mxu0 %v4428
    %4477 = vmatprep.subr.mxu0 0.0
    %4478 = vmatpush1.msra.mxu0 %v4430
    %4479 = vmatprep.subr.mxu0 0.0
    %4480 = vmatpush1.msra.mxu0 0.0
    %4481 = vmatprep.subr.mxu0 0.0
    %4482 = vmatpush1.msra.mxu0 0.0
    %4483 = vmatprep.subr.mxu0 0.0
    %4484 = vmatpush1.msra.mxu0 0.0
    %4485 = vmatprep.subr.mxu0 0.0
    %4486 = vmatpush1.msra.mxu0 0.0
    %4487 = vmatprep.subr.mxu0 0.0
    %4488 = vmatpush1.msra.mxu0 0.0
    %4489 = vmatprep.subr.mxu0 0.0
    %4490 = vmatpush1.msra.mxu0 0.0
    %4491 = vmatprep.subr.mxu0 0.0
    %4492 = vmatpush1.msra.mxu0 0.0
    %4493 = vmatprep.subr.mxu0 0.0
    %4494 = vmatpush1.msra.mxu0 0.0
    %4495 = vmatprep.subr.mxu0 0.0
    %4496 = vmatpush1.msra.mxu0 0.0
    %4497 = vmatprep.subr.mxu0 0.0
    %4498 = vmatpush1.msra.mxu0 0.0
    %4499 = vmatprep.subr.mxu0 0.0
    %4500 = vmatpush1.msra.mxu0 0.0
    %4501 = vmatprep.subr.mxu0 0.0
    %4502 = vmatpush1.msra.mxu0 0.0
    %4503 = vmatprep.subr.mxu0 0.0
    %4504 = vmatpush1.msra.mxu0 0.0
    %4505 = vmatprep.subr.mxu0 0.0
    %4506 = vmatpush1.msra.mxu0 0.0
    %4507 = vmatprep.subr.mxu0 0.0
    %4508 = vmatpush1.msra.mxu0 0.0
    %4509 = vmatprep.subr.mxu0 0.0
    %4510 = vmatpush1.msra.mxu0 0.0
    %4511 = vmatprep.subr.mxu0 0.0
    %4512 = vmatpush1.msra.mxu0 0.0
    %4513 = vmatprep.subr.mxu0 0.0
    %4514 = vmatpush1.msra.mxu0 0.0
    %4515 = vmatprep.subr.mxu0 0.0
    %4516 = vmatpush1.msra.mxu0 0.0
    %4517 = vmatprep.subr.mxu0 0.0
    %4518 = vmatpush1.msra.mxu0 0.0
    %4519 = vmatprep.subr.mxu0 0.0
    %4520 = vmatpush1.msra.mxu0 0.0
    %4521 = vmatprep.subr.mxu0 0.0
    %4522 = vmatpush1.msra.mxu0 0.0
    %4523 = vmatprep.subr.mxu0 0.0
    %4524 = vmatpush1.msra.mxu0 0.0
    %4525 = vmatprep.subr.mxu0 0.0
    %4526 = vmatpush1.msra.mxu0 0.0
    %4527 = vmatprep.mubr.f32.mxu0 0.0
    %4528 = vmatmul.mubr.f32.gmra.mrb[0].mxu0 %v4440
    %v4529 = vpop.f32.mrb[0].mxu0
    %v4530 = vadd.f32 0.0, %v4529
    %v4531 = vpop.f32.mrb[0].mxu0
    %4532 = vmatprep.mubr.f32.mxu0 0.0
    %4533 = vmatmul.mubr.f32.gmra.mrb[0].mxu0 %v4443
    %v4534 = vpop.f32.mrb[0].mxu0
    %v4535 = vadd.f32 0.0, %v4534
    %v4536 = vpop.f32.mrb[0].mxu0
    %4537 = vmatprep.mubr.f32.mxu0 0.0
    %4538 = vmatmul.mubr.f32.gmra.mrb[0].mxu0 %v4446
    %v4539 = vpop.f32.mrb[0].mxu0
    %v4540 = vadd.f32 0.0, %v4539
    %v4541 = vpop.f32.mrb[0].mxu0
    %4542 = vmatprep.mubr.f32.mxu0 0.0
    %4543 = vmatmul.mubr.f32.gmra.mrb[0].mxu0 %v4449
    %v4544 = vpop.f32.mrb[0].mxu0
    %v4545 = vadd.f32 0.0, %v4544
    %v4546 = vpop.f32.mrb[0].mxu0
    %4547 = vmatprep.mubr.f32.mxu0 0.0
    %4548 = vmatmul.mubr.f32.gmra.mrb[0].mxu0 %v4452
    %v4549 = vpop.f32.mrb[0].mxu0
    %v4550 = vadd.f32 0.0, %v4549
    %v4551 = vpop.f32.mrb[0].mxu0
    %4552 = vmatprep.mubr.f32.mxu0 0.0
    %4553 = vmatmul.mubr.f32.gmra.mrb[0].mxu0 %v4455
    %v4554 = vpop.f32.mrb[0].mxu0
    %v4555 = vadd.f32 0.0, %v4554
    %v4556 = vpop.f32.mrb[0].mxu0
    %4557 = vmatprep.mubr.f32.mxu0 0.0
    %4558 = vmatmul.mubr.f32.gmra.mrb[0].mxu0 %v4458
    %v4559 = vpop.f32.mrb[0].mxu0
    %v4560 = vadd.f32 0.0, %v4559
    %v4561 = vpop.f32.mrb[0].mxu0
    %4562 = vmatprep.mubr.f32.mxu0 0.0
    %4563 = vmatmul.mubr.f32.gmra.mrb[0].mxu0 %v4461
    %v4564 = vpop.f32.mrb[0].mxu0
    %v4565 = vadd.f32 0.0, %v4564
    %v4566 = vpop.f32.mrb[0].mxu0
    %4567 = vdwg.mxu0
    %v4568 = vrcp.pop %v4216
    %v4569 = vrcp.pop %v4219
    %v4570 = vrcp.pop %v4222
    %v4571 = vrcp.pop %v4225
    %v4572 = vrcp.pop %v4228
    %v4573 = vrcp.pop %v4231
    %v4574 = vrcp.pop %v4234
    %v4575 = vrcp.pop %v4237
    %v4576 = vrcp.pop %v4240
    %v4577 = vrcp.pop %v4243
    %v4578 = vrcp.pop %v4246
    %v4579 = vrcp.pop %v4249
    %v4580 = vrcp.pop %v4252
    %v4581 = vrcp.pop %v4255
    %v4582 = vrcp.pop %v4258
    %v4583 = vrcp.pop %v4261
    %v4584 = vmul.f32 %v4216, %v4568
    %v4585 = vmul.f32 %v4219, %v4569
    %v4586 = vmul.f32 %v4222, %v4570
    %v4587 = vmul.f32 %v4225, %v4571
    %v4588 = vmul.f32 %v4228, %v4572
    %v4589 = vmul.f32 %v4231, %v4573
    %v4590 = vmul.f32 %v4234, %v4574
    %v4591 = vmul.f32 %v4237, %v4575
    %v4592 = vmul.f32 %v4240, %v4576
    %v4593 = vmul.f32 %v4243, %v4577
    %v4594 = vmul.f32 %v4246, %v4578
    %v4595 = vmul.f32 %v4249, %v4579
    %v4596 = vmul.f32 %v4252, %v4580
    %v4597 = vmul.f32 %v4255, %v4581
    %v4598 = vmul.f32 %v4258, %v4582
    %v4599 = vmul.f32 %v4261, %v4583
    %v4600 = vsub.f32 2.0, %v4584
    %v4601 = vsub.f32 2.0, %v4585
    %v4602 = vsub.f32 2.0, %v4586
    %v4603 = vsub.f32 2.0, %v4587
    %v4604 = vsub.f32 2.0, %v4588
    %v4605 = vsub.f32 2.0, %v4589
    %v4606 = vsub.f32 2.0, %v4590
    %v4607 = vsub.f32 2.0, %v4591
    %v4608 = vsub.f32 2.0, %v4592
    %v4609 = vsub.f32 2.0, %v4593
    %v4610 = vsub.f32 2.0, %v4594
    %v4611 = vsub.f32 2.0, %v4595
    %v4612 = vsub.f32 2.0, %v4596
    %v4613 = vsub.f32 2.0, %v4597
    %v4614 = vsub.f32 2.0, %v4598
    %v4615 = vsub.f32 2.0, %v4599
    %v4616 = vmul.f32 %v4568, %v4600
    %v4617 = vmul.f32 %v4569, %v4601
    %v4618 = vmul.f32 %v4570, %v4602
    %v4619 = vmul.f32 %v4571, %v4603
    %v4620 = vmul.f32 %v4572, %v4604
    %v4621 = vmul.f32 %v4573, %v4605
    %v4622 = vmul.f32 %v4574, %v4606
    %v4623 = vmul.f32 %v4575, %v4607
    %v4624 = vmul.f32 %v4576, %v4608
    %v4625 = vmul.f32 %v4577, %v4609
    %v4626 = vmul.f32 %v4578, %v4610
    %v4627 = vmul.f32 %v4579, %v4611
    %v4628 = vmul.f32 %v4580, %v4612
    %v4629 = vmul.f32 %v4581, %v4613
    %v4630 = vmul.f32 %v4582, %v4614
    %v4631 = vmul.f32 %v4583, %v4615
    %v4632 = vmul.f32 %v4377, %v4616
    %v4633 = vmul.f32 %v4382, %v4617
    %v4634 = vmul.f32 %v4387, %v4618
    %v4635 = vmul.f32 %v4392, %v4619
    %v4636 = vmul.f32 %v4397, %v4620
    %v4637 = vmul.f32 %v4402, %v4621
    %v4638 = vmul.f32 %v4407, %v4622
    %v4639 = vmul.f32 %v4412, %v4623
    %v4640 = vmul.f32 %v4530, %v4624
    %v4641 = vmul.f32 %v4535, %v4625
    %v4642 = vmul.f32 %v4540, %v4626
    %v4643 = vmul.f32 %v4545, %v4627
    %v4644 = vmul.f32 %v4550, %v4628
    %v4645 = vmul.f32 %v4555, %v4629
    %v4646 = vmul.f32 %v4560, %v4630
    %v4647 = vmul.f32 %v4565, %v4631
    %v4649 = vsel %vm619, %v4632, 0
    %v4652 = vsel %vm619, %v4633, 0
    %v4655 = vsel %vm619, %v4634, 0
    %v4658 = vsel %vm619, %v4635, 0
    %v4661 = vsel %vm619, %v4636, 0
    %v4664 = vsel %vm619, %v4637, 0
    %v4667 = vsel %vm619, %v4638, 0
    %v4670 = vsel %vm619, %v4639, 0
    %v4673 = vsel %vm619, %v4640, 0
    %v4676 = vsel %vm619, %v4641, 0
    %v4679 = vsel %vm619, %v4642, 0
    %v4682 = vsel %vm619, %v4643, 0
    %v4685 = vsel %vm619, %v4644, 0
    %v4688 = vsel %vm619, %v4645, 0
    %v4691 = vsel %vm619, %v4646, 0
    %v4694 = vsel %vm619, %v4647, 0
    %4696 = vmatprep.subr.mxu0 0.0
    %4697 = vmatpush1.msra.mxu0 %v594
    %4698 = vmatprep.subr.mxu0 0.0
    %4699 = vmatpush1.msra.mxu0 0.0
    %4700 = vmatprep.subr.mxu0 0.0
    %4701 = vmatpush1.msra.mxu0 0.0
    %4702 = vmatprep.subr.mxu0 0.0
    %4703 = vmatpush1.msra.mxu0 0.0
    %4704 = vmatprep.subr.mxu0 0.0
    %4705 = vmatpush1.msra.mxu0 0.0
    %4706 = vmatprep.subr.mxu0 0.0
    %4707 = vmatpush1.msra.mxu0 0.0
    %4708 = vmatprep.subr.mxu0 0.0
    %4709 = vmatpush1.msra.mxu0 0.0
    %4710 = vmatprep.subr.mxu0 0.0
    %4711 = vmatpush1.msra.mxu0 0.0
    %4712 = vmatprep.subr.mxu0 0.0
    %4713 = vmatpush1.msra.mxu0 0.0
    %4714 = vmatprep.subr.mxu0 0.0
    %4715 = vmatpush1.msra.mxu0 0.0
    %4716 = vmatprep.subr.mxu0 0.0
    %4717 = vmatpush1.msra.mxu0 0.0
    %4718 = vmatprep.subr.mxu0 0.0
    %4719 = vmatpush1.msra.mxu0 0.0
    %4720 = vmatprep.subr.mxu0 0.0
    %4721 = vmatpush1.msra.mxu0 0.0
    %4722 = vmatprep.subr.mxu0 0.0
    %4723 = vmatpush1.msra.mxu0 0.0
    %4724 = vmatprep.subr.mxu0 0.0
    %4725 = vmatpush1.msra.mxu0 0.0
    %4726 = vmatprep.subr.mxu0 0.0
    %4727 = vmatpush1.msra.mxu0 0.0
    %4728 = vmatprep.subr.mxu0 0.0
    %4729 = vmatpush1.msra.mxu0 0.0
    %4730 = vmatprep.subr.mxu0 0.0
    %4731 = vmatpush1.msra.mxu0 0.0
    %4732 = vmatprep.subr.mxu0 0.0
    %4733 = vmatpush1.msra.mxu0 0.0
    %4734 = vmatprep.subr.mxu0 0.0
    %4735 = vmatpush1.msra.mxu0 0.0
    %4736 = vmatprep.subr.mxu0 0.0
    %4737 = vmatpush1.msra.mxu0 0.0
    %4738 = vmatprep.subr.mxu0 0.0
    %4739 = vmatpush1.msra.mxu0 0.0
    %4740 = vmatprep.subr.mxu0 0.0
    %4741 = vmatpush1.msra.mxu0 0.0
    %4742 = vmatprep.subr.mxu0 0.0
    %4743 = vmatpush1.msra.mxu0 0.0
    %4744 = vmatprep.subr.mxu0 0.0
    %4745 = vmatpush1.msra.mxu0 0.0
    %4746 = vmatprep.subr.mxu0 0.0
    %4747 = vmatpush1.msra.mxu0 0.0
    %4748 = vmatprep.subr.mxu0 0.0
    %4749 = vmatpush1.msra.mxu0 0.0
    %4750 = vmatprep.subr.mxu0 0.0
    %4751 = vmatpush1.msra.mxu0 0.0
    %4752 = vmatprep.subr.mxu0 0.0
    %4753 = vmatpush1.msra.mxu0 0.0
    %4754 = vmatprep.subr.mxu0 0.0
    %4755 = vmatpush1.msra.mxu0 0.0
    %4756 = vmatprep.subr.mxu0 0.0
    %4757 = vmatpush1.msra.mxu0 0.0
    %4758 = vmatprep.subr.mxu0 0.0
    %4759 = vmatpush1.msra.mxu0 0.0
    %4760 = vmatprep.mubr.f32.mxu0 0.0
    %4761 = vmatmul.mubr.f32.gmra.mrb[0].mxu0 %v4649
    %v4762 = vpop.f32.mrb[0].mxu0
    %v4763 = vadd.f32 0.0, %v4762
    %v4764 = vpop.f32.mrb[0].mxu0
    %4765 = vmatprep.mubr.f32.mxu0 0.0
    %4766 = vmatmul.mubr.f32.gmra.mrb[0].mxu0 %v4652
    %v4767 = vpop.f32.mrb[0].mxu0
    %v4768 = vadd.f32 0.0, %v4767
    %v4769 = vpop.f32.mrb[0].mxu0
    %4770 = vmatprep.mubr.f32.mxu0 0.0
    %4771 = vmatmul.mubr.f32.gmra.mrb[0].mxu0 %v4655
    %v4772 = vpop.f32.mrb[0].mxu0
    %v4773 = vadd.f32 0.0, %v4772
    %v4774 = vpop.f32.mrb[0].mxu0
    %4775 = vmatprep.mubr.f32.mxu0 0.0
    %4776 = vmatmul.mubr.f32.gmra.mrb[0].mxu0 %v4658
    %v4777 = vpop.f32.mrb[0].mxu0
    %v4778 = vadd.f32 0.0, %v4777
    %v4779 = vpop.f32.mrb[0].mxu0
    %4780 = vmatprep.mubr.f32.mxu0 0.0
    %4781 = vmatmul.mubr.f32.gmra.mrb[0].mxu0 %v4661
    %v4782 = vpop.f32.mrb[0].mxu0
    %v4783 = vadd.f32 0.0, %v4782
    %v4784 = vpop.f32.mrb[0].mxu0
    %4785 = vmatprep.mubr.f32.mxu0 0.0
    %4786 = vmatmul.mubr.f32.gmra.mrb[0].mxu0 %v4664
    %v4787 = vpop.f32.mrb[0].mxu0
    %v4788 = vadd.f32 0.0, %v4787
    %v4789 = vpop.f32.mrb[0].mxu0
    %4790 = vmatprep.mubr.f32.mxu0 0.0
    %4791 = vmatmul.mubr.f32.gmra.mrb[0].mxu0 %v4667
    %v4792 = vpop.f32.mrb[0].mxu0
    %v4793 = vadd.f32 0.0, %v4792
    %v4794 = vpop.f32.mrb[0].mxu0
    %4795 = vmatprep.mubr.f32.mxu0 0.0
    %4796 = vmatmul.mubr.f32.gmra.mrb[0].mxu0 %v4670
    %v4797 = vpop.f32.mrb[0].mxu0
    %v4798 = vadd.f32 0.0, %v4797
    %v4799 = vpop.f32.mrb[0].mxu0
    %4800 = vmatprep.mubr.f32.mxu0 0.0
    %4801 = vmatmul.mubr.f32.gmra.mrb[0].mxu0 %v4673
    %v4802 = vpop.f32.mrb[0].mxu0
    %v4803 = vadd.f32 0.0, %v4802
    %v4804 = vpop.f32.mrb[0].mxu0
    %4805 = vmatprep.mubr.f32.mxu0 0.0
    %4806 = vmatmul.mubr.f32.gmra.mrb[0].mxu0 %v4676
    %v4807 = vpop.f32.mrb[0].mxu0
    %v4808 = vadd.f32 0.0, %v4807
    %v4809 = vpop.f32.mrb[0].mxu0
    %4810 = vmatprep.mubr.f32.mxu0 0.0
    %4811 = vmatmul.mubr.f32.gmra.mrb[0].mxu0 %v4679
    %v4812 = vpop.f32.mrb[0].mxu0
    %v4813 = vadd.f32 0.0, %v4812
    %v4814 = vpop.f32.mrb[0].mxu0
    %4815 = vmatprep.mubr.f32.mxu0 0.0
    %4816 = vmatmul.mubr.f32.gmra.mrb[0].mxu0 %v4682
    %v4817 = vpop.f32.mrb[0].mxu0
    %v4818 = vadd.f32 0.0, %v4817
    %v4819 = vpop.f32.mrb[0].mxu0
    %4820 = vmatprep.mubr.f32.mxu0 0.0
    %4821 = vmatmul.mubr.f32.gmra.mrb[0].mxu0 %v4685
    %v4822 = vpop.f32.mrb[0].mxu0
    %v4823 = vadd.f32 0.0, %v4822
    %v4824 = vpop.f32.mrb[0].mxu0
    %4825 = vmatprep.mubr.f32.mxu0 0.0
    %4826 = vmatmul.mubr.f32.gmra.mrb[0].mxu0 %v4688
    %v4827 = vpop.f32.mrb[0].mxu0
    %v4828 = vadd.f32 0.0, %v4827
    %v4829 = vpop.f32.mrb[0].mxu0
    %4830 = vmatprep.mubr.f32.mxu0 0.0
    %4831 = vmatmul.mubr.f32.gmra.mrb[0].mxu0 %v4691
    %v4832 = vpop.f32.mrb[0].mxu0
    %v4833 = vadd.f32 0.0, %v4832
    %v4834 = vpop.f32.mrb[0].mxu0
    %4835 = vmatprep.mubr.f32.mxu0 0.0
    %4836 = vmatmul.mubr.f32.gmra.mrb[0].mxu0 %v4694
    %v4837 = vpop.f32.mrb[0].mxu0
    %v4838 = vadd.f32 0.0, %v4837
    %v4839 = vpop.f32.mrb[0].mxu0
    %4840 = vdwg.mxu0
    %v4841 = vadd.f32 %v3764, %v4763
    %v4842 = vadd.f32 %v3765, %v4768
    %v4843 = vadd.f32 %v3766, %v4773
    %v4844 = vadd.f32 %v3767, %v4778
    %v4845 = vadd.f32 %v3768, %v4783
    %v4846 = vadd.f32 %v3769, %v4788
    %v4847 = vadd.f32 %v3770, %v4793
    %v4848 = vadd.f32 %v3771, %v4798
    %v4849 = vadd.f32 %v3772, %v4803
    %v4850 = vadd.f32 %v3773, %v4808
    %v4851 = vadd.f32 %v3774, %v4813
    %v4852 = vadd.f32 %v3775, %v4818
    %v4853 = vadd.f32 %v3776, %v4823
    %v4854 = vadd.f32 %v3777, %v4828
    %v4855 = vadd.f32 %v3778, %v4833
    %v4856 = vadd.f32 %v3779, %v4838
    %v4857 = vld [vmem:[%s5] sm:$0x1]
    %v4859 = vlaneseq
    %v4860 = vshrl.u32 %v4859, 7
    %v4861 = vsub.s32 0, %v4860
    %v4862 = vrot.slane %v4857, %v4861
    %v4864 = vadd.f32 %v4841, %v4862
    %v4865 = vadd.f32 %v4842, %v4862
    %v4866 = vadd.f32 %v4843, %v4862
    %v4867 = vadd.f32 %v4844, %v4862
    %v4868 = vadd.f32 %v4845, %v4862
    %v4869 = vadd.f32 %v4846, %v4862
    %v4870 = vadd.f32 %v4847, %v4862
    %v4871 = vadd.f32 %v4848, %v4862
    %v4872 = vadd.f32 %v4849, %v4862
    %v4873 = vadd.f32 %v4850, %v4862
    %v4874 = vadd.f32 %v4851, %v4862
    %v4875 = vadd.f32 %v4852, %v4862
    %v4876 = vadd.f32 %v4853, %v4862
    %v4877 = vadd.f32 %v4854, %v4862
    %v4878 = vadd.f32 %v4855, %v4862
    %v4879 = vadd.f32 %v4856, %v4862
    %4880 = vxpose.xlu0.b32.start [1/16] %v4864, 128
    %4881 = vxpose.xlu0.b32.cont [2/16] %v4865, 128
    %4882 = vxpose.xlu0.b32.cont [3/16] %v4866, 128
    %4883 = vxpose.xlu0.b32.cont [4/16] %v4867, 128
    %4884 = vxpose.xlu0.b32.cont [5/16] %v4868, 128
    %4885 = vxpose.xlu0.b32.cont [6/16] %v4869, 128
    %4886 = vxpose.xlu0.b32.cont [7/16] %v4870, 128
    %4887 = vxpose.xlu0.b32.cont [8/16] %v4871, 128
    %4888 = vxpose.xlu0.b32.cont [9/16] 0.0, 128
    %4889 = vxpose.xlu0.b32.cont [10/16] 0.0, 128
    %4890 = vxpose.xlu0.b32.cont [11/16] 0.0, 128
    %4891 = vxpose.xlu0.b32.cont [12/16] 0.0, 128
    %4892 = vxpose.xlu0.b32.cont [13/16] 0.0, 128
    %4893 = vxpose.xlu0.b32.cont [14/16] 0.0, 128
    %4894 = vxpose.xlu0.b32.cont [15/16] 0.0, 128
    %4895 = vxpose.xlu0.b32.end [16/16] 0.0, 128
    %v4896 = vpop.trf.xlu0
    %v4897 = vpop.trf.xlu0
    %v4898 = vpop.trf.xlu0
    %v4899 = vpop.trf.xlu0
    %v4900 = vpop.trf.xlu0
    %v4901 = vpop.trf.xlu0
    %v4902 = vpop.trf.xlu0
    %v4903 = vpop.trf.xlu0
    %v4904 = vpop.trf.xlu0
    %v4905 = vpop.trf.xlu0
    %v4906 = vpop.trf.xlu0
    %v4907 = vpop.trf.xlu0
    %v4908 = vpop.trf.xlu0
    %v4909 = vpop.trf.xlu0
    %v4910 = vpop.trf.xlu0
    %v4911 = vpop.trf.xlu0
    %4912 = vst.msk [vmem:[#allocation8] sm:$0xff] %vm918, %v4896
    %4913 = vst.msk [vmem:[#allocation8 + $0x8] sm:$0xff] %vm918, %v4897
    %4914 = vst.msk [vmem:[#allocation8 + $0x10] sm:$0xff] %vm918, %v4898
    %4915 = vst.msk [vmem:[#allocation8 + $0x18] sm:$0xff] %vm918, %v4899
    %4916 = vxpose.xlu0.b32.start [1/16] %v4872, 128
    %4917 = vxpose.xlu0.b32.cont [2/16] %v4873, 128
    %4918 = vxpose.xlu0.b32.cont [3/16] %v4874, 128
    %4919 = vxpose.xlu0.b32.cont [4/16] %v4875, 128
    %4920 = vxpose.xlu0.b32.cont [5/16] %v4876, 128
    %4921 = vxpose.xlu0.b32.cont [6/16] %v4877, 128
    %4922 = vxpose.xlu0.b32.cont [7/16] %v4878, 128
    %4923 = vxpose.xlu0.b32.cont [8/16] %v4879, 128
    %4924 = vxpose.xlu0.b32.cont [9/16] 0.0, 128
    %4925 = vxpose.xlu0.b32.cont [10/16] 0.0, 128
    %4926 = vxpose.xlu0.b32.cont [11/16] 0.0, 128
    %4927 = vxpose.xlu0.b32.cont [12/16] 0.0, 128
    %4928 = vxpose.xlu0.b32.cont [13/16] 0.0, 128
    %4929 = vxpose.xlu0.b32.cont [14/16] 0.0, 128
    %4930 = vxpose.xlu0.b32.cont [15/16] 0.0, 128
    %4931 = vxpose.xlu0.b32.end [16/16] 0.0, 128
    %v4932 = vpop.trf.xlu0
    %v4933 = vpop.trf.xlu0
    %v4934 = vpop.trf.xlu0
    %v4935 = vpop.trf.xlu0
    %v4936 = vpop.trf.xlu0
    %v4937 = vpop.trf.xlu0
    %v4938 = vpop.trf.xlu0
    %v4939 = vpop.trf.xlu0
    %v4940 = vpop.trf.xlu0
    %v4941 = vpop.trf.xlu0
    %v4942 = vpop.trf.xlu0
    %v4943 = vpop.trf.xlu0
    %v4944 = vpop.trf.xlu0
    %v4945 = vpop.trf.xlu0
    %v4946 = vpop.trf.xlu0
    %v4947 = vpop.trf.xlu0
    %s4948 = scalar_lea.vmem [#allocation8], 32
    %4949 = vst.msk [vmem:[%s4948] sm:$0xff] %vm918, %v4932
    %4950 = vst.msk [vmem:[%s4948 + $0x8] sm:$0xff] %vm918, %v4933
    %4951 = vst.msk [vmem:[%s4948 + $0x10] sm:$0xff] %vm918, %v4934
    %4952 = vst.msk [vmem:[%s4948 + $0x18] sm:$0xff] %vm918, %v4935
    // Predicated region
    $region38: #{tpu_custom_call.1} parent=1 // pred_check
      _
    $region39: #{tpu_custom_call.1} parent=1 // pred_check_branch
      %4954 = sbr.rel (0) target = $region41
    $region40: #{tpu_custom_call.1} parent=1 // pred_region
      %s4956 = ssub.s32 1024, 1024
      %4957 = vsyncadd [#allocation4], %s4956
      %s4958 = sshll.u32 [#allocation8], 4
      %s4959 = int_to_ptr.vmem [resolvable:$true] %s4958
      %4964 = dma.vmem_to_hbm [thread:$0]  %s4959, 1024, %s6, [#allocation4], 128, 128, 8
    $region41: #{tpu_custom_call.1} parent=1 // pred_fallthru
      _
    // Predicated region
    $region42: #{tpu_custom_call.1} parent=1 // pred_check
      _
    $region43: #{tpu_custom_call.1} parent=1 // pred_check_branch
      %4966 = sbr.rel (0) target = $region45
    $region44: #{tpu_custom_call.1} parent=1 // pred_region
      %4967 = dma.done [#allocation4], 1024
    $region45: #{tpu_custom_call.1} parent=1 // pred_fallthru
      _
    %4968 = vsyncpa [#allocation3], 1
    %4969 = vsyncpa [#allocation6], 1
    %4970 = vsyncpa [#allocation4], 1

</llo_original>
